<compile_context>
chip_gen: v5e
topology: v5e:2x2
jax: 0.10.0
libtpu: 0.0.40
codegen_flags: <defaults>
</compile_context>

<pallas_src>
import jax
import jax.numpy as jnp
import numpy as np
from jax.experimental import pallas as pl
from jax.experimental.pallas import tpu as pltpu

_EPS = 1e-5
_MXU_DTYPE = jnp.bfloat16   # native MXU path on v5e/v6e/v7x
_LANES = 128


def _vmem_limit_bytes():
    # ~75% of per-core VMEM leaves headroom for pipeline buffers / compiler scratch.
    try:
        cap = int(pltpu.get_tpu_info().vmem_capacity_bytes)
    except Exception:
        cap = 64 * 1024 * 1024          # conservative fallback (safe on v7x too)
    return max(32 * 1024 * 1024, (cap * 3) // 4)


_VMEM_LIMIT = _vmem_limit_bytes()


def _conv3x3_reflect_in(x, v_ref, relu):
    """Reflect-pad(1) + 3x3 conv (no bias) + InstanceNorm (+ optional ReLU).

    x:     (H, W, C) tile resident in VMEM, bf16 (MXU operand dtype).
    v_ref: (3, 3C, C) folded bf16 weights, v_ref[dx, dy*C + ci, co] = w[co, ci, dy, dx].
    Returns (H, W, C) float32.
    """
    H, W, C = x.shape
    Wp = W + 2                                   # reflect-padded width
    Wpad = ((Wp + 7) // 8) * 8                   # sublane-aligned working width
    dt = x.dtype

    # ---- width reflect pad built in VMEM (junk zero columns discarded later) ----
    pieces = [x[:, 1:2, :], x, x[:, W - 2:W - 1, :]]
    if Wpad > Wp:
        pieces.append(jnp.zeros((H, Wpad - Wp, C), dt))
    xw = jnp.concatenate(pieces, axis=1)                          # (H, Wpad, C)

    # ---- dy taps folded into the contraction (K = 3C); the height reflect pad is
    # fused into each tap so no explicit (H+2, Wpad, C) tensor is materialized.
    top = jnp.concatenate([xw[1:2], xw[:H - 1]], axis=0)          # row h-1 (reflect)
    bot = jnp.concatenate([xw[1:H], xw[H - 2:H - 1]], axis=0)     # row h+1 (reflect)
    q = jnp.concatenate([top, xw, bot], axis=2)                   # (H, Wpad, 3C)
    rows = H * Wpad
    qf = q.reshape(rows, 3 * C)

    # ---- 3 bf16 MXU matmuls (f32 accum); dx taps combined with sublane rolls (XLU).
    # acc[h*Wpad + w] = sum_dx Y_dx[h*Wpad + w + dx]
    acc = jnp.dot(qf, v_ref[0], preferred_element_type=jnp.float32)
    for dx in (1, 2):
        ydx = jnp.dot(qf, v_ref[dx], preferred_element_type=jnp.float32)
        acc = acc + pltpu.roll(ydx, shift=rows - dx, axis=0)

    # ---- valid window + one-pass InstanceNorm (biased var, eps=1e-5), f32 stats ----
    yv = acc.reshape(H, Wpad, C)[:, :W, :]                        # (H, W, C) f32
    inv_n = 1.0 / float(H * W)
    mean = jnp.sum(jnp.sum(yv, axis=0), axis=0, keepdims=True) * inv_n          # (1, C)
    msq = jnp.sum(jnp.sum(yv * yv, axis=0), axis=0, keepdims=True) * inv_n      # (1, C)
    var = jnp.maximum(msq - mean * mean, 0.0)
    out = (yv - mean) * jax.lax.rsqrt(var + _EPS)
    if relu:
        out = jnp.maximum(out, 0.0)
    return out


def resnet_block_kernel(x_ref, v1_ref, v2_ref, o_ref):
    # x_ref/o_ref: (1, H, W, C); v*_ref: (3, 3C, C) bf16, whole-array resident in VMEM.
    _, H, W, C = x_ref.shape
    x = x_ref[0]                                                  # (H, W, C)
    xb = x.astype(_MXU_DTYPE)

    h = _conv3x3_reflect_in(xb, v1_ref, relu=True)                # f32
    y = _conv3x3_reflect_in(h.astype(_MXU_DTYPE), v2_ref, relu=False)

    o_ref[...] = (y + x.astype(jnp.float32)).reshape(1, H, W, C).astype(o_ref.dtype)


def _fold_weight(w):
    # (Cout, Cin, kH, kW) -> (kW=dx, kH=dy, Cin, Cout) -> (3, 3*C, C), bf16 for MXU.
    c = w.shape[0]
    return jnp.transpose(w, (3, 2, 1, 0)).reshape(3, 3 * c, c).astype(_MXU_DTYPE)


@jax.jit
def resnet_block_forward(x_nchw, w1, b1, w2, b2):
    """x: (N,C,H,W) like PyTorch; w*: (C,C,3,3) PyTorch layout; b*: (C,).

    b1/b2 are accepted for API parity but unused: a conv bias followed by an
    affine=False InstanceNorm is mathematically a no-op.
    """
    del b1, b2
    N, C, H, W = x_nchw.shape
    x = jnp.transpose(x_nchw, (0, 2, 3, 1))                       # NHWC (C on lanes)
    dt = x.dtype

    # Lane-dense channel padding (unmasked vst, full MXU N) when C is large but not
    # a multiple of 128; skipped for tiny C where it would only inflate the contraction.
    if C >= _LANES and C % _LANES != 0:
        Cp = ((C + _LANES - 1) // _LANES) * _LANES
        x = jnp.pad(x, ((0, 0), (0, 0), (0, 0), (0, Cp - C)))
        pad_w = ((0, Cp - C), (0, Cp - C), (0, 0), (0, 0))
        w1 = jnp.pad(w1, pad_w)
        w2 = jnp.pad(w2, pad_w)
    else:
        Cp = C

    v1 = _fold_weight(w1)
    v2 = _fold_weight(w2)

    out = pl.pallas_call(
        resnet_block_kernel,
        out_shape=jax.ShapeDtypeStruct((N, H, W, Cp), dt),
        grid=(N,),
        in_specs=[
            pl.BlockSpec((1, H, W, Cp), lambda n: (n, 0, 0, 0)),
            # Grid-invariant weights: whole array resident in VMEM for the entire
            # grid -> single copy, no per-iteration pipelining / double buffer.
            pl.BlockSpec(memory_space=pltpu.MemorySpace.VMEM),
            pl.BlockSpec(memory_space=pltpu.MemorySpace.VMEM),
        ],
        out_specs=pl.BlockSpec((1, H, W, Cp), lambda n: (n, 0, 0, 0)),
        compiler_params=pltpu.CompilerParams(
            dimension_semantics=("parallel",),
            vmem_limit_bytes=_VMEM_LIMIT,
        ),
    )(x, v1, v2)

    out = jnp.transpose(out, (0, 3, 1, 2))                        # back to NCHW
    if Cp != C:
        out = out[:, :C]
    return out


# ---------------- pure-JAX f32 reference (for correctness check) ----------------
def _ref_block(x_nchw, w1, b1, w2, b2):
    x = jnp.transpose(x_nchw, (0, 2, 3, 1)).astype(jnp.float32)

    def conv_in(xin, w, b):
        xp = jnp.pad(xin, ((0, 0), (1, 1), (1, 1), (0, 0)), mode="reflect")
        y = jax.lax.conv_general_dilated(
            xp, jnp.transpose(w, (2, 3, 1, 0)).astype(jnp.float32),
            window_strides=(1, 1), padding="VALID",
            dimension_numbers=("NHWC", "HWIO", "NHWC"))
        y = y + b.reshape(1, 1, 1, -1)
        mean = jnp.mean(y, axis=(1, 2), keepdims=True)
        var = jnp.mean((y - mean) ** 2, axis=(1, 2), keepdims=True)
        return (y - mean) * jax.lax.rsqrt(var + _EPS)

    h = jnp.maximum(conv_in(x, w1, b1), 0.0)
    out = x + conv_in(h, w2, b2)
    return jnp.transpose(out, (0, 3, 1, 2))


if __name__ == "__main__":
    N, C, H, W = 2, 4, 16, 16
    key = jax.random.PRNGKey(0)
    kx, kw1, kb1, kw2, kb2 = jax.random.split(key, 5)

    x = jax.random.normal(kx, (N, C, H, W), jnp.float32)
    fan_in = C * 3 * 3
    w1 = jax.random.normal(kw1, (C, C, 3, 3), jnp.float32) / np.sqrt(fan_in)
    b1 = jax.random.normal(kb1, (C,), jnp.float32) * 0.01
    w2 = jax.random.normal(kw2, (C, C, 3, 3), jnp.float32) / np.sqrt(fan_in)
    b2 = jax.random.normal(kb2, (C,), jnp.float32) * 0.01

    out = jax.block_until_ready(resnet_block_forward(x, w1, b1, w2, b2))
    ref = jax.block_until_ready(_ref_block(x, w1, b1, w2, b2))

    # Tolerance covers bf16 MXU operand rounding (f32 accumulation); bias removal is exact.
    np.testing.assert_allclose(np.asarray(out), np.asarray(ref), rtol=3e-2, atol=3e-2)

    print("KERNEL_OK")
</pallas_src>

<mosaic_0001>
module attributes {stable_mosaic.version = 11 : i64} {
  func.func @resnet_block_kernel(%arg0: i32, %arg1: memref<1x16x16x4xf32, #tpu.memory_space<vmem>>, %arg2: memref<3x12x4xbf16, #tpu.memory_space<vmem>>, %arg3: memref<3x12x4xbf16, #tpu.memory_space<vmem>>, %arg4: memref<1x16x16x4xf32, #tpu.memory_space<vmem>>) attributes {dimension_semantics = [#tpu.dimension_semantics<parallel>], iteration_bounds = array<i64: 2>, scalar_prefetch = 0 : i64, scratch_operands = 0 : i64, tpu.core_type = #tpu.core_type<tc>, window_params = [{transform_indices = @transform_0, window_bounds = array<i64: 1, 16, 16, 4>}, {pipeline_mode = #tpu.pipeline_mode<synchronous>, transform_indices = @transform_1, window_bounds = array<i64: 3, 12, 4>}, {pipeline_mode = #tpu.pipeline_mode<synchronous>, transform_indices = @transform_2, window_bounds = array<i64: 3, 12, 4>}, {transform_indices = @transform_3, window_bounds = array<i64: 1, 16, 16, 4>}]} {
    %c0 = arith.constant 0 : index
    %c0_0 = arith.constant 0 : index
    %c0_1 = arith.constant 0 : index
    %c0_2 = arith.constant 0 : index
    %0 = vector.load %arg1[%c0, %c0_0, %c0_1, %c0_2] : memref<1x16x16x4xf32, #tpu.memory_space<vmem>>, vector<1x16x16x4xf32>
    %1 = vector.shape_cast %0 : vector<1x16x16x4xf32> to vector<16x16x4xf32>
    %2 = arith.truncf %1 : vector<16x16x4xf32> to vector<16x16x4xbf16>
    %3 = vector.extract_strided_slice %2 {offsets = [0, 1, 0], sizes = [16, 1, 4], strides = [1, 1, 1]} : vector<16x16x4xbf16> to vector<16x1x4xbf16>
    %4 = vector.extract_strided_slice %2 {offsets = [0, 14, 0], sizes = [16, 1, 4], strides = [1, 1, 1]} : vector<16x16x4xbf16> to vector<16x1x4xbf16>
    %cst = arith.constant 0.000000e+00 : bf16
    %5 = vector.broadcast %cst : bf16 to vector<16x6x4xbf16>
    %6 = tpu.concatenate %3, %2, %4, %5 in 1 : vector<16x1x4xbf16>, vector<16x16x4xbf16>, vector<16x1x4xbf16>, vector<16x6x4xbf16> -> vector<16x24x4xbf16>
    %7 = vector.extract_strided_slice %6 {offsets = [1, 0, 0], sizes = [1, 24, 4], strides = [1, 1, 1]} : vector<16x24x4xbf16> to vector<1x24x4xbf16>
    %8 = vector.extract_strided_slice %6 {offsets = [0, 0, 0], sizes = [15, 24, 4], strides = [1, 1, 1]} : vector<16x24x4xbf16> to vector<15x24x4xbf16>
    %9 = tpu.concatenate %7, %8 in 0 : vector<1x24x4xbf16>, vector<15x24x4xbf16> -> vector<16x24x4xbf16>
    %10 = vector.extract_strided_slice %6 {offsets = [1, 0, 0], sizes = [15, 24, 4], strides = [1, 1, 1]} : vector<16x24x4xbf16> to vector<15x24x4xbf16>
    %11 = vector.extract_strided_slice %6 {offsets = [14, 0, 0], sizes = [1, 24, 4], strides = [1, 1, 1]} : vector<16x24x4xbf16> to vector<1x24x4xbf16>
    %12 = tpu.concatenate %10, %11 in 0 : vector<15x24x4xbf16>, vector<1x24x4xbf16> -> vector<16x24x4xbf16>
    %13 = tpu.concatenate %9, %6, %12 in 2 : vector<16x24x4xbf16>, vector<16x24x4xbf16>, vector<16x24x4xbf16> -> vector<16x24x12xbf16>
    %14 = vector.shape_cast %13 : vector<16x24x12xbf16> to vector<384x12xbf16>
    %c0_3 = arith.constant 0 : index
    %c0_4 = arith.constant 0 : index
    %c0_5 = arith.constant 0 : index
    %15 = vector.load %arg2[%c0_3, %c0_4, %c0_5] : memref<3x12x4xbf16, #tpu.memory_space<vmem>>, vector<1x12x4xbf16>
    %16 = vector.shape_cast %15 : vector<1x12x4xbf16> to vector<12x4xbf16>
    %cst_6 = arith.constant dense<0.000000e+00> : vector<384x4xf32>
    %17 = tpu.matmul %14, %16, %cst_6 {dimension_numbers = #tpu.dot_dimension_numbers<[1], [0], [0], [1], [0, 0, 1, 1], [], []>} : vector<384x12xbf16>, vector<12x4xbf16>, vector<384x4xf32> -> vector<384x4xf32>
    %c1 = arith.constant 1 : index
    %c0_7 = arith.constant 0 : index
    %c0_8 = arith.constant 0 : index
    %18 = vector.load %arg2[%c1, %c0_7, %c0_8] : memref<3x12x4xbf16, #tpu.memory_space<vmem>>, vector<1x12x4xbf16>
    %19 = vector.shape_cast %18 : vector<1x12x4xbf16> to vector<12x4xbf16>
    %cst_9 = arith.constant dense<0.000000e+00> : vector<384x4xf32>
    %20 = tpu.matmul %14, %19, %cst_9 {dimension_numbers = #tpu.dot_dimension_numbers<[1], [0], [0], [1], [0, 0, 1, 1], [], []>} : vector<384x12xbf16>, vector<12x4xbf16>, vector<384x4xf32> -> vector<384x4xf32>
    %c383_i32 = arith.constant 383 : i32
    %21 = tpu.dynamic_rotate %20 by %c383_i32 dim 0 : vector<384x4xf32>, i32 -> vector<384x4xf32>
    %22 = arith.addf %17, %21 : vector<384x4xf32>
    %c2 = arith.constant 2 : index
    %c0_10 = arith.constant 0 : index
    %c0_11 = arith.constant 0 : index
    %23 = vector.load %arg2[%c2, %c0_10, %c0_11] : memref<3x12x4xbf16, #tpu.memory_space<vmem>>, vector<1x12x4xbf16>
    %24 = vector.shape_cast %23 : vector<1x12x4xbf16> to vector<12x4xbf16>
    %cst_12 = arith.constant dense<0.000000e+00> : vector<384x4xf32>
    %25 = tpu.matmul %14, %24, %cst_12 {dimension_numbers = #tpu.dot_dimension_numbers<[1], [0], [0], [1], [0, 0, 1, 1], [], []>} : vector<384x12xbf16>, vector<12x4xbf16>, vector<384x4xf32> -> vector<384x4xf32>
    %c382_i32 = arith.constant 382 : i32
    %26 = tpu.dynamic_rotate %25 by %c382_i32 dim 0 : vector<384x4xf32>, i32 -> vector<384x4xf32>
    %27 = arith.addf %22, %26 : vector<384x4xf32>
    %28 = vector.shape_cast %27 : vector<384x4xf32> to vector<16x24x4xf32>
    %29 = vector.extract_strided_slice %28 {offsets = [0, 0, 0], sizes = [16, 16, 4], strides = [1, 1, 1]} : vector<16x24x4xf32> to vector<16x16x4xf32>
    %cst_13 = arith.constant dense<0.000000e+00> : vector<16x4xf32>
    %30 = vector.multi_reduction <add>, %29, %cst_13 [0] : vector<16x16x4xf32> to vector<16x4xf32>
    %cst_14 = arith.constant dense<0.000000e+00> : vector<4xf32>
    %31 = vector.multi_reduction <add>, %30, %cst_14 [0] : vector<16x4xf32> to vector<4xf32>
    %32 = vector.shape_cast %31 : vector<4xf32> to vector<1x4xf32>
    %cst_15 = arith.constant 3.906250e-03 : f32
    %33 = vector.broadcast %cst_15 : f32 to vector<1x4xf32>
    %34 = arith.mulf %32, %33 : vector<1x4xf32>
    %35 = arith.mulf %29, %29 : vector<16x16x4xf32>
    %cst_16 = arith.constant dense<0.000000e+00> : vector<16x4xf32>
    %36 = vector.multi_reduction <add>, %35, %cst_16 [0] : vector<16x16x4xf32> to vector<16x4xf32>
    %cst_17 = arith.constant dense<0.000000e+00> : vector<4xf32>
    %37 = vector.multi_reduction <add>, %36, %cst_17 [0] : vector<16x4xf32> to vector<4xf32>
    %38 = vector.shape_cast %37 : vector<4xf32> to vector<1x4xf32>
    %cst_18 = arith.constant 3.906250e-03 : f32
    %39 = vector.broadcast %cst_18 : f32 to vector<1x4xf32>
    %40 = arith.mulf %38, %39 : vector<1x4xf32>
    %41 = arith.mulf %34, %34 : vector<1x4xf32>
    %42 = arith.subf %40, %41 : vector<1x4xf32>
    %cst_19 = arith.constant 0.000000e+00 : f32
    %43 = vector.broadcast %cst_19 : f32 to vector<1x4xf32>
    %44 = arith.maximumf %42, %43 : vector<1x4xf32>
    %45 = vector.shape_cast %34 : vector<1x4xf32> to vector<1x1x4xf32>
    %46 = vector.broadcast %45 : vector<1x1x4xf32> to vector<16x16x4xf32>
    %47 = arith.subf %29, %46 : vector<16x16x4xf32>
    %cst_20 = arith.constant 9.99999974E-6 : f32
    %48 = vector.broadcast %cst_20 : f32 to vector<1x4xf32>
    %49 = arith.addf %44, %48 : vector<1x4xf32>
    %50 = math.rsqrt %49 : vector<1x4xf32>
    %51 = vector.shape_cast %50 : vector<1x4xf32> to vector<1x1x4xf32>
    %52 = vector.broadcast %51 : vector<1x1x4xf32> to vector<16x16x4xf32>
    %53 = arith.mulf %47, %52 : vector<16x16x4xf32>
    %cst_21 = arith.constant 0.000000e+00 : f32
    %54 = vector.broadcast %cst_21 : f32 to vector<16x16x4xf32>
    %55 = arith.maximumf %53, %54 : vector<16x16x4xf32>
    %56 = arith.truncf %55 : vector<16x16x4xf32> to vector<16x16x4xbf16>
    %57 = vector.extract_strided_slice %56 {offsets = [0, 1, 0], sizes = [16, 1, 4], strides = [1, 1, 1]} : vector<16x16x4xbf16> to vector<16x1x4xbf16>
    %58 = vector.extract_strided_slice %56 {offsets = [0, 14, 0], sizes = [16, 1, 4], strides = [1, 1, 1]} : vector<16x16x4xbf16> to vector<16x1x4xbf16>
    %cst_22 = arith.constant 0.000000e+00 : bf16
    %59 = vector.broadcast %cst_22 : bf16 to vector<16x6x4xbf16>
    %60 = tpu.concatenate %57, %56, %58, %59 in 1 : vector<16x1x4xbf16>, vector<16x16x4xbf16>, vector<16x1x4xbf16>, vector<16x6x4xbf16> -> vector<16x24x4xbf16>
    %61 = vector.extract_strided_slice %60 {offsets = [1, 0, 0], sizes = [1, 24, 4], strides = [1, 1, 1]} : vector<16x24x4xbf16> to vector<1x24x4xbf16>
    %62 = vector.extract_strided_slice %60 {offsets = [0, 0, 0], sizes = [15, 24, 4], strides = [1, 1, 1]} : vector<16x24x4xbf16> to vector<15x24x4xbf16>
    %63 = tpu.concatenate %61, %62 in 0 : vector<1x24x4xbf16>, vector<15x24x4xbf16> -> vector<16x24x4xbf16>
    %64 = vector.extract_strided_slice %60 {offsets = [1, 0, 0], sizes = [15, 24, 4], strides = [1, 1, 1]} : vector<16x24x4xbf16> to vector<15x24x4xbf16>
    %65 = vector.extract_strided_slice %60 {offsets = [14, 0, 0], sizes = [1, 24, 4], strides = [1, 1, 1]} : vector<16x24x4xbf16> to vector<1x24x4xbf16>
    %66 = tpu.concatenate %64, %65 in 0 : vector<15x24x4xbf16>, vector<1x24x4xbf16> -> vector<16x24x4xbf16>
    %67 = tpu.concatenate %63, %60, %66 in 2 : vector<16x24x4xbf16>, vector<16x24x4xbf16>, vector<16x24x4xbf16> -> vector<16x24x12xbf16>
    %68 = vector.shape_cast %67 : vector<16x24x12xbf16> to vector<384x12xbf16>
    %c0_23 = arith.constant 0 : index
    %c0_24 = arith.constant 0 : index
    %c0_25 = arith.constant 0 : index
    %69 = vector.load %arg3[%c0_23, %c0_24, %c0_25] : memref<3x12x4xbf16, #tpu.memory_space<vmem>>, vector<1x12x4xbf16>
    %70 = vector.shape_cast %69 : vector<1x12x4xbf16> to vector<12x4xbf16>
    %cst_26 = arith.constant dense<0.000000e+00> : vector<384x4xf32>
    %71 = tpu.matmul %68, %70, %cst_26 {dimension_numbers = #tpu.dot_dimension_numbers<[1], [0], [0], [1], [0, 0, 1, 1], [], []>} : vector<384x12xbf16>, vector<12x4xbf16>, vector<384x4xf32> -> vector<384x4xf32>
    %c1_27 = arith.constant 1 : index
    %c0_28 = arith.constant 0 : index
    %c0_29 = arith.constant 0 : index
    %72 = vector.load %arg3[%c1_27, %c0_28, %c0_29] : memref<3x12x4xbf16, #tpu.memory_space<vmem>>, vector<1x12x4xbf16>
    %73 = vector.shape_cast %72 : vector<1x12x4xbf16> to vector<12x4xbf16>
    %cst_30 = arith.constant dense<0.000000e+00> : vector<384x4xf32>
    %74 = tpu.matmul %68, %73, %cst_30 {dimension_numbers = #tpu.dot_dimension_numbers<[1], [0], [0], [1], [0, 0, 1, 1], [], []>} : vector<384x12xbf16>, vector<12x4xbf16>, vector<384x4xf32> -> vector<384x4xf32>
    %c383_i32_31 = arith.constant 383 : i32
    %75 = tpu.dynamic_rotate %74 by %c383_i32_31 dim 0 : vector<384x4xf32>, i32 -> vector<384x4xf32>
    %76 = arith.addf %71, %75 : vector<384x4xf32>
    %c2_32 = arith.constant 2 : index
    %c0_33 = arith.constant 0 : index
    %c0_34 = arith.constant 0 : index
    %77 = vector.load %arg3[%c2_32, %c0_33, %c0_34] : memref<3x12x4xbf16, #tpu.memory_space<vmem>>, vector<1x12x4xbf16>
    %78 = vector.shape_cast %77 : vector<1x12x4xbf16> to vector<12x4xbf16>
    %cst_35 = arith.constant dense<0.000000e+00> : vector<384x4xf32>
    %79 = tpu.matmul %68, %78, %cst_35 {dimension_numbers = #tpu.dot_dimension_numbers<[1], [0], [0], [1], [0, 0, 1, 1], [], []>} : vector<384x12xbf16>, vector<12x4xbf16>, vector<384x4xf32> -> vector<384x4xf32>
    %c382_i32_36 = arith.constant 382 : i32
    %80 = tpu.dynamic_rotate %79 by %c382_i32_36 dim 0 : vector<384x4xf32>, i32 -> vector<384x4xf32>
    %81 = arith.addf %76, %80 : vector<384x4xf32>
    %82 = vector.shape_cast %81 : vector<384x4xf32> to vector<16x24x4xf32>
    %83 = vector.extract_strided_slice %82 {offsets = [0, 0, 0], sizes = [16, 16, 4], strides = [1, 1, 1]} : vector<16x24x4xf32> to vector<16x16x4xf32>
    %cst_37 = arith.constant dense<0.000000e+00> : vector<16x4xf32>
    %84 = vector.multi_reduction <add>, %83, %cst_37 [0] : vector<16x16x4xf32> to vector<16x4xf32>
    %cst_38 = arith.constant dense<0.000000e+00> : vector<4xf32>
    %85 = vector.multi_reduction <add>, %84, %cst_38 [0] : vector<16x4xf32> to vector<4xf32>
    %86 = vector.shape_cast %85 : vector<4xf32> to vector<1x4xf32>
    %cst_39 = arith.constant 3.906250e-03 : f32
    %87 = vector.broadcast %cst_39 : f32 to vector<1x4xf32>
    %88 = arith.mulf %86, %87 : vector<1x4xf32>
    %89 = arith.mulf %83, %83 : vector<16x16x4xf32>
    %cst_40 = arith.constant dense<0.000000e+00> : vector<16x4xf32>
    %90 = vector.multi_reduction <add>, %89, %cst_40 [0] : vector<16x16x4xf32> to vector<16x4xf32>
    %cst_41 = arith.constant dense<0.000000e+00> : vector<4xf32>
    %91 = vector.multi_reduction <add>, %90, %cst_41 [0] : vector<16x4xf32> to vector<4xf32>
    %92 = vector.shape_cast %91 : vector<4xf32> to vector<1x4xf32>
    %cst_42 = arith.constant 3.906250e-03 : f32
    %93 = vector.broadcast %cst_42 : f32 to vector<1x4xf32>
    %94 = arith.mulf %92, %93 : vector<1x4xf32>
    %95 = arith.mulf %88, %88 : vector<1x4xf32>
    %96 = arith.subf %94, %95 : vector<1x4xf32>
    %cst_43 = arith.constant 0.000000e+00 : f32
    %97 = vector.broadcast %cst_43 : f32 to vector<1x4xf32>
    %98 = arith.maximumf %96, %97 : vector<1x4xf32>
    %99 = vector.shape_cast %88 : vector<1x4xf32> to vector<1x1x4xf32>
    %100 = vector.broadcast %99 : vector<1x1x4xf32> to vector<16x16x4xf32>
    %101 = arith.subf %83, %100 : vector<16x16x4xf32>
    %cst_44 = arith.constant 9.99999974E-6 : f32
    %102 = vector.broadcast %cst_44 : f32 to vector<1x4xf32>
    %103 = arith.addf %98, %102 : vector<1x4xf32>
    %104 = math.rsqrt %103 : vector<1x4xf32>
    %105 = vector.shape_cast %104 : vector<1x4xf32> to vector<1x1x4xf32>
    %106 = vector.broadcast %105 : vector<1x1x4xf32> to vector<16x16x4xf32>
    %107 = arith.mulf %101, %106 : vector<16x16x4xf32>
    %108 = arith.addf %107, %1 : vector<16x16x4xf32>
    %109 = vector.shape_cast %108 : vector<16x16x4xf32> to vector<1x16x16x4xf32>
    %c0_45 = arith.constant 0 : index
    %c0_46 = arith.constant 0 : index
    %c0_47 = arith.constant 0 : index
    %c0_48 = arith.constant 0 : index
    %110 = vector.load %arg4[%c0_45, %c0_46, %c0_47, %c0_48] : memref<1x16x16x4xf32, #tpu.memory_space<vmem>>, vector<1x16x16x4xf32>
    tpu.vector_store %arg4[%c0_45, %c0_46, %c0_47, %c0_48], %109 {strides = array<i32>} : memref<1x16x16x4xf32, #tpu.memory_space<vmem>>, vector<1x16x16x4xf32>,
    return
  }
  func.func @transform_0(%arg0: i32) -> (i32, i32, i32, i32) {
    %c0_i32 = arith.constant 0 : i32
    %c0_i32_0 = arith.constant 0 : i32
    %c0_i32_1 = arith.constant 0 : i32
    %c0_i32_2 = arith.constant 0 : i32
    return %arg0, %c0_i32, %c0_i32_0, %c0_i32_1 : i32, i32, i32, i32
  }
  func.func @transform_1(%arg0: i32) -> (i32, i32, i32) {
    %c0_i32 = arith.constant 0 : i32
    %c0_i32_0 = arith.constant 0 : i32
    %c0_i32_1 = arith.constant 0 : i32
    %c0_i32_2 = arith.constant 0 : i32
    return %c0_i32, %c0_i32_0, %c0_i32_1 : i32, i32, i32
  }
  func.func @transform_2(%arg0: i32) -> (i32, i32, i32) {
    %c0_i32 = arith.constant 0 : i32
    %c0_i32_0 = arith.constant 0 : i32
    %c0_i32_1 = arith.constant 0 : i32
    %c0_i32_2 = arith.constant 0 : i32
    return %c0_i32, %c0_i32_0, %c0_i32_1 : i32, i32, i32
  }
  func.func @transform_3(%arg0: i32) -> (i32, i32, i32, i32) {
    %c0_i32 = arith.constant 0 : i32
    %c0_i32_0 = arith.constant 0 : i32
    %c0_i32_1 = arith.constant 0 : i32
    %c0_i32_2 = arith.constant 0 : i32
    return %arg0, %c0_i32, %c0_i32_0, %c0_i32_1 : i32, i32, i32, i32
  }
}

</mosaic_0001>

<llo_original>
// kernel: resnet_block_forward.1
$region0: #{resnet_block_forward.1}
  #allocation0 [shape = 'u32[]', space=smem, size = 0x4, offset = 0x4, fixed_abs, tag = 'smem constant byte address 0x4 - core index']
  #allocation1 [shape = 'u32[72,128]{1,0:T(1,128)}', space=vmem, size = 0x9000, scoped, tag = 'internal scratch']
  %s0 = inlined_call_operand.vmem [shape: f32[2,16,16,4], index: 0, kind: input, shape index: {}]
  %s1 = inlined_call_operand.vmem [shape: bf16[3,12,4], index: 1, kind: input, shape index: {}]
  %s2 = inlined_call_operand.vmem [shape: bf16[3,12,4], index: 2, kind: input, shape index: {}]
  %s3 = inlined_call_operand.vmem [shape: f32[2,16,16,4], index: 3, kind: output, shape index: {}]
  %s4 = sld [smem:[#allocation0]]
  $region45: #{resnet_block_forward.1} parent=0
    _
  %s6 = ssub.s32 1, %s4
  %s7 = scalar_select 0, %s6, %s4
  loop: start=0, step=1, limit=4
  $region2: #{resnet_block_forward.1} parent=0 // loop_pre_header
    _
  $region3: #{resnet_block_forward.1} parent=0 // loop_header
    %s9 = sphi 0, %s13
    %p10 = scmp.ge.s32.totalorder %s9, 4
    %s19 = sphi 0, %s21
    %s22 = sphi 0, %s19
    %s23 = sphi 0, %s22
    %s39 = sphi 0, %s23
    %s43 = sphi 0, %s43
    %s45 = sphi 0, %s43
    %s46 = sphi 0, %s45
    %s60 = sphi 0, %s46
    %s64 = sphi 0, %s64
    %s66 = sphi 0, %s64
    %s67 = sphi 0, %s66
    %s81 = sphi 0, %s67
    %s87 = sphi 0, %s89
    %s90 = sphi 0, %s87
    %s91 = sphi 0, %s90
    %s107 = sphi 0, %s91
  $region4: #{resnet_block_forward.1} parent=0 // loop_header_branch
    %12 = sbr.rel (%p10) target = $region8
  $region5: #{resnet_block_forward.1} parent=0 // loop_body
    %s14 = ssub.s32 %s9, 1
    %s15 = ssub.s32 %s9, 2
    %s16 = sadd.s32 %s9, 1
    %s17 = ssub.s32 %s9, %s16
    %p18 = scmp.eq.s32.totalorder %s17, 0
    %s20 = sadd.s32 %s19, 1
    %s21 = scalar_select %p18, %s19, %s20
    %p24 = pneg %p18
    %p25 = scmp.eq.s32.totalorder %s9, 1
    %p26 = por %p24, %p25
    %p27 = scmp.ne.s32.totalorder %s19, %s22
    %p28 = scmp.eq.s32.totalorder %s9, 0
    %p29 = por %p27, %p28
    %p30 = scmp.ne.s32.totalorder %s19, %s22
    %p31 = scmp.eq.s32.totalorder %s14, 1
    %p32 = por %p30, %p31
    %p33 = scmp.ne.s32.totalorder %s22, %s23
    %p34 = scmp.eq.s32.totalorder %s14, 0
    %p35 = por %p33, %p34
    %p36 = scmp.ne.s32.totalorder %s22, %s23
    %p37 = scmp.eq.s32.totalorder %s15, 1
    %p38 = por %p36, %p37
    %p40 = scmp.ne.s32.totalorder %s23, %s39
    %p41 = scmp.eq.s32.totalorder %s15, 0
    %p42 = por %p40, %p41
    %s44 = sadd.s32 %s43, 1
    %p47 = scmp.eq.s32.totalorder %s9, 1
    %p48 = scmp.ne.s32.totalorder %s43, %s45
    %p49 = scmp.eq.s32.totalorder %s9, 0
    %p50 = por %p48, %p49
    %p51 = scmp.ne.s32.totalorder %s43, %s45
    %p52 = scmp.eq.s32.totalorder %s14, 1
    %p53 = por %p51, %p52
    %p54 = scmp.ne.s32.totalorder %s45, %s46
    %p55 = scmp.eq.s32.totalorder %s14, 0
    %p56 = por %p54, %p55
    %p57 = scmp.ne.s32.totalorder %s45, %s46
    %p58 = scmp.eq.s32.totalorder %s15, 1
    %p59 = por %p57, %p58
    %p61 = scmp.ne.s32.totalorder %s46, %s60
    %p62 = scmp.eq.s32.totalorder %s15, 0
    %p63 = por %p61, %p62
    %s65 = sadd.s32 %s64, 1
    %p68 = scmp.eq.s32.totalorder %s9, 1
    %p69 = scmp.ne.s32.totalorder %s64, %s66
    %p70 = scmp.eq.s32.totalorder %s9, 0
    %p71 = por %p69, %p70
    %p72 = scmp.ne.s32.totalorder %s64, %s66
    %p73 = scmp.eq.s32.totalorder %s14, 1
    %p74 = por %p72, %p73
    %p75 = scmp.ne.s32.totalorder %s66, %s67
    %p76 = scmp.eq.s32.totalorder %s14, 0
    %p77 = por %p75, %p76
    %p78 = scmp.ne.s32.totalorder %s66, %s67
    %p79 = scmp.eq.s32.totalorder %s15, 1
    %p80 = por %p78, %p79
    %p82 = scmp.ne.s32.totalorder %s67, %s81
    %p83 = scmp.eq.s32.totalorder %s15, 0
    %p84 = por %p82, %p83
    %s85 = ssub.s32 %s9, %s16
    %p86 = scmp.eq.s32.totalorder %s85, 0
    %s88 = sadd.s32 %s87, 1
    %s89 = scalar_select %p86, %s87, %s88
    %p92 = pneg %p86
    %p93 = scmp.eq.s32.totalorder %s9, 1
    %p94 = por %p92, %p93
    %p95 = scmp.ne.s32.totalorder %s87, %s90
    %p96 = scmp.eq.s32.totalorder %s9, 0
    %p97 = por %p95, %p96
    %p98 = scmp.ne.s32.totalorder %s87, %s90
    %p99 = scmp.eq.s32.totalorder %s14, 1
    %p100 = por %p98, %p99
    %p101 = scmp.ne.s32.totalorder %s90, %s91
    %p102 = scmp.eq.s32.totalorder %s14, 0
    %p103 = por %p101, %p102
    %p104 = scmp.ne.s32.totalorder %s90, %s91
    %p105 = scmp.eq.s32.totalorder %s15, 1
    %p106 = por %p104, %p105
    %p108 = scmp.ne.s32.totalorder %s91, %s107
    %p109 = scmp.eq.s32.totalorder %s15, 0
    %p110 = por %p108, %p109
    %p111 = scmp.le.s32.totalorder 1, %s9
    %p112 = scmp.lt.s32.totalorder %s9, 3
    %p113 = pnand %p111, %p112
    %p114 = pneg %p113
    // Predicated region
    $region9: #{resnet_block_forward.1} parent=5 // pred_check
      _
    $region10: #{resnet_block_forward.1} parent=5 // pred_check_branch
      %116 = sbr.rel (%p113) target = $region12
    $region11: #{resnet_block_forward.1} parent=5 // pred_region
      %s117 = ssub.s32 %s9, 1
      // Predicated region
      $region13: #{resnet_block_forward.1} parent=11 // pred_check
        %p118 = pneg %p56
      $region14: #{resnet_block_forward.1} parent=11 // pred_check_branch
        %120 = sbr.rel (%p118) target = $region16
      $region15: #{resnet_block_forward.1} parent=11 // pred_region
        _
      $region16: #{resnet_block_forward.1} parent=11 // pred_fallthru
        _
      // Predicated region
      $region17: #{resnet_block_forward.1} parent=11 // pred_check
        %p121 = pneg %p77
      $region18: #{resnet_block_forward.1} parent=11 // pred_check_branch
        %123 = sbr.rel (%p121) target = $region20
      $region19: #{resnet_block_forward.1} parent=11 // pred_region
        _
      $region20: #{resnet_block_forward.1} parent=11 // pred_fallthru
        _
    $region12: #{resnet_block_forward.1} parent=5 // pred_fallthru
      _
    %p124 = scmp.lt.s32.totalorder %s9, 2
    // Predicated region
    $region21: #{resnet_block_forward.1} parent=5 // pred_check
      %p125 = pneg %p124
    $region22: #{resnet_block_forward.1} parent=5 // pred_check_branch
      %127 = sbr.rel (%p125) target = $region24
    $region23: #{resnet_block_forward.1} parent=5 // pred_region
      // Predicated region
      $region25: #{resnet_block_forward.1} parent=23 // pred_check
        %p128 = pneg %p29
      $region26: #{resnet_block_forward.1} parent=23 // pred_check_branch
        %130 = sbr.rel (%p128) target = $region28
      $region27: #{resnet_block_forward.1} parent=23 // pred_region
        %p131 = scmp.lt.s32.totalorder %s9, 1
        %s132 = scalar_select %p131, %s9, 1
        %s133 = smul.addr %s132, 32
        %s134 = smul.addr %s133, 8
        %s135 = scalar_lea.vmem %s0, %s134
      $region28: #{resnet_block_forward.1} parent=23 // pred_fallthru
        _
    $region24: #{resnet_block_forward.1} parent=5 // pred_fallthru
      _
    %p136 = scmp.le.s32.totalorder 1, %s9
    %p137 = scmp.lt.s32.totalorder %s9, 3
    %p138 = pnand %p136, %p137
    %p139 = pneg %p138
    // Predicated region
    $region29: #{resnet_block_forward.1} parent=5 // pred_check
      _
    $region30: #{resnet_block_forward.1} parent=5 // pred_check_branch
      %141 = sbr.rel (%p138) target = $region32
    $region31: #{resnet_block_forward.1} parent=5 // pred_region
      %s142 = ssub.s32 %s9, 1
      %p143 = scmp.lt.s32.totalorder %s14, 1
      %s144 = scalar_select %p143, %s14, 1
      %s145 = smul.addr %s144, 32
      %s146 = smul.addr %s145, 8
      %s147 = scalar_lea.vmem %s0, %s146
      %p148 = pneg %p35
      %p149 = pneg %p32
      %p150 = pneg %p56
      %p151 = pneg %p53
      %p152 = pneg %p77
      %p153 = pneg %p74
      %p154 = pneg %p103
      %p155 = pneg %p100
      %p156 = scmp.lt.s32.totalorder %s14, 1
      %s157 = scalar_select %p156, %s14, 1
      %s158 = smul.addr %s157, 32
      %s159 = smul.addr %s158, 8
      %s160 = scalar_lea.vmem %s3, %s159
      %p161 = scmp.lt.s32.totalorder %s14, 1
      %s162 = scalar_select %p161, %s14, 1
      %s163 = smul.addr %s162, 32
      %s164 = smul.addr %s163, 8
      %s165 = scalar_lea.vmem %s0, %s164
      %p166 = scmp.lt.s32.totalorder %s14, 1
      %s167 = scalar_select %p166, %s14, 1
      %s168 = smul.addr %s167, 32
      %s169 = smul.addr %s168, 8
      %s170 = scalar_lea.vmem %s3, %s169
      %v172 = vld [vmem:[%s165] sm:$0xff]
      %v173 = vld [vmem:[%s165 + $0x8] sm:$0xff]
      %v174 = vld [vmem:[%s165 + $0x10] sm:$0xff]
      %v175 = vld [vmem:[%s165 + $0x18] sm:$0xff]
      %v176 = vld [vmem:[%s165 + $0x20] sm:$0xff]
      %v177 = vld [vmem:[%s165 + $0x28] sm:$0xff]
      %v178 = vld [vmem:[%s165 + $0x30] sm:$0xff]
      %v179 = vld [vmem:[%s165 + $0x38] sm:$0xff]
      %v180 = vld [vmem:[%s165 + $0x40] sm:$0xff]
      %v181 = vld [vmem:[%s165 + $0x48] sm:$0xff]
      %v182 = vld [vmem:[%s165 + $0x50] sm:$0xff]
      %v183 = vld [vmem:[%s165 + $0x58] sm:$0xff]
      %v184 = vld [vmem:[%s165 + $0x60] sm:$0xff]
      %v185 = vld [vmem:[%s165 + $0x68] sm:$0xff]
      %v186 = vld [vmem:[%s165 + $0x70] sm:$0xff]
      %v187 = vld [vmem:[%s165 + $0x78] sm:$0xff]
      %v188 = vld [vmem:[%s165 + $0x80] sm:$0xff]
      %v189 = vld [vmem:[%s165 + $0x88] sm:$0xff]
      %v190 = vld [vmem:[%s165 + $0x90] sm:$0xff]
      %v191 = vld [vmem:[%s165 + $0x98] sm:$0xff]
      %v192 = vld [vmem:[%s165 + $0xa0] sm:$0xff]
      %v193 = vld [vmem:[%s165 + $0xa8] sm:$0xff]
      %v194 = vld [vmem:[%s165 + $0xb0] sm:$0xff]
      %v195 = vld [vmem:[%s165 + $0xb8] sm:$0xff]
      %v196 = vld [vmem:[%s165 + $0xc0] sm:$0xff]
      %v197 = vld [vmem:[%s165 + $0xc8] sm:$0xff]
      %v198 = vld [vmem:[%s165 + $0xd0] sm:$0xff]
      %v199 = vld [vmem:[%s165 + $0xd8] sm:$0xff]
      %v200 = vld [vmem:[%s165 + $0xe0] sm:$0xff]
      %v201 = vld [vmem:[%s165 + $0xe8] sm:$0xff]
      %v202 = vld [vmem:[%s165 + $0xf0] sm:$0xff]
      %v203 = vld [vmem:[%s165 + $0xf8] sm:$0xff]
      %v204 = vpack.c.bf16 %v172, %v172
      %v205 = vpack.c.bf16 %v173, %v173
      %v206 = vpack.c.bf16 %v174, %v174
      %v207 = vpack.c.bf16 %v175, %v175
      %v208 = vpack.c.bf16 %v176, %v176
      %v209 = vpack.c.bf16 %v177, %v177
      %v210 = vpack.c.bf16 %v178, %v178
      %v211 = vpack.c.bf16 %v179, %v179
      %v212 = vpack.c.bf16 %v180, %v180
      %v213 = vpack.c.bf16 %v181, %v181
      %v214 = vpack.c.bf16 %v182, %v182
      %v215 = vpack.c.bf16 %v183, %v183
      %v216 = vpack.c.bf16 %v184, %v184
      %v217 = vpack.c.bf16 %v185, %v185
      %v218 = vpack.c.bf16 %v186, %v186
      %v219 = vpack.c.bf16 %v187, %v187
      %v220 = vpack.c.bf16 %v188, %v188
      %v221 = vpack.c.bf16 %v189, %v189
      %v222 = vpack.c.bf16 %v190, %v190
      %v223 = vpack.c.bf16 %v191, %v191
      %v224 = vpack.c.bf16 %v192, %v192
      %v225 = vpack.c.bf16 %v193, %v193
      %v226 = vpack.c.bf16 %v194, %v194
      %v227 = vpack.c.bf16 %v195, %v195
      %v228 = vpack.c.bf16 %v196, %v196
      %v229 = vpack.c.bf16 %v197, %v197
      %v230 = vpack.c.bf16 %v198, %v198
      %v231 = vpack.c.bf16 %v199, %v199
      %v232 = vpack.c.bf16 %v200, %v200
      %v233 = vpack.c.bf16 %v201, %v201
      %v234 = vpack.c.bf16 %v202, %v202
      %v235 = vpack.c.bf16 %v203, %v203
      %v252 = vunpack.c.l.b16 %v204
      %v253 = vunpack.c.l.b16 %v206
      %v254 = vunpack.c.l.b16 %v208
      %v255 = vunpack.c.l.b16 %v210
      %v256 = vunpack.c.l.b16 %v212
      %v257 = vunpack.c.l.b16 %v214
      %v258 = vunpack.c.l.b16 %v216
      %v259 = vunpack.c.l.b16 %v218
      %v260 = vunpack.c.l.b16 %v220
      %v261 = vunpack.c.l.b16 %v222
      %v262 = vunpack.c.l.b16 %v224
      %v263 = vunpack.c.l.b16 %v226
      %v264 = vunpack.c.l.b16 %v228
      %v265 = vunpack.c.l.b16 %v230
      %v266 = vunpack.c.l.b16 %v232
      %v267 = vunpack.c.l.b16 %v234
      %v268 = vpack.c.b16 %v252, %v252
      %v269 = vpack.c.b16 %v253, %v253
      %v270 = vpack.c.b16 %v254, %v254
      %v271 = vpack.c.b16 %v255, %v255
      %v272 = vpack.c.b16 %v256, %v256
      %v273 = vpack.c.b16 %v257, %v257
      %v274 = vpack.c.b16 %v258, %v258
      %v275 = vpack.c.b16 %v259, %v259
      %v276 = vpack.c.b16 %v260, %v260
      %v277 = vpack.c.b16 %v261, %v261
      %v278 = vpack.c.b16 %v262, %v262
      %v279 = vpack.c.b16 %v263, %v263
      %v280 = vpack.c.b16 %v264, %v264
      %v281 = vpack.c.b16 %v265, %v265
      %v282 = vpack.c.b16 %v266, %v266
      %v283 = vpack.c.b16 %v267, %v267
      %v285 = vshrl.u32 %v268, 16
      %v288 = vshrl.u32 %v269, 16
      %v291 = vshrl.u32 %v270, 16
      %v294 = vshrl.u32 %v271, 16
      %v297 = vshrl.u32 %v272, 16
      %v300 = vshrl.u32 %v273, 16
      %v303 = vshrl.u32 %v274, 16
      %v306 = vshrl.u32 %v275, 16
      %v309 = vshrl.u32 %v276, 16
      %v312 = vshrl.u32 %v277, 16
      %v315 = vshrl.u32 %v278, 16
      %v318 = vshrl.u32 %v279, 16
      %v321 = vshrl.u32 %v280, 16
      %v324 = vshrl.u32 %v281, 16
      %v327 = vshrl.u32 %v282, 16
      %v330 = vshrl.u32 %v283, 16
      %v364 = vunpack.c.l.b16 %v205
      %v365 = vunpack.c.l.b16 %v207
      %v366 = vunpack.c.l.b16 %v209
      %v367 = vunpack.c.l.b16 %v211
      %v368 = vunpack.c.l.b16 %v213
      %v369 = vunpack.c.l.b16 %v215
      %v370 = vunpack.c.l.b16 %v217
      %v371 = vunpack.c.l.b16 %v219
      %v372 = vunpack.c.l.b16 %v221
      %v373 = vunpack.c.l.b16 %v223
      %v374 = vunpack.c.l.b16 %v225
      %v375 = vunpack.c.l.b16 %v227
      %v376 = vunpack.c.l.b16 %v229
      %v377 = vunpack.c.l.b16 %v231
      %v378 = vunpack.c.l.b16 %v233
      %v379 = vunpack.c.l.b16 %v235
      %v380 = vpack.c.b16 %v364, %v252
      %v381 = vpack.c.b16 %v365, %v253
      %v382 = vpack.c.b16 %v366, %v254
      %v383 = vpack.c.b16 %v367, %v255
      %v384 = vpack.c.b16 %v368, %v256
      %v385 = vpack.c.b16 %v369, %v257
      %v386 = vpack.c.b16 %v370, %v258
      %v387 = vpack.c.b16 %v371, %v259
      %v388 = vpack.c.b16 %v372, %v260
      %v389 = vpack.c.b16 %v373, %v261
      %v390 = vpack.c.b16 %v374, %v262
      %v391 = vpack.c.b16 %v375, %v263
      %v392 = vpack.c.b16 %v376, %v264
      %v393 = vpack.c.b16 %v377, %v265
      %v394 = vpack.c.b16 %v378, %v266
      %v395 = vpack.c.b16 %v379, %v267
      %v397 = vshrl.u32 %v380, 16
      %v399 = vrot.slane %v397, 7
      %v400 = vshll.u32 %v380, 16
      %v402 = vor.u32 %v399, %v400
      %v404 = vshrl.u32 %v381, 16
      %v406 = vrot.slane %v404, 7
      %v407 = vshll.u32 %v381, 16
      %v409 = vor.u32 %v406, %v407
      %v411 = vshrl.u32 %v382, 16
      %v413 = vrot.slane %v411, 7
      %v414 = vshll.u32 %v382, 16
      %v416 = vor.u32 %v413, %v414
      %v418 = vshrl.u32 %v383, 16
      %v420 = vrot.slane %v418, 7
      %v421 = vshll.u32 %v383, 16
      %v423 = vor.u32 %v420, %v421
      %v425 = vshrl.u32 %v384, 16
      %v427 = vrot.slane %v425, 7
      %v428 = vshll.u32 %v384, 16
      %v430 = vor.u32 %v427, %v428
      %v432 = vshrl.u32 %v385, 16
      %v434 = vrot.slane %v432, 7
      %v435 = vshll.u32 %v385, 16
      %v437 = vor.u32 %v434, %v435
      %v439 = vshrl.u32 %v386, 16
      %v441 = vrot.slane %v439, 7
      %v442 = vshll.u32 %v386, 16
      %v444 = vor.u32 %v441, %v442
      %v446 = vshrl.u32 %v387, 16
      %v448 = vrot.slane %v446, 7
      %v449 = vshll.u32 %v387, 16
      %v451 = vor.u32 %v448, %v449
      %v453 = vshrl.u32 %v388, 16
      %v455 = vrot.slane %v453, 7
      %v456 = vshll.u32 %v388, 16
      %v458 = vor.u32 %v455, %v456
      %v460 = vshrl.u32 %v389, 16
      %v462 = vrot.slane %v460, 7
      %v463 = vshll.u32 %v389, 16
      %v465 = vor.u32 %v462, %v463
      %v467 = vshrl.u32 %v390, 16
      %v469 = vrot.slane %v467, 7
      %v470 = vshll.u32 %v390, 16
      %v472 = vor.u32 %v469, %v470
      %v474 = vshrl.u32 %v391, 16
      %v476 = vrot.slane %v474, 7
      %v477 = vshll.u32 %v391, 16
      %v479 = vor.u32 %v476, %v477
      %v481 = vshrl.u32 %v392, 16
      %v483 = vrot.slane %v481, 7
      %v484 = vshll.u32 %v392, 16
      %v486 = vor.u32 %v483, %v484
      %v488 = vshrl.u32 %v393, 16
      %v490 = vrot.slane %v488, 7
      %v491 = vshll.u32 %v393, 16
      %v493 = vor.u32 %v490, %v491
      %v495 = vshrl.u32 %v394, 16
      %v497 = vrot.slane %v495, 7
      %v498 = vshll.u32 %v394, 16
      %v500 = vor.u32 %v497, %v498
      %v502 = vshrl.u32 %v395, 16
      %v504 = vrot.slane %v502, 7
      %v505 = vshll.u32 %v395, 16
      %v507 = vor.u32 %v504, %v505
      %v540 = vpack.c.b16 %v364, %v364
      %v541 = vpack.c.b16 %v365, %v365
      %v542 = vpack.c.b16 %v366, %v366
      %v543 = vpack.c.b16 %v367, %v367
      %v544 = vpack.c.b16 %v368, %v368
      %v545 = vpack.c.b16 %v369, %v369
      %v546 = vpack.c.b16 %v370, %v370
      %v547 = vpack.c.b16 %v371, %v371
      %v548 = vpack.c.b16 %v372, %v372
      %v549 = vpack.c.b16 %v373, %v373
      %v550 = vpack.c.b16 %v374, %v374
      %v551 = vpack.c.b16 %v375, %v375
      %v552 = vpack.c.b16 %v376, %v376
      %v553 = vpack.c.b16 %v377, %v377
      %v554 = vpack.c.b16 %v378, %v378
      %v555 = vpack.c.b16 %v379, %v379
      %v557 = vshll.u32 %v540, 16
      %v559 = vrot.slane %v557, 3
      %v561 = vshll.u32 %v541, 16
      %v563 = vrot.slane %v561, 3
      %v565 = vshll.u32 %v542, 16
      %v567 = vrot.slane %v565, 3
      %v569 = vshll.u32 %v543, 16
      %v571 = vrot.slane %v569, 3
      %v573 = vshll.u32 %v544, 16
      %v575 = vrot.slane %v573, 3
      %v577 = vshll.u32 %v545, 16
      %v579 = vrot.slane %v577, 3
      %v581 = vshll.u32 %v546, 16
      %v583 = vrot.slane %v581, 3
      %v585 = vshll.u32 %v547, 16
      %v587 = vrot.slane %v585, 3
      %v589 = vshll.u32 %v548, 16
      %v591 = vrot.slane %v589, 3
      %v593 = vshll.u32 %v549, 16
      %v595 = vrot.slane %v593, 3
      %v597 = vshll.u32 %v550, 16
      %v599 = vrot.slane %v597, 3
      %v601 = vshll.u32 %v551, 16
      %v603 = vrot.slane %v601, 3
      %v605 = vshll.u32 %v552, 16
      %v607 = vrot.slane %v605, 3
      %v609 = vshll.u32 %v553, 16
      %v611 = vrot.slane %v609, 3
      %v613 = vshll.u32 %v554, 16
      %v615 = vrot.slane %v613, 3
      %v617 = vshll.u32 %v555, 16
      %v619 = vrot.slane %v617, 3
      %vm636 = vcmask 1040384
      %vm637 = vsmask.f32 256
      %vm638 = vmand %vm636, %vm637
      %v639 = vsel %vm638, %v285, %v402
      %v640 = vsel %vm638, %v288, %v409
      %v641 = vsel %vm638, %v291, %v416
      %v642 = vsel %vm638, %v294, %v423
      %v643 = vsel %vm638, %v297, %v430
      %v644 = vsel %vm638, %v300, %v437
      %v645 = vsel %vm638, %v303, %v444
      %v646 = vsel %vm638, %v306, %v451
      %v647 = vsel %vm638, %v309, %v458
      %v648 = vsel %vm638, %v312, %v465
      %v649 = vsel %vm638, %v315, %v472
      %v650 = vsel %vm638, %v318, %v479
      %v651 = vsel %vm638, %v321, %v486
      %v652 = vsel %vm638, %v324, %v493
      %v653 = vsel %vm638, %v327, %v500
      %v654 = vsel %vm638, %v330, %v507
      %v655 = vsel %vm638, %v399, %v559
      %v656 = vsel %vm638, %v406, %v563
      %v657 = vsel %vm638, %v413, %v567
      %v658 = vsel %vm638, %v420, %v571
      %v659 = vsel %vm638, %v427, %v575
      %v660 = vsel %vm638, %v434, %v579
      %v661 = vsel %vm638, %v441, %v583
      %v662 = vsel %vm638, %v448, %v587
      %v663 = vsel %vm638, %v455, %v591
      %v664 = vsel %vm638, %v462, %v595
      %v665 = vsel %vm638, %v469, %v599
      %v666 = vsel %vm638, %v476, %v603
      %v667 = vsel %vm638, %v483, %v607
      %v668 = vsel %vm638, %v490, %v611
      %v669 = vsel %vm638, %v497, %v615
      %v670 = vsel %vm638, %v504, %v619
      %vm671 = vcmask 1040384
      %v674 = vsel %vm671, %v655, 0
      %v676 = vsel %vm671, %v656, 0
      %v678 = vsel %vm671, %v657, 0
      %v680 = vsel %vm671, %v658, 0
      %v682 = vsel %vm671, %v659, 0
      %v684 = vsel %vm671, %v660, 0
      %v686 = vsel %vm671, %v661, 0
      %v688 = vsel %vm671, %v662, 0
      %v690 = vsel %vm671, %v663, 0
      %v692 = vsel %vm671, %v664, 0
      %v694 = vsel %vm671, %v665, 0
      %v696 = vsel %vm671, %v666, 0
      %v698 = vsel %vm671, %v667, 0
      %v700 = vsel %vm671, %v668, 0
      %v702 = vsel %vm671, %v669, 0
      %v704 = vsel %vm671, %v670, 0
      %737 = vrot.lane.b32.xlu0 %v639, 4
      %v738 = vpop.permute.xlu0 %737
      %739 = vrot.lane.b32.xlu0 %v674, 4
      %v740 = vpop.permute.xlu0 %739
      %741 = vrot.lane.b32.xlu0 %v640, 4
      %v742 = vpop.permute.xlu0 %741
      %743 = vrot.lane.b32.xlu0 %v676, 4
      %v744 = vpop.permute.xlu0 %743
      %745 = vrot.lane.b32.xlu0 %v641, 4
      %v746 = vpop.permute.xlu0 %745
      %747 = vrot.lane.b32.xlu0 %v678, 4
      %v748 = vpop.permute.xlu0 %747
      %749 = vrot.lane.b32.xlu0 %v642, 4
      %v750 = vpop.permute.xlu0 %749
      %751 = vrot.lane.b32.xlu0 %v680, 4
      %v752 = vpop.permute.xlu0 %751
      %753 = vrot.lane.b32.xlu0 %v643, 4
      %v754 = vpop.permute.xlu0 %753
      %755 = vrot.lane.b32.xlu0 %v682, 4
      %v756 = vpop.permute.xlu0 %755
      %757 = vrot.lane.b32.xlu0 %v644, 4
      %v758 = vpop.permute.xlu0 %757
      %759 = vrot.lane.b32.xlu0 %v684, 4
      %v760 = vpop.permute.xlu0 %759
      %761 = vrot.lane.b32.xlu0 %v645, 4
      %v762 = vpop.permute.xlu0 %761
      %763 = vrot.lane.b32.xlu0 %v686, 4
      %v764 = vpop.permute.xlu0 %763
      %765 = vrot.lane.b32.xlu0 %v646, 4
      %v766 = vpop.permute.xlu0 %765
      %767 = vrot.lane.b32.xlu0 %v688, 4
      %v768 = vpop.permute.xlu0 %767
      %769 = vrot.lane.b32.xlu0 %v647, 4
      %v770 = vpop.permute.xlu0 %769
      %771 = vrot.lane.b32.xlu0 %v690, 4
      %v772 = vpop.permute.xlu0 %771
      %773 = vrot.lane.b32.xlu0 %v648, 4
      %v774 = vpop.permute.xlu0 %773
      %775 = vrot.lane.b32.xlu0 %v692, 4
      %v776 = vpop.permute.xlu0 %775
      %777 = vrot.lane.b32.xlu0 %v649, 4
      %v778 = vpop.permute.xlu0 %777
      %779 = vrot.lane.b32.xlu0 %v694, 4
      %v780 = vpop.permute.xlu0 %779
      %781 = vrot.lane.b32.xlu0 %v650, 4
      %v782 = vpop.permute.xlu0 %781
      %783 = vrot.lane.b32.xlu0 %v696, 4
      %v784 = vpop.permute.xlu0 %783
      %785 = vrot.lane.b32.xlu0 %v651, 4
      %v786 = vpop.permute.xlu0 %785
      %787 = vrot.lane.b32.xlu0 %v698, 4
      %v788 = vpop.permute.xlu0 %787
      %789 = vrot.lane.b32.xlu0 %v652, 4
      %v790 = vpop.permute.xlu0 %789
      %791 = vrot.lane.b32.xlu0 %v700, 4
      %v792 = vpop.permute.xlu0 %791
      %793 = vrot.lane.b32.xlu0 %v653, 4
      %v794 = vpop.permute.xlu0 %793
      %795 = vrot.lane.b32.xlu0 %v702, 4
      %v796 = vpop.permute.xlu0 %795
      %797 = vrot.lane.b32.xlu0 %v654, 4
      %v798 = vpop.permute.xlu0 %797
      %799 = vrot.lane.b32.xlu0 %v704, 4
      %v800 = vpop.permute.xlu0 %799
      %801 = vrot.lane.b32.xlu0 %v640, 8
      %v802 = vpop.permute.xlu0 %801
      %803 = vrot.lane.b32.xlu0 %v676, 8
      %v804 = vpop.permute.xlu0 %803
      %805 = vrot.lane.b32.xlu0 %v641, 8
      %v806 = vpop.permute.xlu0 %805
      %807 = vrot.lane.b32.xlu0 %v678, 8
      %v808 = vpop.permute.xlu0 %807
      %809 = vrot.lane.b32.xlu0 %v642, 8
      %v810 = vpop.permute.xlu0 %809
      %811 = vrot.lane.b32.xlu0 %v680, 8
      %v812 = vpop.permute.xlu0 %811
      %813 = vrot.lane.b32.xlu0 %v643, 8
      %v814 = vpop.permute.xlu0 %813
      %815 = vrot.lane.b32.xlu0 %v682, 8
      %v816 = vpop.permute.xlu0 %815
      %817 = vrot.lane.b32.xlu0 %v644, 8
      %v818 = vpop.permute.xlu0 %817
      %819 = vrot.lane.b32.xlu0 %v684, 8
      %v820 = vpop.permute.xlu0 %819
      %821 = vrot.lane.b32.xlu0 %v645, 8
      %v822 = vpop.permute.xlu0 %821
      %823 = vrot.lane.b32.xlu0 %v686, 8
      %v824 = vpop.permute.xlu0 %823
      %825 = vrot.lane.b32.xlu0 %v646, 8
      %v826 = vpop.permute.xlu0 %825
      %827 = vrot.lane.b32.xlu0 %v688, 8
      %v828 = vpop.permute.xlu0 %827
      %829 = vrot.lane.b32.xlu0 %v647, 8
      %v830 = vpop.permute.xlu0 %829
      %831 = vrot.lane.b32.xlu0 %v690, 8
      %v832 = vpop.permute.xlu0 %831
      %833 = vrot.lane.b32.xlu0 %v648, 8
      %v834 = vpop.permute.xlu0 %833
      %835 = vrot.lane.b32.xlu0 %v692, 8
      %v836 = vpop.permute.xlu0 %835
      %837 = vrot.lane.b32.xlu0 %v649, 8
      %v838 = vpop.permute.xlu0 %837
      %839 = vrot.lane.b32.xlu0 %v694, 8
      %v840 = vpop.permute.xlu0 %839
      %841 = vrot.lane.b32.xlu0 %v650, 8
      %v842 = vpop.permute.xlu0 %841
      %843 = vrot.lane.b32.xlu0 %v696, 8
      %v844 = vpop.permute.xlu0 %843
      %845 = vrot.lane.b32.xlu0 %v651, 8
      %v846 = vpop.permute.xlu0 %845
      %847 = vrot.lane.b32.xlu0 %v698, 8
      %v848 = vpop.permute.xlu0 %847
      %849 = vrot.lane.b32.xlu0 %v652, 8
      %v850 = vpop.permute.xlu0 %849
      %851 = vrot.lane.b32.xlu0 %v700, 8
      %v852 = vpop.permute.xlu0 %851
      %853 = vrot.lane.b32.xlu0 %v653, 8
      %v854 = vpop.permute.xlu0 %853
      %855 = vrot.lane.b32.xlu0 %v702, 8
      %v856 = vpop.permute.xlu0 %855
      %857 = vrot.lane.b32.xlu0 %v654, 8
      %v858 = vpop.permute.xlu0 %857
      %859 = vrot.lane.b32.xlu0 %v704, 8
      %v860 = vpop.permute.xlu0 %859
      %vm861 = vcmask 31744
      %v864 = vsel %vm861, %v640, %v738
      %v866 = vsel %vm861, %v676, %v740
      %v869 = vsel %vm861, %v639, %v742
      %v871 = vsel %vm861, %v674, %v744
      %v873 = vsel %vm861, %v640, %v746
      %v875 = vsel %vm861, %v676, %v748
      %v878 = vsel %vm861, %v641, %v750
      %v880 = vsel %vm861, %v678, %v752
      %v883 = vsel %vm861, %v642, %v754
      %v885 = vsel %vm861, %v680, %v756
      %v888 = vsel %vm861, %v643, %v758
      %v890 = vsel %vm861, %v682, %v760
      %v893 = vsel %vm861, %v644, %v762
      %v895 = vsel %vm861, %v684, %v764
      %v898 = vsel %vm861, %v645, %v766
      %v900 = vsel %vm861, %v686, %v768
      %v903 = vsel %vm861, %v646, %v770
      %v905 = vsel %vm861, %v688, %v772
      %v908 = vsel %vm861, %v647, %v774
      %v910 = vsel %vm861, %v690, %v776
      %v913 = vsel %vm861, %v648, %v778
      %v915 = vsel %vm861, %v692, %v780
      %v918 = vsel %vm861, %v649, %v782
      %v920 = vsel %vm861, %v694, %v784
      %v923 = vsel %vm861, %v650, %v786
      %v925 = vsel %vm861, %v696, %v788
      %v928 = vsel %vm861, %v651, %v790
      %v930 = vsel %vm861, %v698, %v792
      %v933 = vsel %vm861, %v652, %v794
      %v935 = vsel %vm861, %v700, %v796
      %v938 = vsel %vm861, %v653, %v798
      %v940 = vsel %vm861, %v702, %v800
      %vm941 = vcmask 64512
      %v943 = vsel %vm941, %v864, %v802
      %v945 = vsel %vm941, %v866, %v804
      %v947 = vsel %vm941, %v869, %v806
      %v949 = vsel %vm941, %v871, %v808
      %v951 = vsel %vm941, %v873, %v810
      %v953 = vsel %vm941, %v875, %v812
      %v955 = vsel %vm941, %v878, %v814
      %v957 = vsel %vm941, %v880, %v816
      %v959 = vsel %vm941, %v883, %v818
      %v961 = vsel %vm941, %v885, %v820
      %v963 = vsel %vm941, %v888, %v822
      %v965 = vsel %vm941, %v890, %v824
      %v967 = vsel %vm941, %v893, %v826
      %v969 = vsel %vm941, %v895, %v828
      %v971 = vsel %vm941, %v898, %v830
      %v973 = vsel %vm941, %v900, %v832
      %v975 = vsel %vm941, %v903, %v834
      %v977 = vsel %vm941, %v905, %v836
      %v979 = vsel %vm941, %v908, %v838
      %v981 = vsel %vm941, %v910, %v840
      %v983 = vsel %vm941, %v913, %v842
      %v985 = vsel %vm941, %v915, %v844
      %v987 = vsel %vm941, %v918, %v846
      %v989 = vsel %vm941, %v920, %v848
      %v991 = vsel %vm941, %v923, %v850
      %v993 = vsel %vm941, %v925, %v852
      %v995 = vsel %vm941, %v928, %v854
      %v997 = vsel %vm941, %v930, %v856
      %v999 = vsel %vm941, %v933, %v858
      %v1001 = vsel %vm941, %v935, %v860
      %v1002 = vsel %vm941, %v938, %v854
      %v1003 = vsel %vm941, %v940, %v856
      %v1036 = vunpack.c.l.b16 %v943
      %v1037 = vunpack.c.h.b16 %v943
      %v1038 = vunpack.c.l.b16 %v945
      %v1039 = vunpack.c.l.b16 %v947
      %v1040 = vunpack.c.h.b16 %v947
      %v1041 = vunpack.c.l.b16 %v949
      %v1042 = vunpack.c.l.b16 %v951
      %v1043 = vunpack.c.h.b16 %v951
      %v1044 = vunpack.c.l.b16 %v953
      %v1045 = vunpack.c.l.b16 %v955
      %v1046 = vunpack.c.h.b16 %v955
      %v1047 = vunpack.c.l.b16 %v957
      %v1048 = vunpack.c.l.b16 %v959
      %v1049 = vunpack.c.h.b16 %v959
      %v1050 = vunpack.c.l.b16 %v961
      %v1051 = vunpack.c.l.b16 %v963
      %v1052 = vunpack.c.h.b16 %v963
      %v1053 = vunpack.c.l.b16 %v965
      %v1054 = vunpack.c.l.b16 %v967
      %v1055 = vunpack.c.h.b16 %v967
      %v1056 = vunpack.c.l.b16 %v969
      %v1057 = vunpack.c.l.b16 %v971
      %v1058 = vunpack.c.h.b16 %v971
      %v1059 = vunpack.c.l.b16 %v973
      %v1060 = vunpack.c.l.b16 %v975
      %v1061 = vunpack.c.h.b16 %v975
      %v1062 = vunpack.c.l.b16 %v977
      %v1063 = vunpack.c.l.b16 %v979
      %v1064 = vunpack.c.h.b16 %v979
      %v1065 = vunpack.c.l.b16 %v981
      %v1066 = vunpack.c.l.b16 %v983
      %v1067 = vunpack.c.h.b16 %v983
      %v1068 = vunpack.c.l.b16 %v985
      %v1069 = vunpack.c.l.b16 %v987
      %v1070 = vunpack.c.h.b16 %v987
      %v1071 = vunpack.c.l.b16 %v989
      %v1072 = vunpack.c.l.b16 %v991
      %v1073 = vunpack.c.h.b16 %v991
      %v1074 = vunpack.c.l.b16 %v993
      %v1075 = vunpack.c.l.b16 %v995
      %v1076 = vunpack.c.h.b16 %v995
      %v1077 = vunpack.c.l.b16 %v997
      %v1078 = vunpack.c.l.b16 %v999
      %v1079 = vunpack.c.h.b16 %v999
      %v1080 = vunpack.c.l.b16 %v1001
      %v1081 = vunpack.c.l.b16 %v1002
      %v1082 = vunpack.c.h.b16 %v1002
      %v1083 = vunpack.c.l.b16 %v1003
      %v1084 = vld [vmem:[%s1] sm:$0xf]
      %v1085 = vld [vmem:[%s1 + $0x4] sm:$0x3]
      %s1086 = scalar_lea.vmem %s1, 8
      %v1087 = vld [vmem:[%s1086] sm:$0xf]
      %v1088 = vld [vmem:[%s1086 + $0x4] sm:$0x3]
      %v1089 = vpack.c.b16 %v1037, %v1036
      %v1090 = vpack.c.b16 %v1039, %v1038
      %v1091 = vpack.c.b16 %v1041, %v1040
      %v1092 = vpack.c.b16 %v1043, %v1042
      %v1093 = vpack.c.b16 %v1045, %v1044
      %v1094 = vpack.c.b16 %v1047, %v1046
      %v1095 = vpack.c.b16 %v1049, %v1048
      %v1096 = vpack.c.b16 %v1051, %v1050
      %v1097 = vpack.c.b16 %v1053, %v1052
      %v1098 = vpack.c.b16 %v1055, %v1054
      %v1099 = vpack.c.b16 %v1057, %v1056
      %v1100 = vpack.c.b16 %v1059, %v1058
      %v1101 = vpack.c.b16 %v1061, %v1060
      %v1102 = vpack.c.b16 %v1063, %v1062
      %v1103 = vpack.c.b16 %v1065, %v1064
      %v1104 = vpack.c.b16 %v1067, %v1066
      %v1105 = vpack.c.b16 %v1069, %v1068
      %v1106 = vpack.c.b16 %v1071, %v1070
      %v1107 = vpack.c.b16 %v1073, %v1072
      %v1108 = vpack.c.b16 %v1075, %v1074
      %v1109 = vpack.c.b16 %v1077, %v1076
      %v1110 = vpack.c.b16 %v1079, %v1078
      %v1111 = vpack.c.b16 %v1081, %v1080
      %v1112 = vpack.c.b16 %v1083, %v1082
      %v1115 = vunpack.c.l.b16 %v1087
      %v1116 = vunpack.c.l.b16 %v1088
      %v1117 = vpack.c.b16 %v1116, %v1115
      %vm1118 = vcmask 97280
      %v1120 = vsel %vm1118, %v1089, 0
      %v1123 = vsel %vm1118, %v1090, 0
      %v1126 = vsel %vm1118, %v1091, 0
      %v1129 = vsel %vm1118, %v1092, 0
      %v1132 = vsel %vm1118, %v1093, 0
      %v1135 = vsel %vm1118, %v1094, 0
      %v1138 = vsel %vm1118, %v1095, 0
      %v1141 = vsel %vm1118, %v1096, 0
      %v1144 = vsel %vm1118, %v1097, 0
      %v1147 = vsel %vm1118, %v1098, 0
      %v1150 = vsel %vm1118, %v1099, 0
      %v1153 = vsel %vm1118, %v1100, 0
      %v1156 = vsel %vm1118, %v1101, 0
      %v1159 = vsel %vm1118, %v1102, 0
      %v1162 = vsel %vm1118, %v1103, 0
      %v1165 = vsel %vm1118, %v1104, 0
      %v1168 = vsel %vm1118, %v1105, 0
      %v1171 = vsel %vm1118, %v1106, 0
      %v1174 = vsel %vm1118, %v1107, 0
      %v1177 = vsel %vm1118, %v1108, 0
      %v1180 = vsel %vm1118, %v1109, 0
      %v1183 = vsel %vm1118, %v1110, 0
      %v1186 = vsel %vm1118, %v1111, 0
      %v1189 = vsel %vm1118, %v1112, 0
      %vm1191 = vcmask 1045504
      %v1193 = vsel %vm1191, %v1117, 0
      %1195 = vmatpush.bf16.msra.mxu0 0
      %1196 = vmatpush.bf16.msra.mxu0 0
      %1197 = vmatpush.bf16.msra.mxu0 0
      %1198 = vmatpush.bf16.msra.mxu0 0
      %1199 = vmatpush.bf16.msra.mxu0 0
      %1200 = vmatpush.bf16.msra.mxu0 0
      %1201 = vmatpush.bf16.msra.mxu0 0
      %1202 = vmatpush.bf16.msra.mxu0 %v1193
      %1203 = vmatmul.bf16.gmra.mxu0 %v1120
      %v1204 = vpop.f32.mrf.mxu0
      %v1205 = vadd.f32 0.0, %v1204
      %v1206 = vpop.f32.mrf.mxu0
      %v1207 = vadd.f32 0.0, %v1206
      %1208 = vmatmul.bf16.gmra.mxu0 %v1123
      %v1209 = vpop.f32.mrf.mxu0
      %v1210 = vadd.f32 0.0, %v1209
      %v1211 = vpop.f32.mrf.mxu0
      %v1212 = vadd.f32 0.0, %v1211
      %1213 = vmatmul.bf16.gmra.mxu0 %v1126
      %v1214 = vpop.f32.mrf.mxu0
      %v1215 = vadd.f32 0.0, %v1214
      %v1216 = vpop.f32.mrf.mxu0
      %v1217 = vadd.f32 0.0, %v1216
      %1218 = vmatmul.bf16.gmra.mxu0 %v1129
      %v1219 = vpop.f32.mrf.mxu0
      %v1220 = vadd.f32 0.0, %v1219
      %v1221 = vpop.f32.mrf.mxu0
      %v1222 = vadd.f32 0.0, %v1221
      %1223 = vmatmul.bf16.gmra.mxu0 %v1132
      %v1224 = vpop.f32.mrf.mxu0
      %v1225 = vadd.f32 0.0, %v1224
      %v1226 = vpop.f32.mrf.mxu0
      %v1227 = vadd.f32 0.0, %v1226
      %1228 = vmatmul.bf16.gmra.mxu0 %v1135
      %v1229 = vpop.f32.mrf.mxu0
      %v1230 = vadd.f32 0.0, %v1229
      %v1231 = vpop.f32.mrf.mxu0
      %v1232 = vadd.f32 0.0, %v1231
      %1233 = vmatmul.bf16.gmra.mxu0 %v1138
      %v1234 = vpop.f32.mrf.mxu0
      %v1235 = vadd.f32 0.0, %v1234
      %v1236 = vpop.f32.mrf.mxu0
      %v1237 = vadd.f32 0.0, %v1236
      %1238 = vmatmul.bf16.gmra.mxu0 %v1141
      %v1239 = vpop.f32.mrf.mxu0
      %v1240 = vadd.f32 0.0, %v1239
      %v1241 = vpop.f32.mrf.mxu0
      %v1242 = vadd.f32 0.0, %v1241
      %1243 = vmatmul.bf16.gmra.mxu0 %v1144
      %v1244 = vpop.f32.mrf.mxu0
      %v1245 = vadd.f32 0.0, %v1244
      %v1246 = vpop.f32.mrf.mxu0
      %v1247 = vadd.f32 0.0, %v1246
      %1248 = vmatmul.bf16.gmra.mxu0 %v1147
      %v1249 = vpop.f32.mrf.mxu0
      %v1250 = vadd.f32 0.0, %v1249
      %v1251 = vpop.f32.mrf.mxu0
      %v1252 = vadd.f32 0.0, %v1251
      %1253 = vmatmul.bf16.gmra.mxu0 %v1150
      %v1254 = vpop.f32.mrf.mxu0
      %v1255 = vadd.f32 0.0, %v1254
      %v1256 = vpop.f32.mrf.mxu0
      %v1257 = vadd.f32 0.0, %v1256
      %1258 = vmatmul.bf16.gmra.mxu0 %v1153
      %v1259 = vpop.f32.mrf.mxu0
      %v1260 = vadd.f32 0.0, %v1259
      %v1261 = vpop.f32.mrf.mxu0
      %v1262 = vadd.f32 0.0, %v1261
      %1263 = vmatmul.bf16.gmra.mxu0 %v1156
      %v1264 = vpop.f32.mrf.mxu0
      %v1265 = vadd.f32 0.0, %v1264
      %v1266 = vpop.f32.mrf.mxu0
      %v1267 = vadd.f32 0.0, %v1266
      %1268 = vmatmul.bf16.gmra.mxu0 %v1159
      %v1269 = vpop.f32.mrf.mxu0
      %v1270 = vadd.f32 0.0, %v1269
      %v1271 = vpop.f32.mrf.mxu0
      %v1272 = vadd.f32 0.0, %v1271
      %1273 = vmatmul.bf16.gmra.mxu0 %v1162
      %v1274 = vpop.f32.mrf.mxu0
      %v1275 = vadd.f32 0.0, %v1274
      %v1276 = vpop.f32.mrf.mxu0
      %v1277 = vadd.f32 0.0, %v1276
      %1278 = vmatmul.bf16.gmra.mxu0 %v1165
      %v1279 = vpop.f32.mrf.mxu0
      %v1280 = vadd.f32 0.0, %v1279
      %v1281 = vpop.f32.mrf.mxu0
      %v1282 = vadd.f32 0.0, %v1281
      %1283 = vmatmul.bf16.gmra.mxu0 %v1168
      %v1284 = vpop.f32.mrf.mxu0
      %v1285 = vadd.f32 0.0, %v1284
      %v1286 = vpop.f32.mrf.mxu0
      %v1287 = vadd.f32 0.0, %v1286
      %1288 = vmatmul.bf16.gmra.mxu0 %v1171
      %v1289 = vpop.f32.mrf.mxu0
      %v1290 = vadd.f32 0.0, %v1289
      %v1291 = vpop.f32.mrf.mxu0
      %v1292 = vadd.f32 0.0, %v1291
      %1293 = vmatmul.bf16.gmra.mxu0 %v1174
      %v1294 = vpop.f32.mrf.mxu0
      %v1295 = vadd.f32 0.0, %v1294
      %v1296 = vpop.f32.mrf.mxu0
      %v1297 = vadd.f32 0.0, %v1296
      %1298 = vmatmul.bf16.gmra.mxu0 %v1177
      %v1299 = vpop.f32.mrf.mxu0
      %v1300 = vadd.f32 0.0, %v1299
      %v1301 = vpop.f32.mrf.mxu0
      %v1302 = vadd.f32 0.0, %v1301
      %1303 = vmatmul.bf16.gmra.mxu0 %v1180
      %v1304 = vpop.f32.mrf.mxu0
      %v1305 = vadd.f32 0.0, %v1304
      %v1306 = vpop.f32.mrf.mxu0
      %v1307 = vadd.f32 0.0, %v1306
      %1308 = vmatmul.bf16.gmra.mxu0 %v1183
      %v1309 = vpop.f32.mrf.mxu0
      %v1310 = vadd.f32 0.0, %v1309
      %v1311 = vpop.f32.mrf.mxu0
      %v1312 = vadd.f32 0.0, %v1311
      %1313 = vmatmul.bf16.gmra.mxu0 %v1186
      %v1314 = vpop.f32.mrf.mxu0
      %v1315 = vadd.f32 0.0, %v1314
      %v1316 = vpop.f32.mrf.mxu0
      %v1317 = vadd.f32 0.0, %v1316
      %1318 = vmatmul.bf16.gmra.mxu0 %v1189
      %v1319 = vpop.f32.mrf.mxu0
      %v1320 = vadd.f32 0.0, %v1319
      %v1321 = vpop.f32.mrf.mxu0
      %v1322 = vadd.f32 0.0, %v1321
      %1323 = vdwg.mxu0
      %v1324 = vrot.slane %v1205, 1
      %v1325 = vrot.slane %v1207, 1
      %v1326 = vrot.slane %v1210, 1
      %v1327 = vrot.slane %v1212, 1
      %v1328 = vrot.slane %v1215, 1
      %v1329 = vrot.slane %v1217, 1
      %v1330 = vrot.slane %v1220, 1
      %v1331 = vrot.slane %v1222, 1
      %v1332 = vrot.slane %v1225, 1
      %v1333 = vrot.slane %v1227, 1
      %v1334 = vrot.slane %v1230, 1
      %v1335 = vrot.slane %v1232, 1
      %v1336 = vrot.slane %v1235, 1
      %v1337 = vrot.slane %v1237, 1
      %v1338 = vrot.slane %v1240, 1
      %v1339 = vrot.slane %v1242, 1
      %v1340 = vrot.slane %v1245, 1
      %v1341 = vrot.slane %v1247, 1
      %v1342 = vrot.slane %v1250, 1
      %v1343 = vrot.slane %v1252, 1
      %v1344 = vrot.slane %v1255, 1
      %v1345 = vrot.slane %v1257, 1
      %v1346 = vrot.slane %v1260, 1
      %v1347 = vrot.slane %v1262, 1
      %v1348 = vrot.slane %v1265, 1
      %v1349 = vrot.slane %v1267, 1
      %v1350 = vrot.slane %v1270, 1
      %v1351 = vrot.slane %v1272, 1
      %v1352 = vrot.slane %v1275, 1
      %v1353 = vrot.slane %v1277, 1
      %v1354 = vrot.slane %v1280, 1
      %v1355 = vrot.slane %v1282, 1
      %v1356 = vrot.slane %v1285, 1
      %v1357 = vrot.slane %v1287, 1
      %v1358 = vrot.slane %v1290, 1
      %v1359 = vrot.slane %v1292, 1
      %v1360 = vrot.slane %v1295, 1
      %v1361 = vrot.slane %v1297, 1
      %v1362 = vrot.slane %v1300, 1
      %v1363 = vrot.slane %v1302, 1
      %v1364 = vrot.slane %v1305, 1
      %v1365 = vrot.slane %v1307, 1
      %v1366 = vrot.slane %v1310, 1
      %v1367 = vrot.slane %v1312, 1
      %v1368 = vrot.slane %v1315, 1
      %v1369 = vrot.slane %v1317, 1
      %v1370 = vrot.slane %v1320, 1
      %v1371 = vrot.slane %v1322, 1
      %v1372 = vlaneseq
      %v1373 = vshrl.u32 %v1372, 7
      %vm1374 = vcmp.lt.s32.totalorder %v1373, 7
      %v1375 = vsel %vm1374, %v1370, %v1371
      %v1376 = vsel %vm1374, %v1369, %v1370
      %v1377 = vsel %vm1374, %v1367, %v1368
      %v1378 = vsel %vm1374, %v1366, %v1367
      %v1379 = vsel %vm1374, %v1364, %v1365
      %v1380 = vsel %vm1374, %v1363, %v1364
      %v1381 = vsel %vm1374, %v1361, %v1362
      %v1382 = vsel %vm1374, %v1360, %v1361
      %v1383 = vsel %vm1374, %v1358, %v1359
      %v1384 = vsel %vm1374, %v1357, %v1358
      %v1385 = vsel %vm1374, %v1355, %v1356
      %v1386 = vsel %vm1374, %v1354, %v1355
      %v1387 = vsel %vm1374, %v1352, %v1353
      %v1388 = vsel %vm1374, %v1351, %v1352
      %v1389 = vsel %vm1374, %v1349, %v1350
      %v1390 = vsel %vm1374, %v1348, %v1349
      %v1391 = vsel %vm1374, %v1346, %v1347
      %v1392 = vsel %vm1374, %v1345, %v1346
      %v1393 = vsel %vm1374, %v1343, %v1344
      %v1394 = vsel %vm1374, %v1342, %v1343
      %v1395 = vsel %vm1374, %v1340, %v1341
      %v1396 = vsel %vm1374, %v1339, %v1340
      %v1397 = vsel %vm1374, %v1337, %v1338
      %v1398 = vsel %vm1374, %v1336, %v1337
      %v1399 = vsel %vm1374, %v1334, %v1335
      %v1400 = vsel %vm1374, %v1333, %v1334
      %v1401 = vsel %vm1374, %v1331, %v1332
      %v1402 = vsel %vm1374, %v1330, %v1331
      %v1403 = vsel %vm1374, %v1328, %v1329
      %v1404 = vsel %vm1374, %v1327, %v1328
      %v1405 = vsel %vm1374, %v1325, %v1326
      %v1406 = vsel %vm1374, %v1324, %v1325
      %v1409 = vunpack.c.l.b16 %v1084
      %v1410 = vunpack.c.l.b16 %v1085
      %v1411 = vpack.c.b16 %v1410, %v1409
      %v1413 = vsel %vm1191, %v1411, 0
      %1415 = vmatpush.bf16.msra.mxu0 0
      %1416 = vmatpush.bf16.msra.mxu0 0
      %1417 = vmatpush.bf16.msra.mxu0 0
      %1418 = vmatpush.bf16.msra.mxu0 0
      %1419 = vmatpush.bf16.msra.mxu0 0
      %1420 = vmatpush.bf16.msra.mxu0 0
      %1421 = vmatpush.bf16.msra.mxu0 0
      %1422 = vmatpush.bf16.msra.mxu0 %v1413
      %1423 = vmatmul.bf16.gmra.mxu0 %v1120
      %v1424 = vpop.f32.mrf.mxu0
      %v1425 = vadd.f32 %v1406, %v1424
      %v1426 = vpop.f32.mrf.mxu0
      %v1427 = vadd.f32 %v1405, %v1426
      %1428 = vmatmul.bf16.gmra.mxu0 %v1123
      %v1429 = vpop.f32.mrf.mxu0
      %v1430 = vpop.f32.mrf.mxu0
      %v1431 = vadd.f32 %v1404, %v1430
      %1432 = vmatmul.bf16.gmra.mxu0 %v1126
      %v1433 = vpop.f32.mrf.mxu0
      %v1434 = vadd.f32 %v1403, %v1433
      %v1435 = vpop.f32.mrf.mxu0
      %1436 = vmatmul.bf16.gmra.mxu0 %v1129
      %v1437 = vpop.f32.mrf.mxu0
      %v1438 = vadd.f32 %v1402, %v1437
      %v1439 = vpop.f32.mrf.mxu0
      %v1440 = vadd.f32 %v1401, %v1439
      %1441 = vmatmul.bf16.gmra.mxu0 %v1132
      %v1442 = vpop.f32.mrf.mxu0
      %v1443 = vpop.f32.mrf.mxu0
      %v1444 = vadd.f32 %v1400, %v1443
      %1445 = vmatmul.bf16.gmra.mxu0 %v1135
      %v1446 = vpop.f32.mrf.mxu0
      %v1447 = vadd.f32 %v1399, %v1446
      %v1448 = vpop.f32.mrf.mxu0
      %1449 = vmatmul.bf16.gmra.mxu0 %v1138
      %v1450 = vpop.f32.mrf.mxu0
      %v1451 = vadd.f32 %v1398, %v1450
      %v1452 = vpop.f32.mrf.mxu0
      %v1453 = vadd.f32 %v1397, %v1452
      %1454 = vmatmul.bf16.gmra.mxu0 %v1141
      %v1455 = vpop.f32.mrf.mxu0
      %v1456 = vpop.f32.mrf.mxu0
      %v1457 = vadd.f32 %v1396, %v1456
      %1458 = vmatmul.bf16.gmra.mxu0 %v1144
      %v1459 = vpop.f32.mrf.mxu0
      %v1460 = vadd.f32 %v1395, %v1459
      %v1461 = vpop.f32.mrf.mxu0
      %1462 = vmatmul.bf16.gmra.mxu0 %v1147
      %v1463 = vpop.f32.mrf.mxu0
      %v1464 = vadd.f32 %v1394, %v1463
      %v1465 = vpop.f32.mrf.mxu0
      %v1466 = vadd.f32 %v1393, %v1465
      %1467 = vmatmul.bf16.gmra.mxu0 %v1150
      %v1468 = vpop.f32.mrf.mxu0
      %v1469 = vpop.f32.mrf.mxu0
      %v1470 = vadd.f32 %v1392, %v1469
      %1471 = vmatmul.bf16.gmra.mxu0 %v1153
      %v1472 = vpop.f32.mrf.mxu0
      %v1473 = vadd.f32 %v1391, %v1472
      %v1474 = vpop.f32.mrf.mxu0
      %1475 = vmatmul.bf16.gmra.mxu0 %v1156
      %v1476 = vpop.f32.mrf.mxu0
      %v1477 = vadd.f32 %v1390, %v1476
      %v1478 = vpop.f32.mrf.mxu0
      %v1479 = vadd.f32 %v1389, %v1478
      %1480 = vmatmul.bf16.gmra.mxu0 %v1159
      %v1481 = vpop.f32.mrf.mxu0
      %v1482 = vpop.f32.mrf.mxu0
      %v1483 = vadd.f32 %v1388, %v1482
      %1484 = vmatmul.bf16.gmra.mxu0 %v1162
      %v1485 = vpop.f32.mrf.mxu0
      %v1486 = vadd.f32 %v1387, %v1485
      %v1487 = vpop.f32.mrf.mxu0
      %1488 = vmatmul.bf16.gmra.mxu0 %v1165
      %v1489 = vpop.f32.mrf.mxu0
      %v1490 = vadd.f32 %v1386, %v1489
      %v1491 = vpop.f32.mrf.mxu0
      %v1492 = vadd.f32 %v1385, %v1491
      %1493 = vmatmul.bf16.gmra.mxu0 %v1168
      %v1494 = vpop.f32.mrf.mxu0
      %v1495 = vpop.f32.mrf.mxu0
      %v1496 = vadd.f32 %v1384, %v1495
      %1497 = vmatmul.bf16.gmra.mxu0 %v1171
      %v1498 = vpop.f32.mrf.mxu0
      %v1499 = vadd.f32 %v1383, %v1498
      %v1500 = vpop.f32.mrf.mxu0
      %1501 = vmatmul.bf16.gmra.mxu0 %v1174
      %v1502 = vpop.f32.mrf.mxu0
      %v1503 = vadd.f32 %v1382, %v1502
      %v1504 = vpop.f32.mrf.mxu0
      %v1505 = vadd.f32 %v1381, %v1504
      %1506 = vmatmul.bf16.gmra.mxu0 %v1177
      %v1507 = vpop.f32.mrf.mxu0
      %v1508 = vpop.f32.mrf.mxu0
      %v1509 = vadd.f32 %v1380, %v1508
      %1510 = vmatmul.bf16.gmra.mxu0 %v1180
      %v1511 = vpop.f32.mrf.mxu0
      %v1512 = vadd.f32 %v1379, %v1511
      %v1513 = vpop.f32.mrf.mxu0
      %1514 = vmatmul.bf16.gmra.mxu0 %v1183
      %v1515 = vpop.f32.mrf.mxu0
      %v1516 = vadd.f32 %v1378, %v1515
      %v1517 = vpop.f32.mrf.mxu0
      %v1518 = vadd.f32 %v1377, %v1517
      %1519 = vmatmul.bf16.gmra.mxu0 %v1186
      %v1520 = vpop.f32.mrf.mxu0
      %v1521 = vpop.f32.mrf.mxu0
      %v1522 = vadd.f32 %v1376, %v1521
      %1523 = vmatmul.bf16.gmra.mxu0 %v1189
      %v1524 = vpop.f32.mrf.mxu0
      %v1525 = vadd.f32 %v1375, %v1524
      %v1526 = vpop.f32.mrf.mxu0
      %1527 = vdwg.mxu0
      %s1528 = scalar_lea.vmem %s1, 16
      %v1529 = vld [vmem:[%s1528] sm:$0xf]
      %v1530 = vld [vmem:[%s1528 + $0x4] sm:$0x3]
      %v1533 = vunpack.c.l.b16 %v1529
      %v1534 = vunpack.c.l.b16 %v1530
      %v1535 = vpack.c.b16 %v1534, %v1533
      %v1537 = vsel %vm1191, %v1535, 0
      %1539 = vmatpush.bf16.msra.mxu0 0
      %1540 = vmatpush.bf16.msra.mxu0 0
      %1541 = vmatpush.bf16.msra.mxu0 0
      %1542 = vmatpush.bf16.msra.mxu0 0
      %1543 = vmatpush.bf16.msra.mxu0 0
      %1544 = vmatpush.bf16.msra.mxu0 0
      %1545 = vmatpush.bf16.msra.mxu0 0
      %1546 = vmatpush.bf16.msra.mxu0 %v1537
      %1547 = vmatmul.bf16.gmra.mxu0 %v1120
      %v1548 = vpop.f32.mrf.mxu0
      %v1549 = vadd.f32 0.0, %v1548
      %v1550 = vpop.f32.mrf.mxu0
      %v1551 = vadd.f32 0.0, %v1550
      %1552 = vmatmul.bf16.gmra.mxu0 %v1123
      %v1553 = vpop.f32.mrf.mxu0
      %v1554 = vadd.f32 0.0, %v1553
      %v1555 = vpop.f32.mrf.mxu0
      %v1556 = vadd.f32 0.0, %v1555
      %1557 = vmatmul.bf16.gmra.mxu0 %v1126
      %v1558 = vpop.f32.mrf.mxu0
      %v1559 = vadd.f32 0.0, %v1558
      %v1560 = vpop.f32.mrf.mxu0
      %v1561 = vadd.f32 0.0, %v1560
      %1562 = vmatmul.bf16.gmra.mxu0 %v1129
      %v1563 = vpop.f32.mrf.mxu0
      %v1564 = vadd.f32 0.0, %v1563
      %v1565 = vpop.f32.mrf.mxu0
      %v1566 = vadd.f32 0.0, %v1565
      %1567 = vmatmul.bf16.gmra.mxu0 %v1132
      %v1568 = vpop.f32.mrf.mxu0
      %v1569 = vadd.f32 0.0, %v1568
      %v1570 = vpop.f32.mrf.mxu0
      %v1571 = vadd.f32 0.0, %v1570
      %1572 = vmatmul.bf16.gmra.mxu0 %v1135
      %v1573 = vpop.f32.mrf.mxu0
      %v1574 = vadd.f32 0.0, %v1573
      %v1575 = vpop.f32.mrf.mxu0
      %v1576 = vadd.f32 0.0, %v1575
      %1577 = vmatmul.bf16.gmra.mxu0 %v1138
      %v1578 = vpop.f32.mrf.mxu0
      %v1579 = vadd.f32 0.0, %v1578
      %v1580 = vpop.f32.mrf.mxu0
      %v1581 = vadd.f32 0.0, %v1580
      %1582 = vmatmul.bf16.gmra.mxu0 %v1141
      %v1583 = vpop.f32.mrf.mxu0
      %v1584 = vadd.f32 0.0, %v1583
      %v1585 = vpop.f32.mrf.mxu0
      %v1586 = vadd.f32 0.0, %v1585
      %1587 = vmatmul.bf16.gmra.mxu0 %v1144
      %v1588 = vpop.f32.mrf.mxu0
      %v1589 = vadd.f32 0.0, %v1588
      %v1590 = vpop.f32.mrf.mxu0
      %v1591 = vadd.f32 0.0, %v1590
      %1592 = vmatmul.bf16.gmra.mxu0 %v1147
      %v1593 = vpop.f32.mrf.mxu0
      %v1594 = vadd.f32 0.0, %v1593
      %v1595 = vpop.f32.mrf.mxu0
      %v1596 = vadd.f32 0.0, %v1595
      %1597 = vmatmul.bf16.gmra.mxu0 %v1150
      %v1598 = vpop.f32.mrf.mxu0
      %v1599 = vadd.f32 0.0, %v1598
      %v1600 = vpop.f32.mrf.mxu0
      %v1601 = vadd.f32 0.0, %v1600
      %1602 = vmatmul.bf16.gmra.mxu0 %v1153
      %v1603 = vpop.f32.mrf.mxu0
      %v1604 = vadd.f32 0.0, %v1603
      %v1605 = vpop.f32.mrf.mxu0
      %v1606 = vadd.f32 0.0, %v1605
      %1607 = vmatmul.bf16.gmra.mxu0 %v1156
      %v1608 = vpop.f32.mrf.mxu0
      %v1609 = vadd.f32 0.0, %v1608
      %v1610 = vpop.f32.mrf.mxu0
      %v1611 = vadd.f32 0.0, %v1610
      %1612 = vmatmul.bf16.gmra.mxu0 %v1159
      %v1613 = vpop.f32.mrf.mxu0
      %v1614 = vadd.f32 0.0, %v1613
      %v1615 = vpop.f32.mrf.mxu0
      %v1616 = vadd.f32 0.0, %v1615
      %1617 = vmatmul.bf16.gmra.mxu0 %v1162
      %v1618 = vpop.f32.mrf.mxu0
      %v1619 = vadd.f32 0.0, %v1618
      %v1620 = vpop.f32.mrf.mxu0
      %v1621 = vadd.f32 0.0, %v1620
      %1622 = vmatmul.bf16.gmra.mxu0 %v1165
      %v1623 = vpop.f32.mrf.mxu0
      %v1624 = vadd.f32 0.0, %v1623
      %v1625 = vpop.f32.mrf.mxu0
      %v1626 = vadd.f32 0.0, %v1625
      %1627 = vmatmul.bf16.gmra.mxu0 %v1168
      %v1628 = vpop.f32.mrf.mxu0
      %v1629 = vadd.f32 0.0, %v1628
      %v1630 = vpop.f32.mrf.mxu0
      %v1631 = vadd.f32 0.0, %v1630
      %1632 = vmatmul.bf16.gmra.mxu0 %v1171
      %v1633 = vpop.f32.mrf.mxu0
      %v1634 = vadd.f32 0.0, %v1633
      %v1635 = vpop.f32.mrf.mxu0
      %v1636 = vadd.f32 0.0, %v1635
      %1637 = vmatmul.bf16.gmra.mxu0 %v1174
      %v1638 = vpop.f32.mrf.mxu0
      %v1639 = vadd.f32 0.0, %v1638
      %v1640 = vpop.f32.mrf.mxu0
      %v1641 = vadd.f32 0.0, %v1640
      %1642 = vmatmul.bf16.gmra.mxu0 %v1177
      %v1643 = vpop.f32.mrf.mxu0
      %v1644 = vadd.f32 0.0, %v1643
      %v1645 = vpop.f32.mrf.mxu0
      %v1646 = vadd.f32 0.0, %v1645
      %1647 = vmatmul.bf16.gmra.mxu0 %v1180
      %v1648 = vpop.f32.mrf.mxu0
      %v1649 = vadd.f32 0.0, %v1648
      %v1650 = vpop.f32.mrf.mxu0
      %v1651 = vadd.f32 0.0, %v1650
      %1652 = vmatmul.bf16.gmra.mxu0 %v1183
      %v1653 = vpop.f32.mrf.mxu0
      %v1654 = vadd.f32 0.0, %v1653
      %v1655 = vpop.f32.mrf.mxu0
      %v1656 = vadd.f32 0.0, %v1655
      %1657 = vmatmul.bf16.gmra.mxu0 %v1186
      %v1658 = vpop.f32.mrf.mxu0
      %v1659 = vadd.f32 0.0, %v1658
      %v1660 = vpop.f32.mrf.mxu0
      %v1661 = vadd.f32 0.0, %v1660
      %1662 = vmatmul.bf16.gmra.mxu0 %v1189
      %v1663 = vpop.f32.mrf.mxu0
      %v1664 = vadd.f32 0.0, %v1663
      %v1665 = vpop.f32.mrf.mxu0
      %v1666 = vadd.f32 0.0, %v1665
      %1667 = vdwg.mxu0
      %v1668 = vrot.slane %v1549, 2
      %v1669 = vrot.slane %v1551, 2
      %v1670 = vrot.slane %v1554, 2
      %v1671 = vrot.slane %v1556, 2
      %v1672 = vrot.slane %v1559, 2
      %v1673 = vrot.slane %v1561, 2
      %v1674 = vrot.slane %v1564, 2
      %v1675 = vrot.slane %v1566, 2
      %v1676 = vrot.slane %v1569, 2
      %v1677 = vrot.slane %v1571, 2
      %v1678 = vrot.slane %v1574, 2
      %v1679 = vrot.slane %v1576, 2
      %v1680 = vrot.slane %v1579, 2
      %v1681 = vrot.slane %v1581, 2
      %v1682 = vrot.slane %v1584, 2
      %v1683 = vrot.slane %v1586, 2
      %v1684 = vrot.slane %v1589, 2
      %v1685 = vrot.slane %v1591, 2
      %v1686 = vrot.slane %v1594, 2
      %v1687 = vrot.slane %v1596, 2
      %v1688 = vrot.slane %v1599, 2
      %v1689 = vrot.slane %v1601, 2
      %v1690 = vrot.slane %v1604, 2
      %v1691 = vrot.slane %v1606, 2
      %v1692 = vrot.slane %v1609, 2
      %v1693 = vrot.slane %v1611, 2
      %v1694 = vrot.slane %v1614, 2
      %v1695 = vrot.slane %v1616, 2
      %v1696 = vrot.slane %v1619, 2
      %v1697 = vrot.slane %v1621, 2
      %v1698 = vrot.slane %v1624, 2
      %v1699 = vrot.slane %v1626, 2
      %v1700 = vrot.slane %v1629, 2
      %v1701 = vrot.slane %v1631, 2
      %v1702 = vrot.slane %v1634, 2
      %v1703 = vrot.slane %v1636, 2
      %v1704 = vrot.slane %v1639, 2
      %v1705 = vrot.slane %v1641, 2
      %v1706 = vrot.slane %v1644, 2
      %v1707 = vrot.slane %v1646, 2
      %v1708 = vrot.slane %v1649, 2
      %v1709 = vrot.slane %v1651, 2
      %v1710 = vrot.slane %v1654, 2
      %v1711 = vrot.slane %v1656, 2
      %v1712 = vrot.slane %v1659, 2
      %v1713 = vrot.slane %v1661, 2
      %v1714 = vrot.slane %v1664, 2
      %v1715 = vrot.slane %v1666, 2
      %vm1716 = vcmp.lt.s32.totalorder %v1373, 6
      %v1717 = vsel %vm1716, %v1714, %v1715
      %v1718 = vsel %vm1716, %v1713, %v1714
      %v1719 = vsel %vm1716, %v1711, %v1712
      %v1720 = vsel %vm1716, %v1710, %v1711
      %v1721 = vsel %vm1716, %v1708, %v1709
      %v1722 = vsel %vm1716, %v1707, %v1708
      %v1723 = vsel %vm1716, %v1705, %v1706
      %v1724 = vsel %vm1716, %v1704, %v1705
      %v1725 = vsel %vm1716, %v1702, %v1703
      %v1726 = vsel %vm1716, %v1701, %v1702
      %v1727 = vsel %vm1716, %v1699, %v1700
      %v1728 = vsel %vm1716, %v1698, %v1699
      %v1729 = vsel %vm1716, %v1696, %v1697
      %v1730 = vsel %vm1716, %v1695, %v1696
      %v1731 = vsel %vm1716, %v1693, %v1694
      %v1732 = vsel %vm1716, %v1692, %v1693
      %v1733 = vsel %vm1716, %v1690, %v1691
      %v1734 = vsel %vm1716, %v1689, %v1690
      %v1735 = vsel %vm1716, %v1687, %v1688
      %v1736 = vsel %vm1716, %v1686, %v1687
      %v1737 = vsel %vm1716, %v1684, %v1685
      %v1738 = vsel %vm1716, %v1683, %v1684
      %v1739 = vsel %vm1716, %v1681, %v1682
      %v1740 = vsel %vm1716, %v1680, %v1681
      %v1741 = vsel %vm1716, %v1678, %v1679
      %v1742 = vsel %vm1716, %v1677, %v1678
      %v1743 = vsel %vm1716, %v1675, %v1676
      %v1744 = vsel %vm1716, %v1674, %v1675
      %v1745 = vsel %vm1716, %v1672, %v1673
      %v1746 = vsel %vm1716, %v1671, %v1672
      %v1747 = vsel %vm1716, %v1669, %v1670
      %v1748 = vsel %vm1716, %v1668, %v1669
      %v1749 = vadd.f32 %v1425, %v1748
      %v1750 = vadd.f32 %v1427, %v1747
      %v1751 = vadd.f32 %v1431, %v1746
      %v1752 = vadd.f32 %v1434, %v1745
      %v1753 = vadd.f32 %v1438, %v1744
      %v1754 = vadd.f32 %v1440, %v1743
      %v1755 = vadd.f32 %v1444, %v1742
      %v1756 = vadd.f32 %v1447, %v1741
      %v1757 = vadd.f32 %v1451, %v1740
      %v1758 = vadd.f32 %v1453, %v1739
      %v1759 = vadd.f32 %v1457, %v1738
      %v1760 = vadd.f32 %v1460, %v1737
      %v1761 = vadd.f32 %v1464, %v1736
      %v1762 = vadd.f32 %v1466, %v1735
      %v1763 = vadd.f32 %v1470, %v1734
      %v1764 = vadd.f32 %v1473, %v1733
      %v1765 = vadd.f32 %v1477, %v1732
      %v1766 = vadd.f32 %v1479, %v1731
      %v1767 = vadd.f32 %v1483, %v1730
      %v1768 = vadd.f32 %v1486, %v1729
      %v1769 = vadd.f32 %v1490, %v1728
      %v1770 = vadd.f32 %v1492, %v1727
      %v1771 = vadd.f32 %v1496, %v1726
      %v1772 = vadd.f32 %v1499, %v1725
      %v1773 = vadd.f32 %v1503, %v1724
      %v1774 = vadd.f32 %v1505, %v1723
      %v1775 = vadd.f32 %v1509, %v1722
      %v1776 = vadd.f32 %v1512, %v1721
      %v1777 = vadd.f32 %v1516, %v1720
      %v1778 = vadd.f32 %v1518, %v1719
      %v1779 = vadd.f32 %v1522, %v1718
      %v1780 = vadd.f32 %v1525, %v1717
      %v1781 = vsel %vm861, %v1749, 0.0
      %v1782 = vsel %vm861, %v1751, 0.0
      %v1783 = vadd.f32 %v1781, %v1782
      %v1784 = vsel %vm861, %v1753, 0.0
      %v1785 = vadd.f32 %v1783, %v1784
      %v1786 = vsel %vm861, %v1755, 0.0
      %v1787 = vadd.f32 %v1785, %v1786
      %v1788 = vsel %vm861, %v1757, 0.0
      %v1789 = vadd.f32 %v1787, %v1788
      %v1790 = vsel %vm861, %v1759, 0.0
      %v1791 = vadd.f32 %v1789, %v1790
      %v1792 = vsel %vm861, %v1761, 0.0
      %v1793 = vadd.f32 %v1791, %v1792
      %v1794 = vsel %vm861, %v1763, 0.0
      %v1795 = vadd.f32 %v1793, %v1794
      %v1796 = vsel %vm861, %v1765, 0.0
      %v1797 = vadd.f32 %v1795, %v1796
      %v1798 = vsel %vm861, %v1767, 0.0
      %v1799 = vadd.f32 %v1797, %v1798
      %v1800 = vsel %vm861, %v1769, 0.0
      %v1801 = vadd.f32 %v1799, %v1800
      %v1802 = vsel %vm861, %v1771, 0.0
      %v1803 = vadd.f32 %v1801, %v1802
      %v1804 = vsel %vm861, %v1773, 0.0
      %v1805 = vadd.f32 %v1803, %v1804
      %v1806 = vsel %vm861, %v1775, 0.0
      %v1807 = vadd.f32 %v1805, %v1806
      %v1808 = vsel %vm861, %v1777, 0.0
      %v1809 = vadd.f32 %v1807, %v1808
      %v1810 = vsel %vm861, %v1779, 0.0
      %v1811 = vadd.f32 %v1809, %v1810
      %v1812 = vsel %vm861, %v1750, 0.0
      %v1813 = vsel %vm861, %v1752, 0.0
      %v1814 = vadd.f32 %v1812, %v1813
      %v1815 = vsel %vm861, %v1754, 0.0
      %v1816 = vadd.f32 %v1814, %v1815
      %v1817 = vsel %vm861, %v1756, 0.0
      %v1818 = vadd.f32 %v1816, %v1817
      %v1819 = vsel %vm861, %v1758, 0.0
      %v1820 = vadd.f32 %v1818, %v1819
      %v1821 = vsel %vm861, %v1760, 0.0
      %v1822 = vadd.f32 %v1820, %v1821
      %v1823 = vsel %vm861, %v1762, 0.0
      %v1824 = vadd.f32 %v1822, %v1823
      %v1825 = vsel %vm861, %v1764, 0.0
      %v1826 = vadd.f32 %v1824, %v1825
      %v1827 = vsel %vm861, %v1766, 0.0
      %v1828 = vadd.f32 %v1826, %v1827
      %v1829 = vsel %vm861, %v1768, 0.0
      %v1830 = vadd.f32 %v1828, %v1829
      %v1831 = vsel %vm861, %v1770, 0.0
      %v1832 = vadd.f32 %v1830, %v1831
      %v1833 = vsel %vm861, %v1772, 0.0
      %v1834 = vadd.f32 %v1832, %v1833
      %v1835 = vsel %vm861, %v1774, 0.0
      %v1836 = vadd.f32 %v1834, %v1835
      %v1837 = vsel %vm861, %v1776, 0.0
      %v1838 = vadd.f32 %v1836, %v1837
      %v1839 = vsel %vm861, %v1778, 0.0
      %v1840 = vadd.f32 %v1838, %v1839
      %v1841 = vsel %vm861, %v1780, 0.0
      %v1842 = vadd.f32 %v1840, %v1841
      %v1843 = vsel %vm861, %v1811, 0.0
      %v1844 = vsel %vm861, %v1842, 0.0
      %v1845 = vadd.f32 %v1843, %v1844
      %v1846 = vrot.slane %v1845, 4
      %v1847 = vadd.f32 %v1845, %v1846
      %v1848 = vrot.slane %v1847, 2
      %v1849 = vadd.f32 %v1847, %v1848
      %v1850 = vrot.slane %v1849, 1
      %v1851 = vadd.f32 %v1849, %v1850
      %v1852 = vmul.f32 %v1851, 0.00390625
      %v1853 = vmul.f32 %v1749, %v1749
      %v1854 = vmul.f32 %v1750, %v1750
      %v1855 = vmul.f32 %v1751, %v1751
      %v1856 = vmul.f32 %v1752, %v1752
      %v1857 = vmul.f32 %v1753, %v1753
      %v1858 = vmul.f32 %v1754, %v1754
      %v1859 = vmul.f32 %v1755, %v1755
      %v1860 = vmul.f32 %v1756, %v1756
      %v1861 = vmul.f32 %v1757, %v1757
      %v1862 = vmul.f32 %v1758, %v1758
      %v1863 = vmul.f32 %v1759, %v1759
      %v1864 = vmul.f32 %v1760, %v1760
      %v1865 = vmul.f32 %v1761, %v1761
      %v1866 = vmul.f32 %v1762, %v1762
      %v1867 = vmul.f32 %v1763, %v1763
      %v1868 = vmul.f32 %v1764, %v1764
      %v1869 = vmul.f32 %v1765, %v1765
      %v1870 = vmul.f32 %v1766, %v1766
      %v1871 = vmul.f32 %v1767, %v1767
      %v1872 = vmul.f32 %v1768, %v1768
      %v1873 = vmul.f32 %v1769, %v1769
      %v1874 = vmul.f32 %v1770, %v1770
      %v1875 = vmul.f32 %v1771, %v1771
      %v1876 = vmul.f32 %v1772, %v1772
      %v1877 = vmul.f32 %v1773, %v1773
      %v1878 = vmul.f32 %v1774, %v1774
      %v1879 = vmul.f32 %v1775, %v1775
      %v1880 = vmul.f32 %v1776, %v1776
      %v1881 = vmul.f32 %v1777, %v1777
      %v1882 = vmul.f32 %v1778, %v1778
      %v1883 = vmul.f32 %v1779, %v1779
      %v1884 = vmul.f32 %v1780, %v1780
      %v1885 = vsel %vm861, %v1853, 0.0
      %v1886 = vsel %vm861, %v1855, 0.0
      %v1887 = vadd.f32 %v1885, %v1886
      %v1888 = vsel %vm861, %v1857, 0.0
      %v1889 = vadd.f32 %v1887, %v1888
      %v1890 = vsel %vm861, %v1859, 0.0
      %v1891 = vadd.f32 %v1889, %v1890
      %v1892 = vsel %vm861, %v1861, 0.0
      %v1893 = vadd.f32 %v1891, %v1892
      %v1894 = vsel %vm861, %v1863, 0.0
      %v1895 = vadd.f32 %v1893, %v1894
      %v1896 = vsel %vm861, %v1865, 0.0
      %v1897 = vadd.f32 %v1895, %v1896
      %v1898 = vsel %vm861, %v1867, 0.0
      %v1899 = vadd.f32 %v1897, %v1898
      %v1900 = vsel %vm861, %v1869, 0.0
      %v1901 = vadd.f32 %v1899, %v1900
      %v1902 = vsel %vm861, %v1871, 0.0
      %v1903 = vadd.f32 %v1901, %v1902
      %v1904 = vsel %vm861, %v1873, 0.0
      %v1905 = vadd.f32 %v1903, %v1904
      %v1906 = vsel %vm861, %v1875, 0.0
      %v1907 = vadd.f32 %v1905, %v1906
      %v1908 = vsel %vm861, %v1877, 0.0
      %v1909 = vadd.f32 %v1907, %v1908
      %v1910 = vsel %vm861, %v1879, 0.0
      %v1911 = vadd.f32 %v1909, %v1910
      %v1912 = vsel %vm861, %v1881, 0.0
      %v1913 = vadd.f32 %v1911, %v1912
      %v1914 = vsel %vm861, %v1883, 0.0
      %v1915 = vadd.f32 %v1913, %v1914
      %v1916 = vsel %vm861, %v1854, 0.0
      %v1917 = vsel %vm861, %v1856, 0.0
      %v1918 = vadd.f32 %v1916, %v1917
      %v1919 = vsel %vm861, %v1858, 0.0
      %v1920 = vadd.f32 %v1918, %v1919
      %v1921 = vsel %vm861, %v1860, 0.0
      %v1922 = vadd.f32 %v1920, %v1921
      %v1923 = vsel %vm861, %v1862, 0.0
      %v1924 = vadd.f32 %v1922, %v1923
      %v1925 = vsel %vm861, %v1864, 0.0
      %v1926 = vadd.f32 %v1924, %v1925
      %v1927 = vsel %vm861, %v1866, 0.0
      %v1928 = vadd.f32 %v1926, %v1927
      %v1929 = vsel %vm861, %v1868, 0.0
      %v1930 = vadd.f32 %v1928, %v1929
      %v1931 = vsel %vm861, %v1870, 0.0
      %v1932 = vadd.f32 %v1930, %v1931
      %v1933 = vsel %vm861, %v1872, 0.0
      %v1934 = vadd.f32 %v1932, %v1933
      %v1935 = vsel %vm861, %v1874, 0.0
      %v1936 = vadd.f32 %v1934, %v1935
      %v1937 = vsel %vm861, %v1876, 0.0
      %v1938 = vadd.f32 %v1936, %v1937
      %v1939 = vsel %vm861, %v1878, 0.0
      %v1940 = vadd.f32 %v1938, %v1939
      %v1941 = vsel %vm861, %v1880, 0.0
      %v1942 = vadd.f32 %v1940, %v1941
      %v1943 = vsel %vm861, %v1882, 0.0
      %v1944 = vadd.f32 %v1942, %v1943
      %v1945 = vsel %vm861, %v1884, 0.0
      %v1946 = vadd.f32 %v1944, %v1945
      %v1947 = vsel %vm861, %v1915, 0.0
      %v1948 = vsel %vm861, %v1946, 0.0
      %v1949 = vadd.f32 %v1947, %v1948
      %v1950 = vrot.slane %v1949, 4
      %v1951 = vadd.f32 %v1949, %v1950
      %v1952 = vrot.slane %v1951, 2
      %v1953 = vadd.f32 %v1951, %v1952
      %v1954 = vrot.slane %v1953, 1
      %v1955 = vadd.f32 %v1953, %v1954
      %v1956 = vmul.f32 %v1955, 0.00390625
      %v1957 = vmul.f32 %v1852, %v1852
      %v1958 = vsub.f32 %v1956, %v1957
      %v1959 = vmax.f32 %v1958, 0.0
      %v1960 = vsub.f32 %v1749, %v1852
      %v1961 = vsub.f32 %v1750, %v1852
      %v1962 = vsub.f32 %v1751, %v1852
      %v1963 = vsub.f32 %v1752, %v1852
      %v1964 = vsub.f32 %v1753, %v1852
      %v1965 = vsub.f32 %v1754, %v1852
      %v1966 = vsub.f32 %v1755, %v1852
      %v1967 = vsub.f32 %v1756, %v1852
      %v1968 = vsub.f32 %v1757, %v1852
      %v1969 = vsub.f32 %v1758, %v1852
      %v1970 = vsub.f32 %v1759, %v1852
      %v1971 = vsub.f32 %v1760, %v1852
      %v1972 = vsub.f32 %v1761, %v1852
      %v1973 = vsub.f32 %v1762, %v1852
      %v1974 = vsub.f32 %v1763, %v1852
      %v1975 = vsub.f32 %v1764, %v1852
      %v1976 = vsub.f32 %v1765, %v1852
      %v1977 = vsub.f32 %v1766, %v1852
      %v1978 = vsub.f32 %v1767, %v1852
      %v1979 = vsub.f32 %v1768, %v1852
      %v1980 = vsub.f32 %v1769, %v1852
      %v1981 = vsub.f32 %v1770, %v1852
      %v1982 = vsub.f32 %v1771, %v1852
      %v1983 = vsub.f32 %v1772, %v1852
      %v1984 = vsub.f32 %v1773, %v1852
      %v1985 = vsub.f32 %v1774, %v1852
      %v1986 = vsub.f32 %v1775, %v1852
      %v1987 = vsub.f32 %v1776, %v1852
      %v1988 = vsub.f32 %v1777, %v1852
      %v1989 = vsub.f32 %v1778, %v1852
      %v1990 = vsub.f32 %v1779, %v1852
      %v1991 = vsub.f32 %v1780, %v1852
      %v1992 = vadd.f32 %v1959, 1e-05
      %v1993 = vrsqrt.pop %v1992
      %v1994 = vmul.f32 %v1993, %v1992
      %v1995 = vmul.f32 %v1994, %v1993
      %v1996 = vmul.f32 0.5, %v1995
      %v1997 = vsub.f32 1.5, %v1996
      %v1998 = vmul.f32 %v1993, %v1997
      %vm1999 = vweird.f32 %v1992
      %vm2000 = vweird.f32 %v1993
      %vm2001 = vmor %vm1999, %vm2000
      %v2002 = vsel %vm2001, %v1993, %v1998
      %v2003 = vmul.f32 %v1960, %v2002
      %v2004 = vmul.f32 %v1961, %v2002
      %v2005 = vmul.f32 %v1962, %v2002
      %v2006 = vmul.f32 %v1963, %v2002
      %v2007 = vmul.f32 %v1964, %v2002
      %v2008 = vmul.f32 %v1965, %v2002
      %v2009 = vmul.f32 %v1966, %v2002
      %v2010 = vmul.f32 %v1967, %v2002
      %v2011 = vmul.f32 %v1968, %v2002
      %v2012 = vmul.f32 %v1969, %v2002
      %v2013 = vmul.f32 %v1970, %v2002
      %v2014 = vmul.f32 %v1971, %v2002
      %v2015 = vmul.f32 %v1972, %v2002
      %v2016 = vmul.f32 %v1973, %v2002
      %v2017 = vmul.f32 %v1974, %v2002
      %v2018 = vmul.f32 %v1975, %v2002
      %v2019 = vmul.f32 %v1976, %v2002
      %v2020 = vmul.f32 %v1977, %v2002
      %v2021 = vmul.f32 %v1978, %v2002
      %v2022 = vmul.f32 %v1979, %v2002
      %v2023 = vmul.f32 %v1980, %v2002
      %v2024 = vmul.f32 %v1981, %v2002
      %v2025 = vmul.f32 %v1982, %v2002
      %v2026 = vmul.f32 %v1983, %v2002
      %v2027 = vmul.f32 %v1984, %v2002
      %v2028 = vmul.f32 %v1985, %v2002
      %v2029 = vmul.f32 %v1986, %v2002
      %v2030 = vmul.f32 %v1987, %v2002
      %v2031 = vmul.f32 %v1988, %v2002
      %v2032 = vmul.f32 %v1989, %v2002
      %v2033 = vmul.f32 %v1990, %v2002
      %v2034 = vmul.f32 %v1991, %v2002
      %v2035 = vmax.f32 %v2003, 0.0
      %v2036 = vmax.f32 %v2004, 0.0
      %v2037 = vmax.f32 %v2005, 0.0
      %v2038 = vmax.f32 %v2006, 0.0
      %v2039 = vmax.f32 %v2007, 0.0
      %v2040 = vmax.f32 %v2008, 0.0
      %v2041 = vmax.f32 %v2009, 0.0
      %v2042 = vmax.f32 %v2010, 0.0
      %v2043 = vmax.f32 %v2011, 0.0
      %v2044 = vmax.f32 %v2012, 0.0
      %v2045 = vmax.f32 %v2013, 0.0
      %v2046 = vmax.f32 %v2014, 0.0
      %v2047 = vmax.f32 %v2015, 0.0
      %v2048 = vmax.f32 %v2016, 0.0
      %v2049 = vmax.f32 %v2017, 0.0
      %v2050 = vmax.f32 %v2018, 0.0
      %v2051 = vmax.f32 %v2019, 0.0
      %v2052 = vmax.f32 %v2020, 0.0
      %v2053 = vmax.f32 %v2021, 0.0
      %v2054 = vmax.f32 %v2022, 0.0
      %v2055 = vmax.f32 %v2023, 0.0
      %v2056 = vmax.f32 %v2024, 0.0
      %v2057 = vmax.f32 %v2025, 0.0
      %v2058 = vmax.f32 %v2026, 0.0
      %v2059 = vmax.f32 %v2027, 0.0
      %v2060 = vmax.f32 %v2028, 0.0
      %v2061 = vmax.f32 %v2029, 0.0
      %v2062 = vmax.f32 %v2030, 0.0
      %v2063 = vmax.f32 %v2031, 0.0
      %v2064 = vmax.f32 %v2032, 0.0
      %v2065 = vmax.f32 %v2033, 0.0
      %v2066 = vmax.f32 %v2034, 0.0
      %v2067 = vpack.c.bf16 %v2035, %v2035
      %v2068 = vpack.c.bf16 %v2036, %v2036
      %v2069 = vpack.c.bf16 %v2037, %v2037
      %v2070 = vpack.c.bf16 %v2038, %v2038
      %v2071 = vpack.c.bf16 %v2039, %v2039
      %v2072 = vpack.c.bf16 %v2040, %v2040
      %v2073 = vpack.c.bf16 %v2041, %v2041
      %v2074 = vpack.c.bf16 %v2042, %v2042
      %v2075 = vpack.c.bf16 %v2043, %v2043
      %v2076 = vpack.c.bf16 %v2044, %v2044
      %v2077 = vpack.c.bf16 %v2045, %v2045
      %v2078 = vpack.c.bf16 %v2046, %v2046
      %v2079 = vpack.c.bf16 %v2047, %v2047
      %v2080 = vpack.c.bf16 %v2048, %v2048
      %v2081 = vpack.c.bf16 %v2049, %v2049
      %v2082 = vpack.c.bf16 %v2050, %v2050
      %v2083 = vpack.c.bf16 %v2051, %v2051
      %v2084 = vpack.c.bf16 %v2052, %v2052
      %v2085 = vpack.c.bf16 %v2053, %v2053
      %v2086 = vpack.c.bf16 %v2054, %v2054
      %v2087 = vpack.c.bf16 %v2055, %v2055
      %v2088 = vpack.c.bf16 %v2056, %v2056
      %v2089 = vpack.c.bf16 %v2057, %v2057
      %v2090 = vpack.c.bf16 %v2058, %v2058
      %v2091 = vpack.c.bf16 %v2059, %v2059
      %v2092 = vpack.c.bf16 %v2060, %v2060
      %v2093 = vpack.c.bf16 %v2061, %v2061
      %v2094 = vpack.c.bf16 %v2062, %v2062
      %v2095 = vpack.c.bf16 %v2063, %v2063
      %v2096 = vpack.c.bf16 %v2064, %v2064
      %v2097 = vpack.c.bf16 %v2065, %v2065
      %v2098 = vpack.c.bf16 %v2066, %v2066
      %v2115 = vunpack.c.l.b16 %v2067
      %v2116 = vunpack.c.l.b16 %v2069
      %v2117 = vunpack.c.l.b16 %v2071
      %v2118 = vunpack.c.l.b16 %v2073
      %v2119 = vunpack.c.l.b16 %v2075
      %v2120 = vunpack.c.l.b16 %v2077
      %v2121 = vunpack.c.l.b16 %v2079
      %v2122 = vunpack.c.l.b16 %v2081
      %v2123 = vunpack.c.l.b16 %v2083
      %v2124 = vunpack.c.l.b16 %v2085
      %v2125 = vunpack.c.l.b16 %v2087
      %v2126 = vunpack.c.l.b16 %v2089
      %v2127 = vunpack.c.l.b16 %v2091
      %v2128 = vunpack.c.l.b16 %v2093
      %v2129 = vunpack.c.l.b16 %v2095
      %v2130 = vunpack.c.l.b16 %v2097
      %v2131 = vpack.c.b16 %v2115, %v2115
      %v2132 = vpack.c.b16 %v2116, %v2116
      %v2133 = vpack.c.b16 %v2117, %v2117
      %v2134 = vpack.c.b16 %v2118, %v2118
      %v2135 = vpack.c.b16 %v2119, %v2119
      %v2136 = vpack.c.b16 %v2120, %v2120
      %v2137 = vpack.c.b16 %v2121, %v2121
      %v2138 = vpack.c.b16 %v2122, %v2122
      %v2139 = vpack.c.b16 %v2123, %v2123
      %v2140 = vpack.c.b16 %v2124, %v2124
      %v2141 = vpack.c.b16 %v2125, %v2125
      %v2142 = vpack.c.b16 %v2126, %v2126
      %v2143 = vpack.c.b16 %v2127, %v2127
      %v2144 = vpack.c.b16 %v2128, %v2128
      %v2145 = vpack.c.b16 %v2129, %v2129
      %v2146 = vpack.c.b16 %v2130, %v2130
      %v2148 = vshrl.u32 %v2131, 16
      %v2151 = vshrl.u32 %v2132, 16
      %v2154 = vshrl.u32 %v2133, 16
      %v2157 = vshrl.u32 %v2134, 16
      %v2160 = vshrl.u32 %v2135, 16
      %v2163 = vshrl.u32 %v2136, 16
      %v2166 = vshrl.u32 %v2137, 16
      %v2169 = vshrl.u32 %v2138, 16
      %v2172 = vshrl.u32 %v2139, 16
      %v2175 = vshrl.u32 %v2140, 16
      %v2178 = vshrl.u32 %v2141, 16
      %v2181 = vshrl.u32 %v2142, 16
      %v2184 = vshrl.u32 %v2143, 16
      %v2187 = vshrl.u32 %v2144, 16
      %v2190 = vshrl.u32 %v2145, 16
      %v2193 = vshrl.u32 %v2146, 16
      %v2227 = vunpack.c.l.b16 %v2068
      %v2228 = vunpack.c.l.b16 %v2070
      %v2229 = vunpack.c.l.b16 %v2072
      %v2230 = vunpack.c.l.b16 %v2074
      %v2231 = vunpack.c.l.b16 %v2076
      %v2232 = vunpack.c.l.b16 %v2078
      %v2233 = vunpack.c.l.b16 %v2080
      %v2234 = vunpack.c.l.b16 %v2082
      %v2235 = vunpack.c.l.b16 %v2084
      %v2236 = vunpack.c.l.b16 %v2086
      %v2237 = vunpack.c.l.b16 %v2088
      %v2238 = vunpack.c.l.b16 %v2090
      %v2239 = vunpack.c.l.b16 %v2092
      %v2240 = vunpack.c.l.b16 %v2094
      %v2241 = vunpack.c.l.b16 %v2096
      %v2242 = vunpack.c.l.b16 %v2098
      %v2243 = vpack.c.b16 %v2227, %v2115
      %v2244 = vpack.c.b16 %v2228, %v2116
      %v2245 = vpack.c.b16 %v2229, %v2117
      %v2246 = vpack.c.b16 %v2230, %v2118
      %v2247 = vpack.c.b16 %v2231, %v2119
      %v2248 = vpack.c.b16 %v2232, %v2120
      %v2249 = vpack.c.b16 %v2233, %v2121
      %v2250 = vpack.c.b16 %v2234, %v2122
      %v2251 = vpack.c.b16 %v2235, %v2123
      %v2252 = vpack.c.b16 %v2236, %v2124
      %v2253 = vpack.c.b16 %v2237, %v2125
      %v2254 = vpack.c.b16 %v2238, %v2126
      %v2255 = vpack.c.b16 %v2239, %v2127
      %v2256 = vpack.c.b16 %v2240, %v2128
      %v2257 = vpack.c.b16 %v2241, %v2129
      %v2258 = vpack.c.b16 %v2242, %v2130
      %v2260 = vshrl.u32 %v2243, 16
      %v2262 = vrot.slane %v2260, 7
      %v2263 = vshll.u32 %v2243, 16
      %v2265 = vor.u32 %v2262, %v2263
      %v2267 = vshrl.u32 %v2244, 16
      %v2269 = vrot.slane %v2267, 7
      %v2270 = vshll.u32 %v2244, 16
      %v2272 = vor.u32 %v2269, %v2270
      %v2274 = vshrl.u32 %v2245, 16
      %v2276 = vrot.slane %v2274, 7
      %v2277 = vshll.u32 %v2245, 16
      %v2279 = vor.u32 %v2276, %v2277
      %v2281 = vshrl.u32 %v2246, 16
      %v2283 = vrot.slane %v2281, 7
      %v2284 = vshll.u32 %v2246, 16
      %v2286 = vor.u32 %v2283, %v2284
      %v2288 = vshrl.u32 %v2247, 16
      %v2290 = vrot.slane %v2288, 7
      %v2291 = vshll.u32 %v2247, 16
      %v2293 = vor.u32 %v2290, %v2291
      %v2295 = vshrl.u32 %v2248, 16
      %v2297 = vrot.slane %v2295, 7
      %v2298 = vshll.u32 %v2248, 16
      %v2300 = vor.u32 %v2297, %v2298
      %v2302 = vshrl.u32 %v2249, 16
      %v2304 = vrot.slane %v2302, 7
      %v2305 = vshll.u32 %v2249, 16
      %v2307 = vor.u32 %v2304, %v2305
      %v2309 = vshrl.u32 %v2250, 16
      %v2311 = vrot.slane %v2309, 7
      %v2312 = vshll.u32 %v2250, 16
      %v2314 = vor.u32 %v2311, %v2312
      %v2316 = vshrl.u32 %v2251, 16
      %v2318 = vrot.slane %v2316, 7
      %v2319 = vshll.u32 %v2251, 16
      %v2321 = vor.u32 %v2318, %v2319
      %v2323 = vshrl.u32 %v2252, 16
      %v2325 = vrot.slane %v2323, 7
      %v2326 = vshll.u32 %v2252, 16
      %v2328 = vor.u32 %v2325, %v2326
      %v2330 = vshrl.u32 %v2253, 16
      %v2332 = vrot.slane %v2330, 7
      %v2333 = vshll.u32 %v2253, 16
      %v2335 = vor.u32 %v2332, %v2333
      %v2337 = vshrl.u32 %v2254, 16
      %v2339 = vrot.slane %v2337, 7
      %v2340 = vshll.u32 %v2254, 16
      %v2342 = vor.u32 %v2339, %v2340
      %v2344 = vshrl.u32 %v2255, 16
      %v2346 = vrot.slane %v2344, 7
      %v2347 = vshll.u32 %v2255, 16
      %v2349 = vor.u32 %v2346, %v2347
      %v2351 = vshrl.u32 %v2256, 16
      %v2353 = vrot.slane %v2351, 7
      %v2354 = vshll.u32 %v2256, 16
      %v2356 = vor.u32 %v2353, %v2354
      %v2358 = vshrl.u32 %v2257, 16
      %v2360 = vrot.slane %v2358, 7
      %v2361 = vshll.u32 %v2257, 16
      %v2363 = vor.u32 %v2360, %v2361
      %v2365 = vshrl.u32 %v2258, 16
      %v2367 = vrot.slane %v2365, 7
      %v2368 = vshll.u32 %v2258, 16
      %v2370 = vor.u32 %v2367, %v2368
      %v2403 = vpack.c.b16 %v2227, %v2227
      %v2404 = vpack.c.b16 %v2228, %v2228
      %v2405 = vpack.c.b16 %v2229, %v2229
      %v2406 = vpack.c.b16 %v2230, %v2230
      %v2407 = vpack.c.b16 %v2231, %v2231
      %v2408 = vpack.c.b16 %v2232, %v2232
      %v2409 = vpack.c.b16 %v2233, %v2233
      %v2410 = vpack.c.b16 %v2234, %v2234
      %v2411 = vpack.c.b16 %v2235, %v2235
      %v2412 = vpack.c.b16 %v2236, %v2236
      %v2413 = vpack.c.b16 %v2237, %v2237
      %v2414 = vpack.c.b16 %v2238, %v2238
      %v2415 = vpack.c.b16 %v2239, %v2239
      %v2416 = vpack.c.b16 %v2240, %v2240
      %v2417 = vpack.c.b16 %v2241, %v2241
      %v2418 = vpack.c.b16 %v2242, %v2242
      %v2420 = vshll.u32 %v2403, 16
      %v2422 = vrot.slane %v2420, 3
      %v2424 = vshll.u32 %v2404, 16
      %v2426 = vrot.slane %v2424, 3
      %v2428 = vshll.u32 %v2405, 16
      %v2430 = vrot.slane %v2428, 3
      %v2432 = vshll.u32 %v2406, 16
      %v2434 = vrot.slane %v2432, 3
      %v2436 = vshll.u32 %v2407, 16
      %v2438 = vrot.slane %v2436, 3
      %v2440 = vshll.u32 %v2408, 16
      %v2442 = vrot.slane %v2440, 3
      %v2444 = vshll.u32 %v2409, 16
      %v2446 = vrot.slane %v2444, 3
      %v2448 = vshll.u32 %v2410, 16
      %v2450 = vrot.slane %v2448, 3
      %v2452 = vshll.u32 %v2411, 16
      %v2454 = vrot.slane %v2452, 3
      %v2456 = vshll.u32 %v2412, 16
      %v2458 = vrot.slane %v2456, 3
      %v2460 = vshll.u32 %v2413, 16
      %v2462 = vrot.slane %v2460, 3
      %v2464 = vshll.u32 %v2414, 16
      %v2466 = vrot.slane %v2464, 3
      %v2468 = vshll.u32 %v2415, 16
      %v2470 = vrot.slane %v2468, 3
      %v2472 = vshll.u32 %v2416, 16
      %v2474 = vrot.slane %v2472, 3
      %v2476 = vshll.u32 %v2417, 16
      %v2478 = vrot.slane %v2476, 3
      %v2480 = vshll.u32 %v2418, 16
      %v2482 = vrot.slane %v2480, 3
      %v2499 = vsel %vm638, %v2148, %v2265
      %v2500 = vsel %vm638, %v2151, %v2272
      %v2501 = vsel %vm638, %v2154, %v2279
      %v2502 = vsel %vm638, %v2157, %v2286
      %v2503 = vsel %vm638, %v2160, %v2293
      %v2504 = vsel %vm638, %v2163, %v2300
      %v2505 = vsel %vm638, %v2166, %v2307
      %v2506 = vsel %vm638, %v2169, %v2314
      %v2507 = vsel %vm638, %v2172, %v2321
      %v2508 = vsel %vm638, %v2175, %v2328
      %v2509 = vsel %vm638, %v2178, %v2335
      %v2510 = vsel %vm638, %v2181, %v2342
      %v2511 = vsel %vm638, %v2184, %v2349
      %v2512 = vsel %vm638, %v2187, %v2356
      %v2513 = vsel %vm638, %v2190, %v2363
      %v2514 = vsel %vm638, %v2193, %v2370
      %v2515 = vsel %vm638, %v2262, %v2422
      %v2516 = vsel %vm638, %v2269, %v2426
      %v2517 = vsel %vm638, %v2276, %v2430
      %v2518 = vsel %vm638, %v2283, %v2434
      %v2519 = vsel %vm638, %v2290, %v2438
      %v2520 = vsel %vm638, %v2297, %v2442
      %v2521 = vsel %vm638, %v2304, %v2446
      %v2522 = vsel %vm638, %v2311, %v2450
      %v2523 = vsel %vm638, %v2318, %v2454
      %v2524 = vsel %vm638, %v2325, %v2458
      %v2525 = vsel %vm638, %v2332, %v2462
      %v2526 = vsel %vm638, %v2339, %v2466
      %v2527 = vsel %vm638, %v2346, %v2470
      %v2528 = vsel %vm638, %v2353, %v2474
      %v2529 = vsel %vm638, %v2360, %v2478
      %v2530 = vsel %vm638, %v2367, %v2482
      %v2532 = vsel %vm671, %v2515, 0
      %v2534 = vsel %vm671, %v2516, 0
      %v2536 = vsel %vm671, %v2517, 0
      %v2538 = vsel %vm671, %v2518, 0
      %v2540 = vsel %vm671, %v2519, 0
      %v2542 = vsel %vm671, %v2520, 0
      %v2544 = vsel %vm671, %v2521, 0
      %v2546 = vsel %vm671, %v2522, 0
      %v2548 = vsel %vm671, %v2523, 0
      %v2550 = vsel %vm671, %v2524, 0
      %v2552 = vsel %vm671, %v2525, 0
      %v2554 = vsel %vm671, %v2526, 0
      %v2556 = vsel %vm671, %v2527, 0
      %v2558 = vsel %vm671, %v2528, 0
      %v2560 = vsel %vm671, %v2529, 0
      %v2562 = vsel %vm671, %v2530, 0
      %2595 = vrot.lane.b32.xlu0 %v2499, 4
      %v2596 = vpop.permute.xlu0 %2595
      %2597 = vrot.lane.b32.xlu0 %v2532, 4
      %v2598 = vpop.permute.xlu0 %2597
      %2599 = vrot.lane.b32.xlu0 %v2500, 4
      %v2600 = vpop.permute.xlu0 %2599
      %2601 = vrot.lane.b32.xlu0 %v2534, 4
      %v2602 = vpop.permute.xlu0 %2601
      %2603 = vrot.lane.b32.xlu0 %v2501, 4
      %v2604 = vpop.permute.xlu0 %2603
      %2605 = vrot.lane.b32.xlu0 %v2536, 4
      %v2606 = vpop.permute.xlu0 %2605
      %2607 = vrot.lane.b32.xlu0 %v2502, 4
      %v2608 = vpop.permute.xlu0 %2607
      %2609 = vrot.lane.b32.xlu0 %v2538, 4
      %v2610 = vpop.permute.xlu0 %2609
      %2611 = vrot.lane.b32.xlu0 %v2503, 4
      %v2612 = vpop.permute.xlu0 %2611
      %2613 = vrot.lane.b32.xlu0 %v2540, 4
      %v2614 = vpop.permute.xlu0 %2613
      %2615 = vrot.lane.b32.xlu0 %v2504, 4
      %v2616 = vpop.permute.xlu0 %2615
      %2617 = vrot.lane.b32.xlu0 %v2542, 4
      %v2618 = vpop.permute.xlu0 %2617
      %2619 = vrot.lane.b32.xlu0 %v2505, 4
      %v2620 = vpop.permute.xlu0 %2619
      %2621 = vrot.lane.b32.xlu0 %v2544, 4
      %v2622 = vpop.permute.xlu0 %2621
      %2623 = vrot.lane.b32.xlu0 %v2506, 4
      %v2624 = vpop.permute.xlu0 %2623
      %2625 = vrot.lane.b32.xlu0 %v2546, 4
      %v2626 = vpop.permute.xlu0 %2625
      %2627 = vrot.lane.b32.xlu0 %v2507, 4
      %v2628 = vpop.permute.xlu0 %2627
      %2629 = vrot.lane.b32.xlu0 %v2548, 4
      %v2630 = vpop.permute.xlu0 %2629
      %2631 = vrot.lane.b32.xlu0 %v2508, 4
      %v2632 = vpop.permute.xlu0 %2631
      %2633 = vrot.lane.b32.xlu0 %v2550, 4
      %v2634 = vpop.permute.xlu0 %2633
      %2635 = vrot.lane.b32.xlu0 %v2509, 4
      %v2636 = vpop.permute.xlu0 %2635
      %2637 = vrot.lane.b32.xlu0 %v2552, 4
      %v2638 = vpop.permute.xlu0 %2637
      %2639 = vrot.lane.b32.xlu0 %v2510, 4
      %v2640 = vpop.permute.xlu0 %2639
      %2641 = vrot.lane.b32.xlu0 %v2554, 4
      %v2642 = vpop.permute.xlu0 %2641
      %2643 = vrot.lane.b32.xlu0 %v2511, 4
      %v2644 = vpop.permute.xlu0 %2643
      %2645 = vrot.lane.b32.xlu0 %v2556, 4
      %v2646 = vpop.permute.xlu0 %2645
      %2647 = vrot.lane.b32.xlu0 %v2512, 4
      %v2648 = vpop.permute.xlu0 %2647
      %2649 = vrot.lane.b32.xlu0 %v2558, 4
      %v2650 = vpop.permute.xlu0 %2649
      %2651 = vrot.lane.b32.xlu0 %v2513, 4
      %v2652 = vpop.permute.xlu0 %2651
      %2653 = vrot.lane.b32.xlu0 %v2560, 4
      %v2654 = vpop.permute.xlu0 %2653
      %2655 = vrot.lane.b32.xlu0 %v2514, 4
      %v2656 = vpop.permute.xlu0 %2655
      %2657 = vrot.lane.b32.xlu0 %v2562, 4
      %v2658 = vpop.permute.xlu0 %2657
      %2659 = vrot.lane.b32.xlu0 %v2500, 8
      %v2660 = vpop.permute.xlu0 %2659
      %2661 = vrot.lane.b32.xlu0 %v2534, 8
      %v2662 = vpop.permute.xlu0 %2661
      %2663 = vrot.lane.b32.xlu0 %v2501, 8
      %v2664 = vpop.permute.xlu0 %2663
      %2665 = vrot.lane.b32.xlu0 %v2536, 8
      %v2666 = vpop.permute.xlu0 %2665
      %2667 = vrot.lane.b32.xlu0 %v2502, 8
      %v2668 = vpop.permute.xlu0 %2667
      %2669 = vrot.lane.b32.xlu0 %v2538, 8
      %v2670 = vpop.permute.xlu0 %2669
      %2671 = vrot.lane.b32.xlu0 %v2503, 8
      %v2672 = vpop.permute.xlu0 %2671
      %2673 = vrot.lane.b32.xlu0 %v2540, 8
      %v2674 = vpop.permute.xlu0 %2673
      %2675 = vrot.lane.b32.xlu0 %v2504, 8
      %v2676 = vpop.permute.xlu0 %2675
      %2677 = vrot.lane.b32.xlu0 %v2542, 8
      %v2678 = vpop.permute.xlu0 %2677
      %2679 = vrot.lane.b32.xlu0 %v2505, 8
      %v2680 = vpop.permute.xlu0 %2679
      %2681 = vrot.lane.b32.xlu0 %v2544, 8
      %v2682 = vpop.permute.xlu0 %2681
      %2683 = vrot.lane.b32.xlu0 %v2506, 8
      %v2684 = vpop.permute.xlu0 %2683
      %2685 = vrot.lane.b32.xlu0 %v2546, 8
      %v2686 = vpop.permute.xlu0 %2685
      %2687 = vrot.lane.b32.xlu0 %v2507, 8
      %v2688 = vpop.permute.xlu0 %2687
      %2689 = vrot.lane.b32.xlu0 %v2548, 8
      %v2690 = vpop.permute.xlu0 %2689
      %2691 = vrot.lane.b32.xlu0 %v2508, 8
      %v2692 = vpop.permute.xlu0 %2691
      %2693 = vrot.lane.b32.xlu0 %v2550, 8
      %v2694 = vpop.permute.xlu0 %2693
      %2695 = vrot.lane.b32.xlu0 %v2509, 8
      %v2696 = vpop.permute.xlu0 %2695
      %2697 = vrot.lane.b32.xlu0 %v2552, 8
      %v2698 = vpop.permute.xlu0 %2697
      %2699 = vrot.lane.b32.xlu0 %v2510, 8
      %v2700 = vpop.permute.xlu0 %2699
      %2701 = vrot.lane.b32.xlu0 %v2554, 8
      %v2702 = vpop.permute.xlu0 %2701
      %2703 = vrot.lane.b32.xlu0 %v2511, 8
      %v2704 = vpop.permute.xlu0 %2703
      %2705 = vrot.lane.b32.xlu0 %v2556, 8
      %v2706 = vpop.permute.xlu0 %2705
      %2707 = vrot.lane.b32.xlu0 %v2512, 8
      %v2708 = vpop.permute.xlu0 %2707
      %2709 = vrot.lane.b32.xlu0 %v2558, 8
      %v2710 = vpop.permute.xlu0 %2709
      %2711 = vrot.lane.b32.xlu0 %v2513, 8
      %v2712 = vpop.permute.xlu0 %2711
      %2713 = vrot.lane.b32.xlu0 %v2560, 8
      %v2714 = vpop.permute.xlu0 %2713
      %2715 = vrot.lane.b32.xlu0 %v2514, 8
      %v2716 = vpop.permute.xlu0 %2715
      %2717 = vrot.lane.b32.xlu0 %v2562, 8
      %v2718 = vpop.permute.xlu0 %2717
      %v2721 = vsel %vm861, %v2500, %v2596
      %v2723 = vsel %vm861, %v2534, %v2598
      %v2726 = vsel %vm861, %v2499, %v2600
      %v2728 = vsel %vm861, %v2532, %v2602
      %v2730 = vsel %vm861, %v2500, %v2604
      %v2732 = vsel %vm861, %v2534, %v2606
      %v2735 = vsel %vm861, %v2501, %v2608
      %v2737 = vsel %vm861, %v2536, %v2610
      %v2740 = vsel %vm861, %v2502, %v2612
      %v2742 = vsel %vm861, %v2538, %v2614
      %v2745 = vsel %vm861, %v2503, %v2616
      %v2747 = vsel %vm861, %v2540, %v2618
      %v2750 = vsel %vm861, %v2504, %v2620
      %v2752 = vsel %vm861, %v2542, %v2622
      %v2755 = vsel %vm861, %v2505, %v2624
      %v2757 = vsel %vm861, %v2544, %v2626
      %v2760 = vsel %vm861, %v2506, %v2628
      %v2762 = vsel %vm861, %v2546, %v2630
      %v2765 = vsel %vm861, %v2507, %v2632
      %v2767 = vsel %vm861, %v2548, %v2634
      %v2770 = vsel %vm861, %v2508, %v2636
      %v2772 = vsel %vm861, %v2550, %v2638
      %v2775 = vsel %vm861, %v2509, %v2640
      %v2777 = vsel %vm861, %v2552, %v2642
      %v2780 = vsel %vm861, %v2510, %v2644
      %v2782 = vsel %vm861, %v2554, %v2646
      %v2785 = vsel %vm861, %v2511, %v2648
      %v2787 = vsel %vm861, %v2556, %v2650
      %v2790 = vsel %vm861, %v2512, %v2652
      %v2792 = vsel %vm861, %v2558, %v2654
      %v2795 = vsel %vm861, %v2513, %v2656
      %v2797 = vsel %vm861, %v2560, %v2658
      %v2799 = vsel %vm941, %v2721, %v2660
      %v2801 = vsel %vm941, %v2723, %v2662
      %v2803 = vsel %vm941, %v2726, %v2664
      %v2805 = vsel %vm941, %v2728, %v2666
      %v2807 = vsel %vm941, %v2730, %v2668
      %v2809 = vsel %vm941, %v2732, %v2670
      %v2811 = vsel %vm941, %v2735, %v2672
      %v2813 = vsel %vm941, %v2737, %v2674
      %v2815 = vsel %vm941, %v2740, %v2676
      %v2817 = vsel %vm941, %v2742, %v2678
      %v2819 = vsel %vm941, %v2745, %v2680
      %v2821 = vsel %vm941, %v2747, %v2682
      %v2823 = vsel %vm941, %v2750, %v2684
      %v2825 = vsel %vm941, %v2752, %v2686
      %v2827 = vsel %vm941, %v2755, %v2688
      %v2829 = vsel %vm941, %v2757, %v2690
      %v2831 = vsel %vm941, %v2760, %v2692
      %v2833 = vsel %vm941, %v2762, %v2694
      %v2835 = vsel %vm941, %v2765, %v2696
      %v2837 = vsel %vm941, %v2767, %v2698
      %v2839 = vsel %vm941, %v2770, %v2700
      %v2841 = vsel %vm941, %v2772, %v2702
      %v2843 = vsel %vm941, %v2775, %v2704
      %v2845 = vsel %vm941, %v2777, %v2706
      %v2847 = vsel %vm941, %v2780, %v2708
      %v2849 = vsel %vm941, %v2782, %v2710
      %v2851 = vsel %vm941, %v2785, %v2712
      %v2853 = vsel %vm941, %v2787, %v2714
      %v2855 = vsel %vm941, %v2790, %v2716
      %v2857 = vsel %vm941, %v2792, %v2718
      %v2858 = vsel %vm941, %v2795, %v2712
      %v2859 = vsel %vm941, %v2797, %v2714
      %v2892 = vunpack.c.l.b16 %v2799
      %v2893 = vunpack.c.h.b16 %v2799
      %v2894 = vunpack.c.l.b16 %v2801
      %v2895 = vunpack.c.l.b16 %v2803
      %v2896 = vunpack.c.h.b16 %v2803
      %v2897 = vunpack.c.l.b16 %v2805
      %v2898 = vunpack.c.l.b16 %v2807
      %v2899 = vunpack.c.h.b16 %v2807
      %v2900 = vunpack.c.l.b16 %v2809
      %v2901 = vunpack.c.l.b16 %v2811
      %v2902 = vunpack.c.h.b16 %v2811
      %v2903 = vunpack.c.l.b16 %v2813
      %v2904 = vunpack.c.l.b16 %v2815
      %v2905 = vunpack.c.h.b16 %v2815
      %v2906 = vunpack.c.l.b16 %v2817
      %v2907 = vunpack.c.l.b16 %v2819
      %v2908 = vunpack.c.h.b16 %v2819
      %v2909 = vunpack.c.l.b16 %v2821
      %v2910 = vunpack.c.l.b16 %v2823
      %v2911 = vunpack.c.h.b16 %v2823
      %v2912 = vunpack.c.l.b16 %v2825
      %v2913 = vunpack.c.l.b16 %v2827
      %v2914 = vunpack.c.h.b16 %v2827
      %v2915 = vunpack.c.l.b16 %v2829
      %v2916 = vunpack.c.l.b16 %v2831
      %v2917 = vunpack.c.h.b16 %v2831
      %v2918 = vunpack.c.l.b16 %v2833
      %v2919 = vunpack.c.l.b16 %v2835
      %v2920 = vunpack.c.h.b16 %v2835
      %v2921 = vunpack.c.l.b16 %v2837
      %v2922 = vunpack.c.l.b16 %v2839
      %v2923 = vunpack.c.h.b16 %v2839
      %v2924 = vunpack.c.l.b16 %v2841
      %v2925 = vunpack.c.l.b16 %v2843
      %v2926 = vunpack.c.h.b16 %v2843
      %v2927 = vunpack.c.l.b16 %v2845
      %v2928 = vunpack.c.l.b16 %v2847
      %v2929 = vunpack.c.h.b16 %v2847
      %v2930 = vunpack.c.l.b16 %v2849
      %v2931 = vunpack.c.l.b16 %v2851
      %v2932 = vunpack.c.h.b16 %v2851
      %v2933 = vunpack.c.l.b16 %v2853
      %v2934 = vunpack.c.l.b16 %v2855
      %v2935 = vunpack.c.h.b16 %v2855
      %v2936 = vunpack.c.l.b16 %v2857
      %v2937 = vunpack.c.l.b16 %v2858
      %v2938 = vunpack.c.h.b16 %v2858
      %v2939 = vunpack.c.l.b16 %v2859
      %v2940 = vld [vmem:[%s2] sm:$0xf]
      %v2941 = vld [vmem:[%s2 + $0x4] sm:$0x3]
      %s2942 = scalar_lea.vmem %s2, 8
      %v2943 = vld [vmem:[%s2942] sm:$0xf]
      %v2944 = vld [vmem:[%s2942 + $0x4] sm:$0x3]
      %v2945 = vpack.c.b16 %v2893, %v2892
      %v2946 = vpack.c.b16 %v2895, %v2894
      %v2947 = vpack.c.b16 %v2897, %v2896
      %v2948 = vpack.c.b16 %v2899, %v2898
      %v2949 = vpack.c.b16 %v2901, %v2900
      %v2950 = vpack.c.b16 %v2903, %v2902
      %v2951 = vpack.c.b16 %v2905, %v2904
      %v2952 = vpack.c.b16 %v2907, %v2906
      %v2953 = vpack.c.b16 %v2909, %v2908
      %v2954 = vpack.c.b16 %v2911, %v2910
      %v2955 = vpack.c.b16 %v2913, %v2912
      %v2956 = vpack.c.b16 %v2915, %v2914
      %v2957 = vpack.c.b16 %v2917, %v2916
      %v2958 = vpack.c.b16 %v2919, %v2918
      %v2959 = vpack.c.b16 %v2921, %v2920
      %v2960 = vpack.c.b16 %v2923, %v2922
      %v2961 = vpack.c.b16 %v2925, %v2924
      %v2962 = vpack.c.b16 %v2927, %v2926
      %v2963 = vpack.c.b16 %v2929, %v2928
      %v2964 = vpack.c.b16 %v2931, %v2930
      %v2965 = vpack.c.b16 %v2933, %v2932
      %v2966 = vpack.c.b16 %v2935, %v2934
      %v2967 = vpack.c.b16 %v2937, %v2936
      %v2968 = vpack.c.b16 %v2939, %v2938
      %v2971 = vunpack.c.l.b16 %v2943
      %v2972 = vunpack.c.l.b16 %v2944
      %v2973 = vpack.c.b16 %v2972, %v2971
      %v2975 = vsel %vm1118, %v2945, 0
      %v2978 = vsel %vm1118, %v2946, 0
      %v2981 = vsel %vm1118, %v2947, 0
      %v2984 = vsel %vm1118, %v2948, 0
      %v2987 = vsel %vm1118, %v2949, 0
      %v2990 = vsel %vm1118, %v2950, 0
      %v2993 = vsel %vm1118, %v2951, 0
      %v2996 = vsel %vm1118, %v2952, 0
      %v2999 = vsel %vm1118, %v2953, 0
      %v3002 = vsel %vm1118, %v2954, 0
      %v3005 = vsel %vm1118, %v2955, 0
      %v3008 = vsel %vm1118, %v2956, 0
      %v3011 = vsel %vm1118, %v2957, 0
      %v3014 = vsel %vm1118, %v2958, 0
      %v3017 = vsel %vm1118, %v2959, 0
      %v3020 = vsel %vm1118, %v2960, 0
      %v3023 = vsel %vm1118, %v2961, 0
      %v3026 = vsel %vm1118, %v2962, 0
      %v3029 = vsel %vm1118, %v2963, 0
      %v3032 = vsel %vm1118, %v2964, 0
      %v3035 = vsel %vm1118, %v2965, 0
      %v3038 = vsel %vm1118, %v2966, 0
      %v3041 = vsel %vm1118, %v2967, 0
      %v3044 = vsel %vm1118, %v2968, 0
      %v3047 = vsel %vm1191, %v2973, 0
      %3049 = vmatpush.bf16.msra.mxu0 0
      %3050 = vmatpush.bf16.msra.mxu0 0
      %3051 = vmatpush.bf16.msra.mxu0 0
      %3052 = vmatpush.bf16.msra.mxu0 0
      %3053 = vmatpush.bf16.msra.mxu0 0
      %3054 = vmatpush.bf16.msra.mxu0 0
      %3055 = vmatpush.bf16.msra.mxu0 0
      %3056 = vmatpush.bf16.msra.mxu0 %v3047
      %3057 = vmatmul.bf16.gmra.mxu0 %v2975
      %v3058 = vpop.f32.mrf.mxu0
      %v3059 = vadd.f32 0.0, %v3058
      %v3060 = vpop.f32.mrf.mxu0
      %v3061 = vadd.f32 0.0, %v3060
      %3062 = vmatmul.bf16.gmra.mxu0 %v2978
      %v3063 = vpop.f32.mrf.mxu0
      %v3064 = vadd.f32 0.0, %v3063
      %v3065 = vpop.f32.mrf.mxu0
      %v3066 = vadd.f32 0.0, %v3065
      %3067 = vmatmul.bf16.gmra.mxu0 %v2981
      %v3068 = vpop.f32.mrf.mxu0
      %v3069 = vadd.f32 0.0, %v3068
      %v3070 = vpop.f32.mrf.mxu0
      %v3071 = vadd.f32 0.0, %v3070
      %3072 = vmatmul.bf16.gmra.mxu0 %v2984
      %v3073 = vpop.f32.mrf.mxu0
      %v3074 = vadd.f32 0.0, %v3073
      %v3075 = vpop.f32.mrf.mxu0
      %v3076 = vadd.f32 0.0, %v3075
      %3077 = vmatmul.bf16.gmra.mxu0 %v2987
      %v3078 = vpop.f32.mrf.mxu0
      %v3079 = vadd.f32 0.0, %v3078
      %v3080 = vpop.f32.mrf.mxu0
      %v3081 = vadd.f32 0.0, %v3080
      %3082 = vmatmul.bf16.gmra.mxu0 %v2990
      %v3083 = vpop.f32.mrf.mxu0
      %v3084 = vadd.f32 0.0, %v3083
      %v3085 = vpop.f32.mrf.mxu0
      %v3086 = vadd.f32 0.0, %v3085
      %3087 = vmatmul.bf16.gmra.mxu0 %v2993
      %v3088 = vpop.f32.mrf.mxu0
      %v3089 = vadd.f32 0.0, %v3088
      %v3090 = vpop.f32.mrf.mxu0
      %v3091 = vadd.f32 0.0, %v3090
      %3092 = vmatmul.bf16.gmra.mxu0 %v2996
      %v3093 = vpop.f32.mrf.mxu0
      %v3094 = vadd.f32 0.0, %v3093
      %v3095 = vpop.f32.mrf.mxu0
      %v3096 = vadd.f32 0.0, %v3095
      %3097 = vmatmul.bf16.gmra.mxu0 %v2999
      %v3098 = vpop.f32.mrf.mxu0
      %v3099 = vadd.f32 0.0, %v3098
      %v3100 = vpop.f32.mrf.mxu0
      %v3101 = vadd.f32 0.0, %v3100
      %3102 = vmatmul.bf16.gmra.mxu0 %v3002
      %v3103 = vpop.f32.mrf.mxu0
      %v3104 = vadd.f32 0.0, %v3103
      %v3105 = vpop.f32.mrf.mxu0
      %v3106 = vadd.f32 0.0, %v3105
      %3107 = vmatmul.bf16.gmra.mxu0 %v3005
      %v3108 = vpop.f32.mrf.mxu0
      %v3109 = vadd.f32 0.0, %v3108
      %v3110 = vpop.f32.mrf.mxu0
      %v3111 = vadd.f32 0.0, %v3110
      %3112 = vmatmul.bf16.gmra.mxu0 %v3008
      %v3113 = vpop.f32.mrf.mxu0
      %v3114 = vadd.f32 0.0, %v3113
      %v3115 = vpop.f32.mrf.mxu0
      %v3116 = vadd.f32 0.0, %v3115
      %3117 = vmatmul.bf16.gmra.mxu0 %v3011
      %v3118 = vpop.f32.mrf.mxu0
      %v3119 = vadd.f32 0.0, %v3118
      %v3120 = vpop.f32.mrf.mxu0
      %v3121 = vadd.f32 0.0, %v3120
      %3122 = vmatmul.bf16.gmra.mxu0 %v3014
      %v3123 = vpop.f32.mrf.mxu0
      %v3124 = vadd.f32 0.0, %v3123
      %v3125 = vpop.f32.mrf.mxu0
      %v3126 = vadd.f32 0.0, %v3125
      %3127 = vmatmul.bf16.gmra.mxu0 %v3017
      %v3128 = vpop.f32.mrf.mxu0
      %v3129 = vadd.f32 0.0, %v3128
      %v3130 = vpop.f32.mrf.mxu0
      %v3131 = vadd.f32 0.0, %v3130
      %3132 = vmatmul.bf16.gmra.mxu0 %v3020
      %v3133 = vpop.f32.mrf.mxu0
      %v3134 = vadd.f32 0.0, %v3133
      %v3135 = vpop.f32.mrf.mxu0
      %v3136 = vadd.f32 0.0, %v3135
      %3137 = vmatmul.bf16.gmra.mxu0 %v3023
      %v3138 = vpop.f32.mrf.mxu0
      %v3139 = vadd.f32 0.0, %v3138
      %v3140 = vpop.f32.mrf.mxu0
      %v3141 = vadd.f32 0.0, %v3140
      %3142 = vmatmul.bf16.gmra.mxu0 %v3026
      %v3143 = vpop.f32.mrf.mxu0
      %v3144 = vadd.f32 0.0, %v3143
      %v3145 = vpop.f32.mrf.mxu0
      %v3146 = vadd.f32 0.0, %v3145
      %3147 = vmatmul.bf16.gmra.mxu0 %v3029
      %v3148 = vpop.f32.mrf.mxu0
      %v3149 = vadd.f32 0.0, %v3148
      %v3150 = vpop.f32.mrf.mxu0
      %v3151 = vadd.f32 0.0, %v3150
      %3152 = vmatmul.bf16.gmra.mxu0 %v3032
      %v3153 = vpop.f32.mrf.mxu0
      %v3154 = vadd.f32 0.0, %v3153
      %v3155 = vpop.f32.mrf.mxu0
      %v3156 = vadd.f32 0.0, %v3155
      %3157 = vmatmul.bf16.gmra.mxu0 %v3035
      %v3158 = vpop.f32.mrf.mxu0
      %v3159 = vadd.f32 0.0, %v3158
      %v3160 = vpop.f32.mrf.mxu0
      %v3161 = vadd.f32 0.0, %v3160
      %3162 = vmatmul.bf16.gmra.mxu0 %v3038
      %v3163 = vpop.f32.mrf.mxu0
      %v3164 = vadd.f32 0.0, %v3163
      %v3165 = vpop.f32.mrf.mxu0
      %v3166 = vadd.f32 0.0, %v3165
      %3167 = vmatmul.bf16.gmra.mxu0 %v3041
      %v3168 = vpop.f32.mrf.mxu0
      %v3169 = vadd.f32 0.0, %v3168
      %v3170 = vpop.f32.mrf.mxu0
      %v3171 = vadd.f32 0.0, %v3170
      %3172 = vmatmul.bf16.gmra.mxu0 %v3044
      %v3173 = vpop.f32.mrf.mxu0
      %v3174 = vadd.f32 0.0, %v3173
      %v3175 = vpop.f32.mrf.mxu0
      %v3176 = vadd.f32 0.0, %v3175
      %3177 = vdwg.mxu0
      %v3178 = vrot.slane %v3059, 1
      %v3179 = vrot.slane %v3061, 1
      %v3180 = vrot.slane %v3064, 1
      %v3181 = vrot.slane %v3066, 1
      %v3182 = vrot.slane %v3069, 1
      %v3183 = vrot.slane %v3071, 1
      %v3184 = vrot.slane %v3074, 1
      %v3185 = vrot.slane %v3076, 1
      %v3186 = vrot.slane %v3079, 1
      %v3187 = vrot.slane %v3081, 1
      %v3188 = vrot.slane %v3084, 1
      %v3189 = vrot.slane %v3086, 1
      %v3190 = vrot.slane %v3089, 1
      %v3191 = vrot.slane %v3091, 1
      %v3192 = vrot.slane %v3094, 1
      %v3193 = vrot.slane %v3096, 1
      %v3194 = vrot.slane %v3099, 1
      %v3195 = vrot.slane %v3101, 1
      %v3196 = vrot.slane %v3104, 1
      %v3197 = vrot.slane %v3106, 1
      %v3198 = vrot.slane %v3109, 1
      %v3199 = vrot.slane %v3111, 1
      %v3200 = vrot.slane %v3114, 1
      %v3201 = vrot.slane %v3116, 1
      %v3202 = vrot.slane %v3119, 1
      %v3203 = vrot.slane %v3121, 1
      %v3204 = vrot.slane %v3124, 1
      %v3205 = vrot.slane %v3126, 1
      %v3206 = vrot.slane %v3129, 1
      %v3207 = vrot.slane %v3131, 1
      %v3208 = vrot.slane %v3134, 1
      %v3209 = vrot.slane %v3136, 1
      %v3210 = vrot.slane %v3139, 1
      %v3211 = vrot.slane %v3141, 1
      %v3212 = vrot.slane %v3144, 1
      %v3213 = vrot.slane %v3146, 1
      %v3214 = vrot.slane %v3149, 1
      %v3215 = vrot.slane %v3151, 1
      %v3216 = vrot.slane %v3154, 1
      %v3217 = vrot.slane %v3156, 1
      %v3218 = vrot.slane %v3159, 1
      %v3219 = vrot.slane %v3161, 1
      %v3220 = vrot.slane %v3164, 1
      %v3221 = vrot.slane %v3166, 1
      %v3222 = vrot.slane %v3169, 1
      %v3223 = vrot.slane %v3171, 1
      %v3224 = vrot.slane %v3174, 1
      %v3225 = vrot.slane %v3176, 1
      %v3226 = vsel %vm1374, %v3224, %v3225
      %v3227 = vsel %vm1374, %v3223, %v3224
      %v3228 = vsel %vm1374, %v3221, %v3222
      %v3229 = vsel %vm1374, %v3220, %v3221
      %v3230 = vsel %vm1374, %v3218, %v3219
      %v3231 = vsel %vm1374, %v3217, %v3218
      %v3232 = vsel %vm1374, %v3215, %v3216
      %v3233 = vsel %vm1374, %v3214, %v3215
      %v3234 = vsel %vm1374, %v3212, %v3213
      %v3235 = vsel %vm1374, %v3211, %v3212
      %v3236 = vsel %vm1374, %v3209, %v3210
      %v3237 = vsel %vm1374, %v3208, %v3209
      %v3238 = vsel %vm1374, %v3206, %v3207
      %v3239 = vsel %vm1374, %v3205, %v3206
      %v3240 = vsel %vm1374, %v3203, %v3204
      %v3241 = vsel %vm1374, %v3202, %v3203
      %v3242 = vsel %vm1374, %v3200, %v3201
      %v3243 = vsel %vm1374, %v3199, %v3200
      %v3244 = vsel %vm1374, %v3197, %v3198
      %v3245 = vsel %vm1374, %v3196, %v3197
      %v3246 = vsel %vm1374, %v3194, %v3195
      %v3247 = vsel %vm1374, %v3193, %v3194
      %v3248 = vsel %vm1374, %v3191, %v3192
      %v3249 = vsel %vm1374, %v3190, %v3191
      %v3250 = vsel %vm1374, %v3188, %v3189
      %v3251 = vsel %vm1374, %v3187, %v3188
      %v3252 = vsel %vm1374, %v3185, %v3186
      %v3253 = vsel %vm1374, %v3184, %v3185
      %v3254 = vsel %vm1374, %v3182, %v3183
      %v3255 = vsel %vm1374, %v3181, %v3182
      %v3256 = vsel %vm1374, %v3179, %v3180
      %v3257 = vsel %vm1374, %v3178, %v3179
      %v3260 = vunpack.c.l.b16 %v2940
      %v3261 = vunpack.c.l.b16 %v2941
      %v3262 = vpack.c.b16 %v3261, %v3260
      %v3264 = vsel %vm1191, %v3262, 0
      %3266 = vmatpush.bf16.msra.mxu0 0
      %3267 = vmatpush.bf16.msra.mxu0 0
      %3268 = vmatpush.bf16.msra.mxu0 0
      %3269 = vmatpush.bf16.msra.mxu0 0
      %3270 = vmatpush.bf16.msra.mxu0 0
      %3271 = vmatpush.bf16.msra.mxu0 0
      %3272 = vmatpush.bf16.msra.mxu0 0
      %3273 = vmatpush.bf16.msra.mxu0 %v3264
      %3274 = vmatmul.bf16.gmra.mxu0 %v2975
      %v3275 = vpop.f32.mrf.mxu0
      %v3276 = vadd.f32 %v3257, %v3275
      %v3277 = vpop.f32.mrf.mxu0
      %v3278 = vadd.f32 %v3256, %v3277
      %3279 = vmatmul.bf16.gmra.mxu0 %v2978
      %v3280 = vpop.f32.mrf.mxu0
      %v3281 = vpop.f32.mrf.mxu0
      %v3282 = vadd.f32 %v3255, %v3281
      %3283 = vmatmul.bf16.gmra.mxu0 %v2981
      %v3284 = vpop.f32.mrf.mxu0
      %v3285 = vadd.f32 %v3254, %v3284
      %v3286 = vpop.f32.mrf.mxu0
      %3287 = vmatmul.bf16.gmra.mxu0 %v2984
      %v3288 = vpop.f32.mrf.mxu0
      %v3289 = vadd.f32 %v3253, %v3288
      %v3290 = vpop.f32.mrf.mxu0
      %v3291 = vadd.f32 %v3252, %v3290
      %3292 = vmatmul.bf16.gmra.mxu0 %v2987
      %v3293 = vpop.f32.mrf.mxu0
      %v3294 = vpop.f32.mrf.mxu0
      %v3295 = vadd.f32 %v3251, %v3294
      %3296 = vmatmul.bf16.gmra.mxu0 %v2990
      %v3297 = vpop.f32.mrf.mxu0
      %v3298 = vadd.f32 %v3250, %v3297
      %v3299 = vpop.f32.mrf.mxu0
      %3300 = vmatmul.bf16.gmra.mxu0 %v2993
      %v3301 = vpop.f32.mrf.mxu0
      %v3302 = vadd.f32 %v3249, %v3301
      %v3303 = vpop.f32.mrf.mxu0
      %v3304 = vadd.f32 %v3248, %v3303
      %3305 = vmatmul.bf16.gmra.mxu0 %v2996
      %v3306 = vpop.f32.mrf.mxu0
      %v3307 = vpop.f32.mrf.mxu0
      %v3308 = vadd.f32 %v3247, %v3307
      %3309 = vmatmul.bf16.gmra.mxu0 %v2999
      %v3310 = vpop.f32.mrf.mxu0
      %v3311 = vadd.f32 %v3246, %v3310
      %v3312 = vpop.f32.mrf.mxu0
      %3313 = vmatmul.bf16.gmra.mxu0 %v3002
      %v3314 = vpop.f32.mrf.mxu0
      %v3315 = vadd.f32 %v3245, %v3314
      %v3316 = vpop.f32.mrf.mxu0
      %v3317 = vadd.f32 %v3244, %v3316
      %3318 = vmatmul.bf16.gmra.mxu0 %v3005
      %v3319 = vpop.f32.mrf.mxu0
      %v3320 = vpop.f32.mrf.mxu0
      %v3321 = vadd.f32 %v3243, %v3320
      %3322 = vmatmul.bf16.gmra.mxu0 %v3008
      %v3323 = vpop.f32.mrf.mxu0
      %v3324 = vadd.f32 %v3242, %v3323
      %v3325 = vpop.f32.mrf.mxu0
      %3326 = vmatmul.bf16.gmra.mxu0 %v3011
      %v3327 = vpop.f32.mrf.mxu0
      %v3328 = vadd.f32 %v3241, %v3327
      %v3329 = vpop.f32.mrf.mxu0
      %v3330 = vadd.f32 %v3240, %v3329
      %3331 = vmatmul.bf16.gmra.mxu0 %v3014
      %v3332 = vpop.f32.mrf.mxu0
      %v3333 = vpop.f32.mrf.mxu0
      %v3334 = vadd.f32 %v3239, %v3333
      %3335 = vmatmul.bf16.gmra.mxu0 %v3017
      %v3336 = vpop.f32.mrf.mxu0
      %v3337 = vadd.f32 %v3238, %v3336
      %v3338 = vpop.f32.mrf.mxu0
      %3339 = vmatmul.bf16.gmra.mxu0 %v3020
      %v3340 = vpop.f32.mrf.mxu0
      %v3341 = vadd.f32 %v3237, %v3340
      %v3342 = vpop.f32.mrf.mxu0
      %v3343 = vadd.f32 %v3236, %v3342
      %3344 = vmatmul.bf16.gmra.mxu0 %v3023
      %v3345 = vpop.f32.mrf.mxu0
      %v3346 = vpop.f32.mrf.mxu0
      %v3347 = vadd.f32 %v3235, %v3346
      %3348 = vmatmul.bf16.gmra.mxu0 %v3026
      %v3349 = vpop.f32.mrf.mxu0
      %v3350 = vadd.f32 %v3234, %v3349
      %v3351 = vpop.f32.mrf.mxu0
      %3352 = vmatmul.bf16.gmra.mxu0 %v3029
      %v3353 = vpop.f32.mrf.mxu0
      %v3354 = vadd.f32 %v3233, %v3353
      %v3355 = vpop.f32.mrf.mxu0
      %v3356 = vadd.f32 %v3232, %v3355
      %3357 = vmatmul.bf16.gmra.mxu0 %v3032
      %v3358 = vpop.f32.mrf.mxu0
      %v3359 = vpop.f32.mrf.mxu0
      %v3360 = vadd.f32 %v3231, %v3359
      %3361 = vmatmul.bf16.gmra.mxu0 %v3035
      %v3362 = vpop.f32.mrf.mxu0
      %v3363 = vadd.f32 %v3230, %v3362
      %v3364 = vpop.f32.mrf.mxu0
      %3365 = vmatmul.bf16.gmra.mxu0 %v3038
      %v3366 = vpop.f32.mrf.mxu0
      %v3367 = vadd.f32 %v3229, %v3366
      %v3368 = vpop.f32.mrf.mxu0
      %v3369 = vadd.f32 %v3228, %v3368
      %3370 = vmatmul.bf16.gmra.mxu0 %v3041
      %v3371 = vpop.f32.mrf.mxu0
      %v3372 = vpop.f32.mrf.mxu0
      %v3373 = vadd.f32 %v3227, %v3372
      %3374 = vmatmul.bf16.gmra.mxu0 %v3044
      %v3375 = vpop.f32.mrf.mxu0
      %v3376 = vadd.f32 %v3226, %v3375
      %v3377 = vpop.f32.mrf.mxu0
      %3378 = vdwg.mxu0
      %s3379 = scalar_lea.vmem %s2, 16
      %v3380 = vld [vmem:[%s3379] sm:$0xf]
      %v3381 = vld [vmem:[%s3379 + $0x4] sm:$0x3]
      %v3384 = vunpack.c.l.b16 %v3380
      %v3385 = vunpack.c.l.b16 %v3381
      %v3386 = vpack.c.b16 %v3385, %v3384
      %v3388 = vsel %vm1191, %v3386, 0
      %3390 = vmatpush.bf16.msra.mxu0 0
      %3391 = vmatpush.bf16.msra.mxu0 0
      %3392 = vmatpush.bf16.msra.mxu0 0
      %3393 = vmatpush.bf16.msra.mxu0 0
      %3394 = vmatpush.bf16.msra.mxu0 0
      %3395 = vmatpush.bf16.msra.mxu0 0
      %3396 = vmatpush.bf16.msra.mxu0 0
      %3397 = vmatpush.bf16.msra.mxu0 %v3388
      %3398 = vmatmul.bf16.gmra.mxu0 %v2975
      %v3399 = vpop.f32.mrf.mxu0
      %v3400 = vadd.f32 0.0, %v3399
      %v3401 = vpop.f32.mrf.mxu0
      %v3402 = vadd.f32 0.0, %v3401
      %3403 = vmatmul.bf16.gmra.mxu0 %v2978
      %v3404 = vpop.f32.mrf.mxu0
      %v3405 = vadd.f32 0.0, %v3404
      %v3406 = vpop.f32.mrf.mxu0
      %v3407 = vadd.f32 0.0, %v3406
      %3408 = vmatmul.bf16.gmra.mxu0 %v2981
      %v3409 = vpop.f32.mrf.mxu0
      %v3410 = vadd.f32 0.0, %v3409
      %v3411 = vpop.f32.mrf.mxu0
      %v3412 = vadd.f32 0.0, %v3411
      %3413 = vmatmul.bf16.gmra.mxu0 %v2984
      %v3414 = vpop.f32.mrf.mxu0
      %v3415 = vadd.f32 0.0, %v3414
      %v3416 = vpop.f32.mrf.mxu0
      %v3417 = vadd.f32 0.0, %v3416
      %3418 = vmatmul.bf16.gmra.mxu0 %v2987
      %v3419 = vpop.f32.mrf.mxu0
      %v3420 = vadd.f32 0.0, %v3419
      %v3421 = vpop.f32.mrf.mxu0
      %v3422 = vadd.f32 0.0, %v3421
      %3423 = vmatmul.bf16.gmra.mxu0 %v2990
      %v3424 = vpop.f32.mrf.mxu0
      %v3425 = vadd.f32 0.0, %v3424
      %v3426 = vpop.f32.mrf.mxu0
      %v3427 = vadd.f32 0.0, %v3426
      %3428 = vmatmul.bf16.gmra.mxu0 %v2993
      %v3429 = vpop.f32.mrf.mxu0
      %v3430 = vadd.f32 0.0, %v3429
      %v3431 = vpop.f32.mrf.mxu0
      %v3432 = vadd.f32 0.0, %v3431
      %3433 = vmatmul.bf16.gmra.mxu0 %v2996
      %v3434 = vpop.f32.mrf.mxu0
      %v3435 = vadd.f32 0.0, %v3434
      %v3436 = vpop.f32.mrf.mxu0
      %v3437 = vadd.f32 0.0, %v3436
      %3438 = vmatmul.bf16.gmra.mxu0 %v2999
      %v3439 = vpop.f32.mrf.mxu0
      %v3440 = vadd.f32 0.0, %v3439
      %v3441 = vpop.f32.mrf.mxu0
      %v3442 = vadd.f32 0.0, %v3441
      %3443 = vmatmul.bf16.gmra.mxu0 %v3002
      %v3444 = vpop.f32.mrf.mxu0
      %v3445 = vadd.f32 0.0, %v3444
      %v3446 = vpop.f32.mrf.mxu0
      %v3447 = vadd.f32 0.0, %v3446
      %3448 = vmatmul.bf16.gmra.mxu0 %v3005
      %v3449 = vpop.f32.mrf.mxu0
      %v3450 = vadd.f32 0.0, %v3449
      %v3451 = vpop.f32.mrf.mxu0
      %v3452 = vadd.f32 0.0, %v3451
      %3453 = vmatmul.bf16.gmra.mxu0 %v3008
      %v3454 = vpop.f32.mrf.mxu0
      %v3455 = vadd.f32 0.0, %v3454
      %v3456 = vpop.f32.mrf.mxu0
      %v3457 = vadd.f32 0.0, %v3456
      %3458 = vmatmul.bf16.gmra.mxu0 %v3011
      %v3459 = vpop.f32.mrf.mxu0
      %v3460 = vadd.f32 0.0, %v3459
      %v3461 = vpop.f32.mrf.mxu0
      %v3462 = vadd.f32 0.0, %v3461
      %3463 = vmatmul.bf16.gmra.mxu0 %v3014
      %v3464 = vpop.f32.mrf.mxu0
      %v3465 = vadd.f32 0.0, %v3464
      %v3466 = vpop.f32.mrf.mxu0
      %v3467 = vadd.f32 0.0, %v3466
      %3468 = vmatmul.bf16.gmra.mxu0 %v3017
      %v3469 = vpop.f32.mrf.mxu0
      %v3470 = vadd.f32 0.0, %v3469
      %v3471 = vpop.f32.mrf.mxu0
      %v3472 = vadd.f32 0.0, %v3471
      %3473 = vmatmul.bf16.gmra.mxu0 %v3020
      %v3474 = vpop.f32.mrf.mxu0
      %v3475 = vadd.f32 0.0, %v3474
      %v3476 = vpop.f32.mrf.mxu0
      %v3477 = vadd.f32 0.0, %v3476
      %3478 = vmatmul.bf16.gmra.mxu0 %v3023
      %v3479 = vpop.f32.mrf.mxu0
      %v3480 = vadd.f32 0.0, %v3479
      %v3481 = vpop.f32.mrf.mxu0
      %v3482 = vadd.f32 0.0, %v3481
      %3483 = vmatmul.bf16.gmra.mxu0 %v3026
      %v3484 = vpop.f32.mrf.mxu0
      %v3485 = vadd.f32 0.0, %v3484
      %v3486 = vpop.f32.mrf.mxu0
      %v3487 = vadd.f32 0.0, %v3486
      %3488 = vmatmul.bf16.gmra.mxu0 %v3029
      %v3489 = vpop.f32.mrf.mxu0
      %v3490 = vadd.f32 0.0, %v3489
      %v3491 = vpop.f32.mrf.mxu0
      %v3492 = vadd.f32 0.0, %v3491
      %3493 = vmatmul.bf16.gmra.mxu0 %v3032
      %v3494 = vpop.f32.mrf.mxu0
      %v3495 = vadd.f32 0.0, %v3494
      %v3496 = vpop.f32.mrf.mxu0
      %v3497 = vadd.f32 0.0, %v3496
      %3498 = vmatmul.bf16.gmra.mxu0 %v3035
      %v3499 = vpop.f32.mrf.mxu0
      %v3500 = vadd.f32 0.0, %v3499
      %v3501 = vpop.f32.mrf.mxu0
      %v3502 = vadd.f32 0.0, %v3501
      %3503 = vmatmul.bf16.gmra.mxu0 %v3038
      %v3504 = vpop.f32.mrf.mxu0
      %v3505 = vadd.f32 0.0, %v3504
      %v3506 = vpop.f32.mrf.mxu0
      %v3507 = vadd.f32 0.0, %v3506
      %3508 = vmatmul.bf16.gmra.mxu0 %v3041
      %v3509 = vpop.f32.mrf.mxu0
      %v3510 = vadd.f32 0.0, %v3509
      %v3511 = vpop.f32.mrf.mxu0
      %v3512 = vadd.f32 0.0, %v3511
      %3513 = vmatmul.bf16.gmra.mxu0 %v3044
      %v3514 = vpop.f32.mrf.mxu0
      %v3515 = vadd.f32 0.0, %v3514
      %v3516 = vpop.f32.mrf.mxu0
      %v3517 = vadd.f32 0.0, %v3516
      %3518 = vdwg.mxu0
      %v3519 = vrot.slane %v3400, 2
      %v3520 = vrot.slane %v3402, 2
      %v3521 = vrot.slane %v3405, 2
      %v3522 = vrot.slane %v3407, 2
      %v3523 = vrot.slane %v3410, 2
      %v3524 = vrot.slane %v3412, 2
      %v3525 = vrot.slane %v3415, 2
      %v3526 = vrot.slane %v3417, 2
      %v3527 = vrot.slane %v3420, 2
      %v3528 = vrot.slane %v3422, 2
      %v3529 = vrot.slane %v3425, 2
      %v3530 = vrot.slane %v3427, 2
      %v3531 = vrot.slane %v3430, 2
      %v3532 = vrot.slane %v3432, 2
      %v3533 = vrot.slane %v3435, 2
      %v3534 = vrot.slane %v3437, 2
      %v3535 = vrot.slane %v3440, 2
      %v3536 = vrot.slane %v3442, 2
      %v3537 = vrot.slane %v3445, 2
      %v3538 = vrot.slane %v3447, 2
      %v3539 = vrot.slane %v3450, 2
      %v3540 = vrot.slane %v3452, 2
      %v3541 = vrot.slane %v3455, 2
      %v3542 = vrot.slane %v3457, 2
      %v3543 = vrot.slane %v3460, 2
      %v3544 = vrot.slane %v3462, 2
      %v3545 = vrot.slane %v3465, 2
      %v3546 = vrot.slane %v3467, 2
      %v3547 = vrot.slane %v3470, 2
      %v3548 = vrot.slane %v3472, 2
      %v3549 = vrot.slane %v3475, 2
      %v3550 = vrot.slane %v3477, 2
      %v3551 = vrot.slane %v3480, 2
      %v3552 = vrot.slane %v3482, 2
      %v3553 = vrot.slane %v3485, 2
      %v3554 = vrot.slane %v3487, 2
      %v3555 = vrot.slane %v3490, 2
      %v3556 = vrot.slane %v3492, 2
      %v3557 = vrot.slane %v3495, 2
      %v3558 = vrot.slane %v3497, 2
      %v3559 = vrot.slane %v3500, 2
      %v3560 = vrot.slane %v3502, 2
      %v3561 = vrot.slane %v3505, 2
      %v3562 = vrot.slane %v3507, 2
      %v3563 = vrot.slane %v3510, 2
      %v3564 = vrot.slane %v3512, 2
      %v3565 = vrot.slane %v3515, 2
      %v3566 = vrot.slane %v3517, 2
      %v3567 = vsel %vm1716, %v3565, %v3566
      %v3568 = vsel %vm1716, %v3564, %v3565
      %v3569 = vsel %vm1716, %v3562, %v3563
      %v3570 = vsel %vm1716, %v3561, %v3562
      %v3571 = vsel %vm1716, %v3559, %v3560
      %v3572 = vsel %vm1716, %v3558, %v3559
      %v3573 = vsel %vm1716, %v3556, %v3557
      %v3574 = vsel %vm1716, %v3555, %v3556
      %v3575 = vsel %vm1716, %v3553, %v3554
      %v3576 = vsel %vm1716, %v3552, %v3553
      %v3577 = vsel %vm1716, %v3550, %v3551
      %v3578 = vsel %vm1716, %v3549, %v3550
      %v3579 = vsel %vm1716, %v3547, %v3548
      %v3580 = vsel %vm1716, %v3546, %v3547
      %v3581 = vsel %vm1716, %v3544, %v3545
      %v3582 = vsel %vm1716, %v3543, %v3544
      %v3583 = vsel %vm1716, %v3541, %v3542
      %v3584 = vsel %vm1716, %v3540, %v3541
      %v3585 = vsel %vm1716, %v3538, %v3539
      %v3586 = vsel %vm1716, %v3537, %v3538
      %v3587 = vsel %vm1716, %v3535, %v3536
      %v3588 = vsel %vm1716, %v3534, %v3535
      %v3589 = vsel %vm1716, %v3532, %v3533
      %v3590 = vsel %vm1716, %v3531, %v3532
      %v3591 = vsel %vm1716, %v3529, %v3530
      %v3592 = vsel %vm1716, %v3528, %v3529
      %v3593 = vsel %vm1716, %v3526, %v3527
      %v3594 = vsel %vm1716, %v3525, %v3526
      %v3595 = vsel %vm1716, %v3523, %v3524
      %v3596 = vsel %vm1716, %v3522, %v3523
      %v3597 = vsel %vm1716, %v3520, %v3521
      %v3598 = vsel %vm1716, %v3519, %v3520
      %v3599 = vadd.f32 %v3276, %v3598
      %v3600 = vadd.f32 %v3278, %v3597
      %v3601 = vadd.f32 %v3282, %v3596
      %v3602 = vadd.f32 %v3285, %v3595
      %v3603 = vadd.f32 %v3289, %v3594
      %v3604 = vadd.f32 %v3291, %v3593
      %v3605 = vadd.f32 %v3295, %v3592
      %v3606 = vadd.f32 %v3298, %v3591
      %v3607 = vadd.f32 %v3302, %v3590
      %v3608 = vadd.f32 %v3304, %v3589
      %v3609 = vadd.f32 %v3308, %v3588
      %v3610 = vadd.f32 %v3311, %v3587
      %v3611 = vadd.f32 %v3315, %v3586
      %v3612 = vadd.f32 %v3317, %v3585
      %v3613 = vadd.f32 %v3321, %v3584
      %v3614 = vadd.f32 %v3324, %v3583
      %v3615 = vadd.f32 %v3328, %v3582
      %v3616 = vadd.f32 %v3330, %v3581
      %v3617 = vadd.f32 %v3334, %v3580
      %v3618 = vadd.f32 %v3337, %v3579
      %v3619 = vadd.f32 %v3341, %v3578
      %v3620 = vadd.f32 %v3343, %v3577
      %v3621 = vadd.f32 %v3347, %v3576
      %v3622 = vadd.f32 %v3350, %v3575
      %v3623 = vadd.f32 %v3354, %v3574
      %v3624 = vadd.f32 %v3356, %v3573
      %v3625 = vadd.f32 %v3360, %v3572
      %v3626 = vadd.f32 %v3363, %v3571
      %v3627 = vadd.f32 %v3367, %v3570
      %v3628 = vadd.f32 %v3369, %v3569
      %v3629 = vadd.f32 %v3373, %v3568
      %v3630 = vadd.f32 %v3376, %v3567
      %v3631 = vsel %vm861, %v3599, 0.0
      %v3632 = vsel %vm861, %v3601, 0.0
      %v3633 = vadd.f32 %v3631, %v3632
      %v3634 = vsel %vm861, %v3603, 0.0
      %v3635 = vadd.f32 %v3633, %v3634
      %v3636 = vsel %vm861, %v3605, 0.0
      %v3637 = vadd.f32 %v3635, %v3636
      %v3638 = vsel %vm861, %v3607, 0.0
      %v3639 = vadd.f32 %v3637, %v3638
      %v3640 = vsel %vm861, %v3609, 0.0
      %v3641 = vadd.f32 %v3639, %v3640
      %v3642 = vsel %vm861, %v3611, 0.0
      %v3643 = vadd.f32 %v3641, %v3642
      %v3644 = vsel %vm861, %v3613, 0.0
      %v3645 = vadd.f32 %v3643, %v3644
      %v3646 = vsel %vm861, %v3615, 0.0
      %v3647 = vadd.f32 %v3645, %v3646
      %v3648 = vsel %vm861, %v3617, 0.0
      %v3649 = vadd.f32 %v3647, %v3648
      %v3650 = vsel %vm861, %v3619, 0.0
      %v3651 = vadd.f32 %v3649, %v3650
      %v3652 = vsel %vm861, %v3621, 0.0
      %v3653 = vadd.f32 %v3651, %v3652
      %v3654 = vsel %vm861, %v3623, 0.0
      %v3655 = vadd.f32 %v3653, %v3654
      %v3656 = vsel %vm861, %v3625, 0.0
      %v3657 = vadd.f32 %v3655, %v3656
      %v3658 = vsel %vm861, %v3627, 0.0
      %v3659 = vadd.f32 %v3657, %v3658
      %v3660 = vsel %vm861, %v3629, 0.0
      %v3661 = vadd.f32 %v3659, %v3660
      %v3662 = vsel %vm861, %v3600, 0.0
      %v3663 = vsel %vm861, %v3602, 0.0
      %v3664 = vadd.f32 %v3662, %v3663
      %v3665 = vsel %vm861, %v3604, 0.0
      %v3666 = vadd.f32 %v3664, %v3665
      %v3667 = vsel %vm861, %v3606, 0.0
      %v3668 = vadd.f32 %v3666, %v3667
      %v3669 = vsel %vm861, %v3608, 0.0
      %v3670 = vadd.f32 %v3668, %v3669
      %v3671 = vsel %vm861, %v3610, 0.0
      %v3672 = vadd.f32 %v3670, %v3671
      %v3673 = vsel %vm861, %v3612, 0.0
      %v3674 = vadd.f32 %v3672, %v3673
      %v3675 = vsel %vm861, %v3614, 0.0
      %v3676 = vadd.f32 %v3674, %v3675
      %v3677 = vsel %vm861, %v3616, 0.0
      %v3678 = vadd.f32 %v3676, %v3677
      %v3679 = vsel %vm861, %v3618, 0.0
      %v3680 = vadd.f32 %v3678, %v3679
      %v3681 = vsel %vm861, %v3620, 0.0
      %v3682 = vadd.f32 %v3680, %v3681
      %v3683 = vsel %vm861, %v3622, 0.0
      %v3684 = vadd.f32 %v3682, %v3683
      %v3685 = vsel %vm861, %v3624, 0.0
      %v3686 = vadd.f32 %v3684, %v3685
      %v3687 = vsel %vm861, %v3626, 0.0
      %v3688 = vadd.f32 %v3686, %v3687
      %v3689 = vsel %vm861, %v3628, 0.0
      %v3690 = vadd.f32 %v3688, %v3689
      %v3691 = vsel %vm861, %v3630, 0.0
      %v3692 = vadd.f32 %v3690, %v3691
      %v3693 = vsel %vm861, %v3661, 0.0
      %v3694 = vsel %vm861, %v3692, 0.0
      %v3695 = vadd.f32 %v3693, %v3694
      %v3696 = vrot.slane %v3695, 4
      %v3697 = vadd.f32 %v3695, %v3696
      %v3698 = vrot.slane %v3697, 2
      %v3699 = vadd.f32 %v3697, %v3698
      %v3700 = vrot.slane %v3699, 1
      %v3701 = vadd.f32 %v3699, %v3700
      %v3702 = vmul.f32 %v3701, 0.00390625
      %v3703 = vmul.f32 %v3599, %v3599
      %v3704 = vmul.f32 %v3600, %v3600
      %v3705 = vmul.f32 %v3601, %v3601
      %v3706 = vmul.f32 %v3602, %v3602
      %v3707 = vmul.f32 %v3603, %v3603
      %v3708 = vmul.f32 %v3604, %v3604
      %v3709 = vmul.f32 %v3605, %v3605
      %v3710 = vmul.f32 %v3606, %v3606
      %v3711 = vmul.f32 %v3607, %v3607
      %v3712 = vmul.f32 %v3608, %v3608
      %v3713 = vmul.f32 %v3609, %v3609
      %v3714 = vmul.f32 %v3610, %v3610
      %v3715 = vmul.f32 %v3611, %v3611
      %v3716 = vmul.f32 %v3612, %v3612
      %v3717 = vmul.f32 %v3613, %v3613
      %v3718 = vmul.f32 %v3614, %v3614
      %v3719 = vmul.f32 %v3615, %v3615
      %v3720 = vmul.f32 %v3616, %v3616
      %v3721 = vmul.f32 %v3617, %v3617
      %v3722 = vmul.f32 %v3618, %v3618
      %v3723 = vmul.f32 %v3619, %v3619
      %v3724 = vmul.f32 %v3620, %v3620
      %v3725 = vmul.f32 %v3621, %v3621
      %v3726 = vmul.f32 %v3622, %v3622
      %v3727 = vmul.f32 %v3623, %v3623
      %v3728 = vmul.f32 %v3624, %v3624
      %v3729 = vmul.f32 %v3625, %v3625
      %v3730 = vmul.f32 %v3626, %v3626
      %v3731 = vmul.f32 %v3627, %v3627
      %v3732 = vmul.f32 %v3628, %v3628
      %v3733 = vmul.f32 %v3629, %v3629
      %v3734 = vmul.f32 %v3630, %v3630
      %v3735 = vsel %vm861, %v3703, 0.0
      %v3736 = vsel %vm861, %v3705, 0.0
      %v3737 = vadd.f32 %v3735, %v3736
      %v3738 = vsel %vm861, %v3707, 0.0
      %v3739 = vadd.f32 %v3737, %v3738
      %v3740 = vsel %vm861, %v3709, 0.0
      %v3741 = vadd.f32 %v3739, %v3740
      %v3742 = vsel %vm861, %v3711, 0.0
      %v3743 = vadd.f32 %v3741, %v3742
      %v3744 = vsel %vm861, %v3713, 0.0
      %v3745 = vadd.f32 %v3743, %v3744
      %v3746 = vsel %vm861, %v3715, 0.0
      %v3747 = vadd.f32 %v3745, %v3746
      %v3748 = vsel %vm861, %v3717, 0.0
      %v3749 = vadd.f32 %v3747, %v3748
      %v3750 = vsel %vm861, %v3719, 0.0
      %v3751 = vadd.f32 %v3749, %v3750
      %v3752 = vsel %vm861, %v3721, 0.0
      %v3753 = vadd.f32 %v3751, %v3752
      %v3754 = vsel %vm861, %v3723, 0.0
      %v3755 = vadd.f32 %v3753, %v3754
      %v3756 = vsel %vm861, %v3725, 0.0
      %v3757 = vadd.f32 %v3755, %v3756
      %v3758 = vsel %vm861, %v3727, 0.0
      %v3759 = vadd.f32 %v3757, %v3758
      %v3760 = vsel %vm861, %v3729, 0.0
      %v3761 = vadd.f32 %v3759, %v3760
      %v3762 = vsel %vm861, %v3731, 0.0
      %v3763 = vadd.f32 %v3761, %v3762
      %v3764 = vsel %vm861, %v3733, 0.0
      %v3765 = vadd.f32 %v3763, %v3764
      %v3766 = vsel %vm861, %v3704, 0.0
      %v3767 = vsel %vm861, %v3706, 0.0
      %v3768 = vadd.f32 %v3766, %v3767
      %v3769 = vsel %vm861, %v3708, 0.0
      %v3770 = vadd.f32 %v3768, %v3769
      %v3771 = vsel %vm861, %v3710, 0.0
      %v3772 = vadd.f32 %v3770, %v3771
      %v3773 = vsel %vm861, %v3712, 0.0
      %v3774 = vadd.f32 %v3772, %v3773
      %v3775 = vsel %vm861, %v3714, 0.0
      %v3776 = vadd.f32 %v3774, %v3775
      %v3777 = vsel %vm861, %v3716, 0.0
      %v3778 = vadd.f32 %v3776, %v3777
      %v3779 = vsel %vm861, %v3718, 0.0
      %v3780 = vadd.f32 %v3778, %v3779
      %v3781 = vsel %vm861, %v3720, 0.0
      %v3782 = vadd.f32 %v3780, %v3781
      %v3783 = vsel %vm861, %v3722, 0.0
      %v3784 = vadd.f32 %v3782, %v3783
      %v3785 = vsel %vm861, %v3724, 0.0
      %v3786 = vadd.f32 %v3784, %v3785
      %v3787 = vsel %vm861, %v3726, 0.0
      %v3788 = vadd.f32 %v3786, %v3787
      %v3789 = vsel %vm861, %v3728, 0.0
      %v3790 = vadd.f32 %v3788, %v3789
      %v3791 = vsel %vm861, %v3730, 0.0
      %v3792 = vadd.f32 %v3790, %v3791
      %v3793 = vsel %vm861, %v3732, 0.0
      %v3794 = vadd.f32 %v3792, %v3793
      %v3795 = vsel %vm861, %v3734, 0.0
      %v3796 = vadd.f32 %v3794, %v3795
      %v3797 = vsel %vm861, %v3765, 0.0
      %v3798 = vsel %vm861, %v3796, 0.0
      %v3799 = vadd.f32 %v3797, %v3798
      %v3800 = vrot.slane %v3799, 4
      %v3801 = vadd.f32 %v3799, %v3800
      %v3802 = vrot.slane %v3801, 2
      %v3803 = vadd.f32 %v3801, %v3802
      %v3804 = vrot.slane %v3803, 1
      %v3805 = vadd.f32 %v3803, %v3804
      %v3806 = vmul.f32 %v3805, 0.00390625
      %v3807 = vmul.f32 %v3702, %v3702
      %v3808 = vsub.f32 %v3806, %v3807
      %v3809 = vmax.f32 %v3808, 0.0
      %v3810 = vsub.f32 %v3599, %v3702
      %v3811 = vsub.f32 %v3600, %v3702
      %v3812 = vsub.f32 %v3601, %v3702
      %v3813 = vsub.f32 %v3602, %v3702
      %v3814 = vsub.f32 %v3603, %v3702
      %v3815 = vsub.f32 %v3604, %v3702
      %v3816 = vsub.f32 %v3605, %v3702
      %v3817 = vsub.f32 %v3606, %v3702
      %v3818 = vsub.f32 %v3607, %v3702
      %v3819 = vsub.f32 %v3608, %v3702
      %v3820 = vsub.f32 %v3609, %v3702
      %v3821 = vsub.f32 %v3610, %v3702
      %v3822 = vsub.f32 %v3611, %v3702
      %v3823 = vsub.f32 %v3612, %v3702
      %v3824 = vsub.f32 %v3613, %v3702
      %v3825 = vsub.f32 %v3614, %v3702
      %v3826 = vsub.f32 %v3615, %v3702
      %v3827 = vsub.f32 %v3616, %v3702
      %v3828 = vsub.f32 %v3617, %v3702
      %v3829 = vsub.f32 %v3618, %v3702
      %v3830 = vsub.f32 %v3619, %v3702
      %v3831 = vsub.f32 %v3620, %v3702
      %v3832 = vsub.f32 %v3621, %v3702
      %v3833 = vsub.f32 %v3622, %v3702
      %v3834 = vsub.f32 %v3623, %v3702
      %v3835 = vsub.f32 %v3624, %v3702
      %v3836 = vsub.f32 %v3625, %v3702
      %v3837 = vsub.f32 %v3626, %v3702
      %v3838 = vsub.f32 %v3627, %v3702
      %v3839 = vsub.f32 %v3628, %v3702
      %v3840 = vsub.f32 %v3629, %v3702
      %v3841 = vsub.f32 %v3630, %v3702
      %v3842 = vadd.f32 %v3809, 1e-05
      %v3843 = vrsqrt.pop %v3842
      %v3844 = vmul.f32 %v3843, %v3842
      %v3845 = vmul.f32 %v3844, %v3843
      %v3846 = vmul.f32 0.5, %v3845
      %v3847 = vsub.f32 1.5, %v3846
      %v3848 = vmul.f32 %v3843, %v3847
      %vm3849 = vweird.f32 %v3842
      %vm3850 = vweird.f32 %v3843
      %vm3851 = vmor %vm3849, %vm3850
      %v3852 = vsel %vm3851, %v3843, %v3848
      %v3853 = vmul.f32 %v3810, %v3852
      %v3854 = vmul.f32 %v3811, %v3852
      %v3855 = vmul.f32 %v3812, %v3852
      %v3856 = vmul.f32 %v3813, %v3852
      %v3857 = vmul.f32 %v3814, %v3852
      %v3858 = vmul.f32 %v3815, %v3852
      %v3859 = vmul.f32 %v3816, %v3852
      %v3860 = vmul.f32 %v3817, %v3852
      %v3861 = vmul.f32 %v3818, %v3852
      %v3862 = vmul.f32 %v3819, %v3852
      %v3863 = vmul.f32 %v3820, %v3852
      %v3864 = vmul.f32 %v3821, %v3852
      %v3865 = vmul.f32 %v3822, %v3852
      %v3866 = vmul.f32 %v3823, %v3852
      %v3867 = vmul.f32 %v3824, %v3852
      %v3868 = vmul.f32 %v3825, %v3852
      %v3869 = vmul.f32 %v3826, %v3852
      %v3870 = vmul.f32 %v3827, %v3852
      %v3871 = vmul.f32 %v3828, %v3852
      %v3872 = vmul.f32 %v3829, %v3852
      %v3873 = vmul.f32 %v3830, %v3852
      %v3874 = vmul.f32 %v3831, %v3852
      %v3875 = vmul.f32 %v3832, %v3852
      %v3876 = vmul.f32 %v3833, %v3852
      %v3877 = vmul.f32 %v3834, %v3852
      %v3878 = vmul.f32 %v3835, %v3852
      %v3879 = vmul.f32 %v3836, %v3852
      %v3880 = vmul.f32 %v3837, %v3852
      %v3881 = vmul.f32 %v3838, %v3852
      %v3882 = vmul.f32 %v3839, %v3852
      %v3883 = vmul.f32 %v3840, %v3852
      %v3884 = vmul.f32 %v3841, %v3852
      %v3885 = vadd.f32 %v3853, %v172
      %v3886 = vadd.f32 %v3854, %v173
      %v3887 = vadd.f32 %v3855, %v174
      %v3888 = vadd.f32 %v3856, %v175
      %v3889 = vadd.f32 %v3857, %v176
      %v3890 = vadd.f32 %v3858, %v177
      %v3891 = vadd.f32 %v3859, %v178
      %v3892 = vadd.f32 %v3860, %v179
      %v3893 = vadd.f32 %v3861, %v180
      %v3894 = vadd.f32 %v3862, %v181
      %v3895 = vadd.f32 %v3863, %v182
      %v3896 = vadd.f32 %v3864, %v183
      %v3897 = vadd.f32 %v3865, %v184
      %v3898 = vadd.f32 %v3866, %v185
      %v3899 = vadd.f32 %v3867, %v186
      %v3900 = vadd.f32 %v3868, %v187
      %v3901 = vadd.f32 %v3869, %v188
      %v3902 = vadd.f32 %v3870, %v189
      %v3903 = vadd.f32 %v3871, %v190
      %v3904 = vadd.f32 %v3872, %v191
      %v3905 = vadd.f32 %v3873, %v192
      %v3906 = vadd.f32 %v3874, %v193
      %v3907 = vadd.f32 %v3875, %v194
      %v3908 = vadd.f32 %v3876, %v195
      %v3909 = vadd.f32 %v3877, %v196
      %v3910 = vadd.f32 %v3878, %v197
      %v3911 = vadd.f32 %v3879, %v198
      %v3912 = vadd.f32 %v3880, %v199
      %v3913 = vadd.f32 %v3881, %v200
      %v3914 = vadd.f32 %v3882, %v201
      %v3915 = vadd.f32 %v3883, %v202
      %v3916 = vadd.f32 %v3884, %v203
      %3917 = vst.msk [vmem:[%s170] sm:$0xff] %vm861, %v3885
      %3918 = vst.msk [vmem:[%s170 + $0x8] sm:$0xff] %vm861, %v3886
      %3919 = vst.msk [vmem:[%s170 + $0x10] sm:$0xff] %vm861, %v3887
      %3920 = vst.msk [vmem:[%s170 + $0x18] sm:$0xff] %vm861, %v3888
      %3921 = vst.msk [vmem:[%s170 + $0x20] sm:$0xff] %vm861, %v3889
      %3922 = vst.msk [vmem:[%s170 + $0x28] sm:$0xff] %vm861, %v3890
      %3923 = vst.msk [vmem:[%s170 + $0x30] sm:$0xff] %vm861, %v3891
      %3924 = vst.msk [vmem:[%s170 + $0x38] sm:$0xff] %vm861, %v3892
      %3925 = vst.msk [vmem:[%s170 + $0x40] sm:$0xff] %vm861, %v3893
      %3926 = vst.msk [vmem:[%s170 + $0x48] sm:$0xff] %vm861, %v3894
      %3927 = vst.msk [vmem:[%s170 + $0x50] sm:$0xff] %vm861, %v3895
      %3928 = vst.msk [vmem:[%s170 + $0x58] sm:$0xff] %vm861, %v3896
      %3929 = vst.msk [vmem:[%s170 + $0x60] sm:$0xff] %vm861, %v3897
      %3930 = vst.msk [vmem:[%s170 + $0x68] sm:$0xff] %vm861, %v3898
      %3931 = vst.msk [vmem:[%s170 + $0x70] sm:$0xff] %vm861, %v3899
      %3932 = vst.msk [vmem:[%s170 + $0x78] sm:$0xff] %vm861, %v3900
      %3933 = vst.msk [vmem:[%s170 + $0x80] sm:$0xff] %vm861, %v3901
      %3934 = vst.msk [vmem:[%s170 + $0x88] sm:$0xff] %vm861, %v3902
      %3935 = vst.msk [vmem:[%s170 + $0x90] sm:$0xff] %vm861, %v3903
      %3936 = vst.msk [vmem:[%s170 + $0x98] sm:$0xff] %vm861, %v3904
      %3937 = vst.msk [vmem:[%s170 + $0xa0] sm:$0xff] %vm861, %v3905
      %3938 = vst.msk [vmem:[%s170 + $0xa8] sm:$0xff] %vm861, %v3906
      %3939 = vst.msk [vmem:[%s170 + $0xb0] sm:$0xff] %vm861, %v3907
      %3940 = vst.msk [vmem:[%s170 + $0xb8] sm:$0xff] %vm861, %v3908
      %3941 = vst.msk [vmem:[%s170 + $0xc0] sm:$0xff] %vm861, %v3909
      %3942 = vst.msk [vmem:[%s170 + $0xc8] sm:$0xff] %vm861, %v3910
      %3943 = vst.msk [vmem:[%s170 + $0xd0] sm:$0xff] %vm861, %v3911
      %3944 = vst.msk [vmem:[%s170 + $0xd8] sm:$0xff] %vm861, %v3912
      %3945 = vst.msk [vmem:[%s170 + $0xe0] sm:$0xff] %vm861, %v3913
      %3946 = vst.msk [vmem:[%s170 + $0xe8] sm:$0xff] %vm861, %v3914
      %3947 = vst.msk [vmem:[%s170 + $0xf0] sm:$0xff] %vm861, %v3915
      %3948 = vst.msk [vmem:[%s170 + $0xf8] sm:$0xff] %vm861, %v3916
      %p3949 = scmp.lt.s32.totalorder %s14, 1
      %s3950 = scalar_select %p3949, %s14, 1
      %s3951 = smul.addr %s3950, 32
      %s3952 = smul.addr %s3951, 8
      %s3953 = scalar_lea.vmem %s3, %s3952
      // Predicated region
      $region33: #{resnet_block_forward.1} parent=31 // pred_check
        %p3954 = pneg %p100
      $region34: #{resnet_block_forward.1} parent=31 // pred_check_branch
        %3956 = sbr.rel (%p3954) target = $region36
      $region35: #{resnet_block_forward.1} parent=31 // pred_region
        _
      $region36: #{resnet_block_forward.1} parent=31 // pred_fallthru
        _
    $region32: #{resnet_block_forward.1} parent=5 // pred_fallthru
      _
    %p3957 = scmp.le.s32.totalorder 2, %s9
    // Predicated region
    $region37: #{resnet_block_forward.1} parent=5 // pred_check
      %p3958 = pneg %p3957
    $region38: #{resnet_block_forward.1} parent=5 // pred_check_branch
      %3960 = sbr.rel (%p3958) target = $region40
    $region39: #{resnet_block_forward.1} parent=5 // pred_region
      %s3961 = ssub.s32 %s9, 2
      // Predicated region
      $region41: #{resnet_block_forward.1} parent=39 // pred_check
        %p3962 = pneg %p106
      $region42: #{resnet_block_forward.1} parent=39 // pred_check_branch
        %3964 = sbr.rel (%p3962) target = $region44
      $region43: #{resnet_block_forward.1} parent=39 // pred_region
        %p3965 = scmp.lt.s32.totalorder %s15, 1
        %s3966 = scalar_select %p3965, %s15, 1
        %s3967 = smul.addr %s3966, 32
        %s3968 = smul.addr %s3967, 8
        %s3969 = scalar_lea.vmem %s3, %s3968
      $region44: #{resnet_block_forward.1} parent=39 // pred_fallthru
        _
    $region40: #{resnet_block_forward.1} parent=5 // pred_fallthru
      _
  $region6: #{resnet_block_forward.1} parent=0 // loop_footer
    %s13 = sadd.s32 1, %s9
  $region7: #{resnet_block_forward.1} parent=0 // loop_footer_branch
    %8 = sbr.rel target = $region3
  $region8: #{resnet_block_forward.1} parent=0 // loop_exit
    _

</llo_original>
